<compile_context>
chip_gen: v5e
topology: v5e:2x2
jax: 0.10.0
libtpu: 0.0.40
codegen_flags: <defaults>
</compile_context>

<pallas_src>
import functools

import jax
import jax.numpy as jnp
from jax.experimental import pallas as pl
from jax.experimental.pallas import tpu as pltpu


# ----------------------------------------------------------------------------
# Per-generation tuning knobs
# ----------------------------------------------------------------------------

def _device_kind():
    try:
        return jax.devices()[0].device_kind.lower()
    except Exception:
        return ""


def _vmem_limit_bytes():
    # ~75% of physical VMEM: ~48 MiB on v7x (64 MiB/TC), ~96 MiB on v5e/v6e.
    try:
        cap = getattr(pltpu.get_tpu_info(), "vmem_capacity_bytes", None)
        if cap:
            return int(cap) * 3 // 4
    except Exception:
        pass
    return 48 * 1024 * 1024          # safe on every generation


_KIND = _device_kind()
_IS_V7X = "v7" in _KIND
_VMEM_LIMIT = _vmem_limit_bytes()
# Dense-vs-block crossover: v6e/v7x MXUs are 256-wide, v5e/v4 are 128-wide.
_BLOCK_CROSSOVER = 128 if ("v5" in _KIND or "v4" in _KIND) else 256
# Row-tile cap: smaller on v7x (64 MiB VMEM, 2 TCs), larger on v5e/v6e.
_ROW_CAP = 256 if _IS_V7X else 512


def _cp(*sem):
    return pltpu.CompilerParams(dimension_semantics=sem,
                                vmem_limit_bytes=_VMEM_LIMIT)


def _row_tile(m, cap=None):
    cap = _ROW_CAP if cap is None else cap
    tm = min(cap, m)
    return max(8, ((tm + 7) // 8) * 8)          # sublane aligned


def _pad_rows(x, tm):
    pad = (-x.shape[0]) % tm
    if pad:
        x = jnp.pad(x, ((0, pad), (0, 0)))
    return x


def _spatial_tile(n, cap=512):
    # Head spatial tile: largest divisor of n that is sublane-aligned (or n).
    for t in range(min(cap, n), 0, -1):
        if n % t == 0 and (t % 8 == 0 or t == n):
            return t
    return n


def _use_block_path(p, q):
    return p % 128 == 0 and q % 128 == 0 and min(p, q) >= _BLOCK_CROSSOVER


def _dense_from_blocks(blocks):
    """(nb, p, q) per-block weights -> dense block-diagonal (nb*p, nb*q)."""
    nb, p, q = blocks.shape
    dense = jnp.zeros((nb * p, nb * q), blocks.dtype)
    for k in range(nb):
        dense = dense.at[k * p:(k + 1) * p, k * q:(k + 1) * q].set(blocks[k])
    return dense


# ----------------------------------------------------------------------------
# Pallas kernels
# ----------------------------------------------------------------------------

def _in_proj_kernel(x_ref, w_ref, b_ref, y_ref, u_ref, *, scale):
    # Linear(d_in, d_hidden) fused with the first SimpleRMSNorm.
    y = jnp.dot(x_ref[...], w_ref[...],
                preferred_element_type=jnp.float32) + b_ref[...]
    y_ref[...] = y.astype(y_ref.dtype)                       # bf16 residual out
    nrm = jnp.sqrt(jnp.sum(y * y, axis=-1, keepdims=True))   # f32 statistics
    u_ref[...] = (y / jnp.maximum(nrm, 1e-12) * scale).astype(u_ref.dtype)


def _mm_kernel(x_ref, w_ref, o_ref):
    o_ref[...] = jnp.dot(x_ref[...], w_ref[...],
                         preferred_element_type=jnp.float32).astype(o_ref.dtype)


def _block_mm_kernel(x_ref, w_ref, o_ref):
    # One diagonal block: x[:, k*p:(k+1)*p] @ W_k -> out[:, k*q:(k+1)*q]
    o_ref[...] = jnp.dot(x_ref[...], w_ref[...],
                         preferred_element_type=jnp.float32).astype(o_ref.dtype)


def _gelu_exact(h):
    # Exact (erf) GELU, matching nn.GELU() default.
    # TODO(synk): on v5e erf is pure VALU work; only switch to the tanh
    # approximation (EUP slot) if the VALU proves to be the saturated slot and
    # the accuracy delta vs nn.GELU() is acceptable.
    return 0.5 * h * (1.0 + jax.lax.erf(h * 0.7071067811865476))


def _tail_dense_kernel(u3_ref, y_ref, wd2_ref, we1_ref, we2_ref, o_ref, *, scale):
    # y1 = u3 @ w_d2 + y                               (end of PreNormResidual #1)
    # y2 = blockdiag(GELU(blockdiag(rms(y1)))) + y1    (PreNormResidual #2)
    y1 = (jnp.dot(u3_ref[...], wd2_ref[...], preferred_element_type=jnp.float32)
          + y_ref[...].astype(jnp.float32))
    nrm = jnp.sqrt(jnp.sum(y1 * y1, axis=-1, keepdims=True))
    v = (y1 / jnp.maximum(nrm, 1e-12) * scale).astype(jnp.bfloat16)
    h = _gelu_exact(jnp.dot(v, we1_ref[...], preferred_element_type=jnp.float32))
    y2 = (jnp.dot(h.astype(jnp.bfloat16), we2_ref[...],
                  preferred_element_type=jnp.float32) + y1)
    o_ref[...] = y2.astype(o_ref.dtype)


def _tail_block_kernel(u3_ref, y_ref, wd2_ref, we1_ref, we2_ref, o_ref,
                       *, scale, nb):
    # Block-wise variant: no structural-zero MXU FLOPs, and only a
    # (tm, DE/nb) f32 GELU intermediate is live at a time (DE tiling).
    p = o_ref.shape[-1] // nb
    y_res = y_ref[...].astype(jnp.float32)
    y1_parts = []
    for k in range(nb):
        sl = slice(k * p, (k + 1) * p)
        y1_parts.append(jnp.dot(u3_ref[:, sl], wd2_ref[k],
                                preferred_element_type=jnp.float32)
                        + y_res[:, sl])
    y1 = jnp.concatenate(y1_parts, axis=-1)
    nrm = jnp.sqrt(jnp.sum(y1 * y1, axis=-1, keepdims=True))
    v = (y1 / jnp.maximum(nrm, 1e-12) * scale).astype(jnp.bfloat16)
    out_parts = []
    for k in range(nb):
        sl = slice(k * p, (k + 1) * p)
        h = _gelu_exact(jnp.dot(v[:, sl], we1_ref[k],
                                preferred_element_type=jnp.float32))
        out_parts.append(jnp.dot(h.astype(jnp.bfloat16), we2_ref[k],
                                 preferred_element_type=jnp.float32)
                         + y1[:, sl])
    o_ref[...] = jnp.concatenate(out_parts, axis=-1).astype(o_ref.dtype)


def _head_kernel(y_ref, lnw_ref, lnb_ref, wout_ref, bout_ref, o_ref,
                 mx_ref, *, eps):
    # LayerNorm(d_hidden) -> running max over spatial chunks -> Linear(d, d_out)
    j = pl.program_id(1)

    @pl.when(j == 0)
    def _():
        mx_ref[...] = jnp.full_like(mx_ref, -jnp.inf)

    y = y_ref[0].astype(jnp.float32)                          # (thw, D)
    mean = jnp.mean(y, axis=-1, keepdims=True)
    var = jnp.mean(jnp.square(y - mean), axis=-1, keepdims=True)
    z = (y - mean) * jax.lax.rsqrt(var + eps) * lnw_ref[...] + lnb_ref[...]
    mx_ref[...] = jnp.maximum(mx_ref[...], jnp.max(z, axis=0, keepdims=True))

    @pl.when(j == pl.num_programs(1) - 1)
    def _():
        res = jnp.dot(mx_ref[...], wout_ref[...],
                      preferred_element_type=jnp.float32) + bout_ref[...]
        o_ref[...] = res[None]


# ----------------------------------------------------------------------------
# Pallas wrappers
# ----------------------------------------------------------------------------

def pallas_in_proj(x, w, b, scale):
    M, K = x.shape
    N = w.shape[1]
    tm = _row_tile(M)
    xp = _pad_rows(x, tm)
    Mp = xp.shape[0]
    ce = pl.CostEstimate(flops=2 * Mp * K * N, transcendentals=0,
                         bytes_accessed=Mp * K * 2 + K * N * 2 + 2 * Mp * N * 2)
    y, u = pl.pallas_call(
        functools.partial(_in_proj_kernel, scale=scale),
        grid=(Mp // tm,),
        in_specs=[pl.BlockSpec((tm, K), lambda i: (i, 0)),
                  pl.BlockSpec((K, N), lambda i: (0, 0)),
                  pl.BlockSpec((1, N), lambda i: (0, 0))],
        out_specs=[pl.BlockSpec((tm, N), lambda i: (i, 0)),
                   pl.BlockSpec((tm, N), lambda i: (i, 0))],
        out_shape=[jax.ShapeDtypeStruct((Mp, N), jnp.bfloat16),
                   jax.ShapeDtypeStruct((Mp, N), jnp.bfloat16)],
        cost_estimate=ce,
        compiler_params=_cp("parallel"),
    )(xp, w, b.reshape(1, N))
    return y[:M], u[:M]


def pallas_matmul(x, w, out_dtype=jnp.bfloat16):
    M, K = x.shape
    N = w.shape[1]
    tm = _row_tile(M)
    xp = _pad_rows(x, tm)
    Mp = xp.shape[0]
    ce = pl.CostEstimate(flops=2 * Mp * K * N, transcendentals=0,
                         bytes_accessed=Mp * K * 2 + K * N * 2 + Mp * N * 2)
    out = pl.pallas_call(
        _mm_kernel, grid=(Mp // tm,),
        in_specs=[pl.BlockSpec((tm, K), lambda i: (i, 0)),
                  pl.BlockSpec((K, N), lambda i: (0, 0))],
        out_specs=pl.BlockSpec((tm, N), lambda i: (i, 0)),
        out_shape=jax.ShapeDtypeStruct((Mp, N), out_dtype),
        cost_estimate=ce,
        compiler_params=_cp("parallel"))(xp, w)
    return out[:M]


def pallas_blockdiag_matmul(x, w, out_dtype=jnp.bfloat16):
    """x @ block_diag(w).  `w` is either a dense (P, Q) block-diagonal matrix
    (small blocks, densified once outside jit; keeps the output lane-dense)
    or raw (nb, p, q) blocks (block-batched path, no structural-zero FLOPs)."""
    if w.ndim == 2:
        return pallas_matmul(x, w, out_dtype)
    nb, p, q = w.shape
    M = x.shape[0]
    tm = _row_tile(M)
    xp = _pad_rows(x, tm)
    Mp = xp.shape[0]
    ce = pl.CostEstimate(flops=2 * Mp * p * q * nb, transcendentals=0,
                         bytes_accessed=(Mp * nb * p * 2 + nb * p * q * 2
                                         + Mp * nb * q * 2))
    # Grid order (k, i): the per-block weight stays resident for the row sweep.
    out = pl.pallas_call(
        _block_mm_kernel, grid=(nb, Mp // tm),
        in_specs=[pl.BlockSpec((tm, p), lambda k, i: (i, k)),
                  pl.BlockSpec((None, p, q), lambda k, i: (k, 0, 0))],
        out_specs=pl.BlockSpec((tm, q), lambda k, i: (i, k)),
        out_shape=jax.ShapeDtypeStruct((Mp, nb * q), out_dtype),
        cost_estimate=ce,
        compiler_params=_cp("parallel", "parallel"))(xp, w)
    return out[:M]


def pallas_tail(u3, y, w_d2, w_e1, w_e2, scale):
    """Fused: y1 = u3 @ blockdiag(w_d2) + y, then PreNormResidual #2
    (rmsnorm -> blockdiag -> GELU -> blockdiag -> +y1)."""
    # TODO(synk): fusing the head (LayerNorm -> max -> out Linear) in here
    # would remove the y2 HBM round trip entirely (biggest win on v5e/v6e).
    M, D = y.shape
    tm = _row_tile(M)
    u3p = _pad_rows(u3, tm)
    yp = _pad_rows(y, tm)
    Mp = u3p.shape[0]

    if w_d2.ndim == 3:
        # Block-wise path (large per-block dims): block weights stay in
        # (nb, p, q) form and are single-buffered (constant block index).
        nb, p, _ = w_d2.shape
        e = w_e1.shape[2]
        ce = pl.CostEstimate(
            flops=2 * Mp * (p * p + 2 * p * e) * nb,
            transcendentals=Mp * e * nb,
            bytes_accessed=3 * Mp * D * 2 + (nb * p * p + 2 * nb * p * e) * 2)

        def weight_spec(shape):
            return pl.BlockSpec(shape, lambda i: (0, 0, 0),
                                pipeline_mode=pl.Buffered(1))

        out = pl.pallas_call(
            functools.partial(_tail_block_kernel, scale=scale, nb=nb),
            grid=(Mp // tm,),
            in_specs=[pl.BlockSpec((tm, D), lambda i: (i, 0)),
                      pl.BlockSpec((tm, D), lambda i: (i, 0)),
                      weight_spec((nb, p, p)),
                      weight_spec((nb, p, e)),
                      weight_spec((nb, e, p))],
            out_specs=pl.BlockSpec((tm, D), lambda i: (i, 0)),
            out_shape=jax.ShapeDtypeStruct((Mp, D), jnp.bfloat16),
            cost_estimate=ce,
            compiler_params=_cp("parallel"))(u3p, yp, w_d2, w_e1, w_e2)
        return out[:M]

    # Dense path (small blocks; weights densified once outside jit).
    DE = w_e1.shape[1]
    ce = pl.CostEstimate(flops=2 * Mp * (D * D + 2 * D * DE),
                         transcendentals=Mp * DE,
                         bytes_accessed=3 * Mp * D * 2 + (D * D + 2 * D * DE) * 2)
    out = pl.pallas_call(
        functools.partial(_tail_dense_kernel, scale=scale),
        grid=(Mp // tm,),
        in_specs=[pl.BlockSpec((tm, D), lambda i: (i, 0)),
                  pl.BlockSpec((tm, D), lambda i: (i, 0)),
                  pl.BlockSpec((D, D), lambda i: (0, 0)),
                  pl.BlockSpec((D, DE), lambda i: (0, 0)),
                  pl.BlockSpec((DE, D), lambda i: (0, 0))],
        out_specs=pl.BlockSpec((tm, D), lambda i: (i, 0)),
        out_shape=jax.ShapeDtypeStruct((Mp, D), jnp.bfloat16),
        cost_estimate=ce,
        compiler_params=_cp("parallel"))(u3p, yp, w_d2, w_e1, w_e2)
    return out[:M]


def pallas_head(y2, ln_w, ln_b, w_out, b_out, eps=1e-5):
    # Leading batch axis is 'parallel' (maps onto v7x's two TensorCores);
    # spatial axis is 'arbitrary' with a running-max scratch.
    B, HW, D = y2.shape
    dout = w_out.shape[1]
    thw = _spatial_tile(HW)
    out = pl.pallas_call(
        functools.partial(_head_kernel, eps=eps),
        grid=(B, HW // thw),
        in_specs=[pl.BlockSpec((1, thw, D), lambda b, j: (b, j, 0)),
                  pl.BlockSpec((1, D), lambda b, j: (0, 0)),
                  pl.BlockSpec((1, D), lambda b, j: (0, 0)),
                  pl.BlockSpec((D, dout), lambda b, j: (0, 0)),
                  pl.BlockSpec((1, dout), lambda b, j: (0, 0))],
        out_specs=pl.BlockSpec((1, 1, dout), lambda b, j: (b, 0, 0)),
        out_shape=jax.ShapeDtypeStruct((B, 1, dout), jnp.float32),
        scratch_shapes=[pltpu.VMEM((1, D), jnp.float32)],
        compiler_params=_cp("parallel", "arbitrary"),
    )(y2, ln_w.reshape(1, D), ln_b.reshape(1, D), w_out, b_out.reshape(1, dout))
    return out.reshape(B, dout)


# ----------------------------------------------------------------------------
# Parameter construction (deterministic, synthetic)
# ----------------------------------------------------------------------------

def init_params(key, *, d_in, height, width, d_hidden, d_out, segments,
                expansion, nblocks=4):
    HS = height * segments
    WS = width * segments
    DE = d_hidden * expansion
    ks = jax.random.split(key, 10)
    bf = jnp.bfloat16

    def nrm(k, shape, scale=0.05):
        return scale * jax.random.normal(k, shape, jnp.float32)

    p = {}
    p["w_in"] = nrm(ks[0], (d_in, d_hidden)).astype(bf)
    p["b_in"] = nrm(ks[1], (d_hidden,))
    # BlockdiagLinear weights, stored as per-block (nblocks, in/nb, out/nb)
    # matrices in x @ W orientation (== block_diag of torch's W.T blocks).
    p["w_h"] = nrm(ks[2], (nblocks, HS // nblocks, HS // nblocks)).astype(bf)
    p["w_d1"] = nrm(ks[3], (nblocks, d_hidden // nblocks,
                            d_hidden // nblocks)).astype(bf)
    p["w_w"] = nrm(ks[4], (nblocks, WS // nblocks, WS // nblocks)).astype(bf)
    p["w_d2"] = nrm(ks[5], (nblocks, d_hidden // nblocks,
                            d_hidden // nblocks)).astype(bf)
    p["w_e1"] = nrm(ks[6], (nblocks, d_hidden // nblocks,
                            DE // nblocks)).astype(bf)
    p["w_e2"] = nrm(ks[7], (nblocks, DE // nblocks,
                            d_hidden // nblocks)).astype(bf)
    p["ln_w"] = jnp.ones((d_hidden,), jnp.float32)
    p["ln_b"] = jnp.zeros((d_hidden,), jnp.float32)
    p["w_out"] = nrm(ks[8], (d_hidden, d_out))     # f32: tiny head matmul
    p["b_out"] = nrm(ks[9], (d_out,))
    return p


def prepare_params(params):
    """One-time layout prep (call OUTSIDE jit): densify only the block-diagonal
    weights that will take the dense path; MXU-sized blocks stay (nb, p, q)."""
    prepared = dict(params)
    for name in ("w_h", "w_d1", "w_w"):
        _, p, q = params[name].shape
        if not _use_block_path(p, q):
            prepared[name] = _dense_from_blocks(params[name])
    _, p, _ = params["w_d2"].shape
    e = params["w_e1"].shape[2]
    if not (_use_block_path(p, p) and _use_block_path(p, e)):
        prepared["w_d2"] = _dense_from_blocks(params["w_d2"])
        prepared["w_e1"] = _dense_from_blocks(params["w_e1"])
        prepared["w_e2"] = _dense_from_blocks(params["w_e2"])
    return prepared


# ----------------------------------------------------------------------------
# Forward pass (depth = 1, eval mode)
# ----------------------------------------------------------------------------

def neckformer_forward(x_nchw, params, *, d_hidden, segments):
    B, Din, H, W = x_nchw.shape
    D, S = d_hidden, segments
    C = D // S
    scale = float(D) ** 0.5

    # Rearrange('b c h w -> b h w c')  (XLA glue transpose, done in bf16)
    x = jnp.transpose(x_nchw.astype(jnp.bfloat16), (0, 2, 3, 1))
    M = B * H * W

    # nn.Linear(d_in, d_hidden) fused with the first SimpleRMSNorm.
    y, u = pallas_in_proj(x.reshape(M, Din), params["w_in"],
                          params["b_in"], scale)

    # ---- PreNormResidual #1 -------------------------------------------------
    # TODO(synk): the four einops rearranges below remain XLA bf16 transposes;
    # folding them into the adjacent block-diagonal matmuls (5-D BlockSpecs +
    # in-VMEM einshape) is the remaining mem-bound lever, left for a later rev.
    u5 = u.reshape(B, H, W, C, S)
    # 'b h w (c s) -> b w c (h s)'  + BlockdiagLinear(H*S, H*S)
    uh = jnp.transpose(u5, (0, 2, 3, 1, 4)).reshape(B * W * C, H * S)
    uh = pallas_blockdiag_matmul(uh, params["w_h"])
    # 'b w c (h s) -> b h w (c s)'
    u1 = jnp.transpose(uh.reshape(B, W, C, H, S), (0, 3, 1, 2, 4)).reshape(M, D)

    # BlockdiagLinear(d_hidden, d_hidden); dropout -> identity (eval).
    u2 = pallas_blockdiag_matmul(u1, params["w_d1"])

    # 'b h w (c s) -> b h c (w s)'  + BlockdiagLinear(W*S, W*S)
    uw = jnp.transpose(u2.reshape(B, H, W, C, S),
                       (0, 1, 3, 2, 4)).reshape(B * H * C, W * S)
    uw = pallas_blockdiag_matmul(uw, params["w_w"])
    # 'b h c (w s) -> b h w (c s)'
    u3 = jnp.transpose(uw.reshape(B, H, C, W, S),
                       (0, 1, 3, 2, 4)).reshape(M, D)

    # ---- fused: (w_d2 matmul + residual) + PreNormResidual #2 ---------------
    y2 = pallas_tail(u3, y, params["w_d2"], params["w_e1"], params["w_e2"],
                     scale)

    # ---- LayerNorm -> max over (h, w) -> Linear(d_hidden, d_out) ------------
    return pallas_head(y2.reshape(B, H * W, D), params["ln_w"],
                       params["ln_b"], params["w_out"], params["b_out"])


# ----------------------------------------------------------------------------

if __name__ == "__main__":
    # Small config consistent with the module's constraints:
    #   d_hidden % segments == 0 ; (height*segments) % nblocks == 0 ; etc.
    B = 2
    d_in = 32
    height = 8
    width = 8
    d_hidden = 32
    d_out = 16
    segments = 8
    expansion = 4

    key = jax.random.PRNGKey(0)
    k_x, k_p = jax.random.split(key)

    x = jax.random.normal(k_x, (B, d_in, height, width), jnp.float32)  # NCHW
    params = prepare_params(init_params(
        k_p, d_in=d_in, height=height, width=width, d_hidden=d_hidden,
        d_out=d_out, segments=segments, expansion=expansion))

    fwd = jax.jit(functools.partial(neckformer_forward,
                                    d_hidden=d_hidden, segments=segments))
    out = fwd(x, params)
    jax.block_until_ready(out)
    assert out.shape == (B, d_out), out.shape
    print("KERNEL_OK")
</pallas_src>

<mosaic_0001>
module attributes {stable_mosaic.version = 11 : i64} {
  func.func @_in_proj_kernel(%arg0: i32, %arg1: memref<128x32xbf16, #tpu.memory_space<vmem>>, %arg2: memref<32x32xbf16, #tpu.memory_space<vmem>>, %arg3: memref<1x32xf32, #tpu.memory_space<vmem>>, %arg4: memref<128x32xbf16, #tpu.memory_space<vmem>>, %arg5: memref<128x32xbf16, #tpu.memory_space<vmem>>) attributes {dimension_semantics = [#tpu.dimension_semantics<parallel>], iteration_bounds = array<i64: 1>, scalar_prefetch = 0 : i64, scratch_operands = 0 : i64, tpu.core_type = #tpu.core_type<tc>, window_params = [{transform_indices = @transform_0, window_bounds = array<i64: 128, 32>}, {pipeline_mode = #tpu.pipeline_mode<synchronous>, transform_indices = @transform_1, window_bounds = array<i64: 32, 32>}, {pipeline_mode = #tpu.pipeline_mode<synchronous>, transform_indices = @transform_2, window_bounds = array<i64: 1, 32>}, {transform_indices = @transform_3, window_bounds = array<i64: 128, 32>}, {transform_indices = @transform_4, window_bounds = array<i64: 128, 32>}]} {
    %c0 = arith.constant 0 : index
    %c0_0 = arith.constant 0 : index
    %0 = vector.load %arg1[%c0, %c0_0] : memref<128x32xbf16, #tpu.memory_space<vmem>>, vector<128x32xbf16>
    %c0_1 = arith.constant 0 : index
    %c0_2 = arith.constant 0 : index
    %1 = vector.load %arg2[%c0_1, %c0_2] : memref<32x32xbf16, #tpu.memory_space<vmem>>, vector<32x32xbf16>
    %cst = arith.constant dense<0.000000e+00> : vector<128x32xf32>
    %2 = tpu.matmul %0, %1, %cst {dimension_numbers = #tpu.dot_dimension_numbers<[1], [0], [0], [1], [0, 0, 1, 1], [], []>} : vector<128x32xbf16>, vector<32x32xbf16>, vector<128x32xf32> -> vector<128x32xf32>
    %c0_3 = arith.constant 0 : index
    %c0_4 = arith.constant 0 : index
    %3 = vector.load %arg3[%c0_3, %c0_4] : memref<1x32xf32, #tpu.memory_space<vmem>>, vector<1x32xf32>
    %4 = vector.broadcast %3 : vector<1x32xf32> to vector<128x32xf32>
    %5 = arith.addf %2, %4 : vector<128x32xf32>
    %6 = arith.truncf %5 : vector<128x32xf32> to vector<128x32xbf16>
    %c0_5 = arith.constant 0 : index
    %c0_6 = arith.constant 0 : index
    %7 = vector.load %arg4[%c0_5, %c0_6] : memref<128x32xbf16, #tpu.memory_space<vmem>>, vector<128x32xbf16>
    tpu.vector_store %arg4[%c0_5, %c0_6], %6 {strides = array<i32>} : memref<128x32xbf16, #tpu.memory_space<vmem>>, vector<128x32xbf16>,
    %8 = arith.mulf %5, %5 : vector<128x32xf32>
    %cst_7 = arith.constant dense<0.000000e+00> : vector<128xf32>
    %9 = vector.multi_reduction <add>, %8, %cst_7 [1] : vector<128x32xf32> to vector<128xf32>
    %10 = vector.shape_cast %9 : vector<128xf32> to vector<128x1xf32>
    %11 = math.sqrt %10 : vector<128x1xf32>
    %cst_8 = arith.constant 9.99999996E-13 : f32
    %12 = vector.broadcast %cst_8 : f32 to vector<128x1xf32>
    %13 = arith.maximumf %11, %12 : vector<128x1xf32>
    %14 = vector.broadcast %13 : vector<128x1xf32> to vector<128x32xf32>
    %15 = arith.divf %5, %14 : vector<128x32xf32>
    %cst_9 = arith.constant 5.65685415 : f32
    %16 = vector.broadcast %cst_9 : f32 to vector<128x32xf32>
    %17 = arith.mulf %15, %16 : vector<128x32xf32>
    %18 = arith.truncf %17 : vector<128x32xf32> to vector<128x32xbf16>
    %c0_10 = arith.constant 0 : index
    %c0_11 = arith.constant 0 : index
    %19 = vector.load %arg5[%c0_10, %c0_11] : memref<128x32xbf16, #tpu.memory_space<vmem>>, vector<128x32xbf16>
    tpu.vector_store %arg5[%c0_10, %c0_11], %18 {strides = array<i32>} : memref<128x32xbf16, #tpu.memory_space<vmem>>, vector<128x32xbf16>,
    return
  }
  func.func @transform_0(%arg0: i32) -> (i32, i32) {
    %c0_i32 = arith.constant 0 : i32
    %c0_i32_0 = arith.constant 0 : i32
    return %arg0, %c0_i32 : i32, i32
  }
  func.func @transform_1(%arg0: i32) -> (i32, i32) {
    %c0_i32 = arith.constant 0 : i32
    %c0_i32_0 = arith.constant 0 : i32
    %c0_i32_1 = arith.constant 0 : i32
    return %c0_i32, %c0_i32_0 : i32, i32
  }
  func.func @transform_2(%arg0: i32) -> (i32, i32) {
    %c0_i32 = arith.constant 0 : i32
    %c0_i32_0 = arith.constant 0 : i32
    %c0_i32_1 = arith.constant 0 : i32
    return %c0_i32, %c0_i32_0 : i32, i32
  }
  func.func @transform_3(%arg0: i32) -> (i32, i32) {
    %c0_i32 = arith.constant 0 : i32
    %c0_i32_0 = arith.constant 0 : i32
    return %arg0, %c0_i32 : i32, i32
  }
  func.func @transform_4(%arg0: i32) -> (i32, i32) {
    %c0_i32 = arith.constant 0 : i32
    %c0_i32_0 = arith.constant 0 : i32
    return %arg0, %c0_i32 : i32, i32
  }
}

module attributes {stable_mosaic.version = 11 : i64} {
  func.func @_mm_kernel(%arg0: i32, %arg1: memref<64x64xbf16, #tpu.memory_space<vmem>>, %arg2: memref<64x64xbf16, #tpu.memory_space<vmem>>, %arg3: memref<64x64xbf16, #tpu.memory_space<vmem>>) attributes {dimension_semantics = [#tpu.dimension_semantics<parallel>], iteration_bounds = array<i64: 1>, scalar_prefetch = 0 : i64, scratch_operands = 0 : i64, tpu.core_type = #tpu.core_type<tc>, window_params = [{transform_indices = @transform_0, window_bounds = array<i64: 64, 64>}, {pipeline_mode = #tpu.pipeline_mode<synchronous>, transform_indices = @transform_1, window_bounds = array<i64: 64, 64>}, {transform_indices = @transform_2, window_bounds = array<i64: 64, 64>}]} {
    %c0 = arith.constant 0 : index
    %c0_0 = arith.constant 0 : index
    %0 = vector.load %arg1[%c0, %c0_0] : memref<64x64xbf16, #tpu.memory_space<vmem>>, vector<64x64xbf16>
    %c0_1 = arith.constant 0 : index
    %c0_2 = arith.constant 0 : index
    %1 = vector.load %arg2[%c0_1, %c0_2] : memref<64x64xbf16, #tpu.memory_space<vmem>>, vector<64x64xbf16>
    %cst = arith.constant dense<0.000000e+00> : vector<64x64xf32>
    %2 = tpu.matmul %0, %1, %cst {dimension_numbers = #tpu.dot_dimension_numbers<[1], [0], [0], [1], [0, 0, 1, 1], [], []>} : vector<64x64xbf16>, vector<64x64xbf16>, vector<64x64xf32> -> vector<64x64xf32>
    %3 = arith.truncf %2 : vector<64x64xf32> to vector<64x64xbf16>
    %c0_3 = arith.constant 0 : index
    %c0_4 = arith.constant 0 : index
    %4 = vector.load %arg3[%c0_3, %c0_4] : memref<64x64xbf16, #tpu.memory_space<vmem>>, vector<64x64xbf16>
    tpu.vector_store %arg3[%c0_3, %c0_4], %3 {strides = array<i32>} : memref<64x64xbf16, #tpu.memory_space<vmem>>, vector<64x64xbf16>,
    return
  }
  func.func @transform_0(%arg0: i32) -> (i32, i32) {
    %c0_i32 = arith.constant 0 : i32
    %c0_i32_0 = arith.constant 0 : i32
    return %arg0, %c0_i32 : i32, i32
  }
  func.func @transform_1(%arg0: i32) -> (i32, i32) {
    %c0_i32 = arith.constant 0 : i32
    %c0_i32_0 = arith.constant 0 : i32
    %c0_i32_1 = arith.constant 0 : i32
    return %c0_i32, %c0_i32_0 : i32, i32
  }
  func.func @transform_2(%arg0: i32) -> (i32, i32) {
    %c0_i32 = arith.constant 0 : i32
    %c0_i32_0 = arith.constant 0 : i32
    return %arg0, %c0_i32 : i32, i32
  }
}

module attributes {stable_mosaic.version = 11 : i64} {
  func.func @_mm_kernel(%arg0: i32, %arg1: memref<128x32xbf16, #tpu.memory_space<vmem>>, %arg2: memref<32x32xbf16, #tpu.memory_space<vmem>>, %arg3: memref<128x32xbf16, #tpu.memory_space<vmem>>) attributes {dimension_semantics = [#tpu.dimension_semantics<parallel>], iteration_bounds = array<i64: 1>, scalar_prefetch = 0 : i64, scratch_operands = 0 : i64, tpu.core_type = #tpu.core_type<tc>, window_params = [{transform_indices = @transform_0, window_bounds = array<i64: 128, 32>}, {pipeline_mode = #tpu.pipeline_mode<synchronous>, transform_indices = @transform_1, window_bounds = array<i64: 32, 32>}, {transform_indices = @transform_2, window_bounds = array<i64: 128, 32>}]} {
    %c0 = arith.constant 0 : index
    %c0_0 = arith.constant 0 : index
    %0 = vector.load %arg1[%c0, %c0_0] : memref<128x32xbf16, #tpu.memory_space<vmem>>, vector<128x32xbf16>
    %c0_1 = arith.constant 0 : index
    %c0_2 = arith.constant 0 : index
    %1 = vector.load %arg2[%c0_1, %c0_2] : memref<32x32xbf16, #tpu.memory_space<vmem>>, vector<32x32xbf16>
    %cst = arith.constant dense<0.000000e+00> : vector<128x32xf32>
    %2 = tpu.matmul %0, %1, %cst {dimension_numbers = #tpu.dot_dimension_numbers<[1], [0], [0], [1], [0, 0, 1, 1], [], []>} : vector<128x32xbf16>, vector<32x32xbf16>, vector<128x32xf32> -> vector<128x32xf32>
    %3 = arith.truncf %2 : vector<128x32xf32> to vector<128x32xbf16>
    %c0_3 = arith.constant 0 : index
    %c0_4 = arith.constant 0 : index
    %4 = vector.load %arg3[%c0_3, %c0_4] : memref<128x32xbf16, #tpu.memory_space<vmem>>, vector<128x32xbf16>
    tpu.vector_store %arg3[%c0_3, %c0_4], %3 {strides = array<i32>} : memref<128x32xbf16, #tpu.memory_space<vmem>>, vector<128x32xbf16>,
    return
  }
  func.func @transform_0(%arg0: i32) -> (i32, i32) {
    %c0_i32 = arith.constant 0 : i32
    %c0_i32_0 = arith.constant 0 : i32
    return %arg0, %c0_i32 : i32, i32
  }
  func.func @transform_1(%arg0: i32) -> (i32, i32) {
    %c0_i32 = arith.constant 0 : i32
    %c0_i32_0 = arith.constant 0 : i32
    %c0_i32_1 = arith.constant 0 : i32
    return %c0_i32, %c0_i32_0 : i32, i32
  }
  func.func @transform_2(%arg0: i32) -> (i32, i32) {
    %c0_i32 = arith.constant 0 : i32
    %c0_i32_0 = arith.constant 0 : i32
    return %arg0, %c0_i32 : i32, i32
  }
}

module attributes {stable_mosaic.version = 11 : i64} {
  func.func @_tail_dense_kernel(%arg0: i32, %arg1: memref<128x32xbf16, #tpu.memory_space<vmem>>, %arg2: memref<128x32xbf16, #tpu.memory_space<vmem>>, %arg3: memref<32x32xbf16, #tpu.memory_space<vmem>>, %arg4: memref<32x128xbf16, #tpu.memory_space<vmem>>, %arg5: memref<128x32xbf16, #tpu.memory_space<vmem>>, %arg6: memref<128x32xbf16, #tpu.memory_space<vmem>>) attributes {dimension_semantics = [#tpu.dimension_semantics<parallel>], iteration_bounds = array<i64: 1>, scalar_prefetch = 0 : i64, scratch_operands = 0 : i64, tpu.core_type = #tpu.core_type<tc>, window_params = [{transform_indices = @transform_0, window_bounds = array<i64: 128, 32>}, {transform_indices = @transform_1, window_bounds = array<i64: 128, 32>}, {pipeline_mode = #tpu.pipeline_mode<synchronous>, transform_indices = @transform_2, window_bounds = array<i64: 32, 32>}, {pipeline_mode = #tpu.pipeline_mode<synchronous>, transform_indices = @transform_3, window_bounds = array<i64: 32, 128>}, {pipeline_mode = #tpu.pipeline_mode<synchronous>, transform_indices = @transform_4, window_bounds = array<i64: 128, 32>}, {transform_indices = @transform_5, window_bounds = array<i64: 128, 32>}]} {
    %c0 = arith.constant 0 : index
    %c0_0 = arith.constant 0 : index
    %0 = vector.load %arg1[%c0, %c0_0] : memref<128x32xbf16, #tpu.memory_space<vmem>>, vector<128x32xbf16>
    %c0_1 = arith.constant 0 : index
    %c0_2 = arith.constant 0 : index
    %1 = vector.load %arg3[%c0_1, %c0_2] : memref<32x32xbf16, #tpu.memory_space<vmem>>, vector<32x32xbf16>
    %cst = arith.constant dense<0.000000e+00> : vector<128x32xf32>
    %2 = tpu.matmul %0, %1, %cst {dimension_numbers = #tpu.dot_dimension_numbers<[1], [0], [0], [1], [0, 0, 1, 1], [], []>} : vector<128x32xbf16>, vector<32x32xbf16>, vector<128x32xf32> -> vector<128x32xf32>
    %c0_3 = arith.constant 0 : index
    %c0_4 = arith.constant 0 : index
    %3 = vector.load %arg2[%c0_3, %c0_4] : memref<128x32xbf16, #tpu.memory_space<vmem>>, vector<128x32xbf16>
    %4 = arith.extf %3 : vector<128x32xbf16> to vector<128x32xf32>
    %5 = arith.addf %2, %4 : vector<128x32xf32>
    %6 = arith.mulf %5, %5 : vector<128x32xf32>
    %cst_5 = arith.constant dense<0.000000e+00> : vector<128xf32>
    %7 = vector.multi_reduction <add>, %6, %cst_5 [1] : vector<128x32xf32> to vector<128xf32>
    %8 = vector.shape_cast %7 : vector<128xf32> to vector<128x1xf32>
    %9 = math.sqrt %8 : vector<128x1xf32>
    %cst_6 = arith.constant 9.99999996E-13 : f32
    %10 = vector.broadcast %cst_6 : f32 to vector<128x1xf32>
    %11 = arith.maximumf %9, %10 : vector<128x1xf32>
    %12 = vector.broadcast %11 : vector<128x1xf32> to vector<128x32xf32>
    %13 = arith.divf %5, %12 : vector<128x32xf32>
    %cst_7 = arith.constant 5.65685415 : f32
    %14 = vector.broadcast %cst_7 : f32 to vector<128x32xf32>
    %15 = arith.mulf %13, %14 : vector<128x32xf32>
    %16 = arith.truncf %15 : vector<128x32xf32> to vector<128x32xbf16>
    %c0_8 = arith.constant 0 : index
    %c0_9 = arith.constant 0 : index
    %17 = vector.load %arg4[%c0_8, %c0_9] : memref<32x128xbf16, #tpu.memory_space<vmem>>, vector<32x128xbf16>
    %cst_10 = arith.constant dense<0.000000e+00> : vector<128x128xf32>
    %18 = tpu.matmul %16, %17, %cst_10 {dimension_numbers = #tpu.dot_dimension_numbers<[1], [0], [0], [1], [0, 0, 1, 1], [], []>} : vector<128x32xbf16>, vector<32x128xbf16>, vector<128x128xf32> -> vector<128x128xf32>
    %cst_11 = arith.constant 5.000000e-01 : f32
    %19 = vector.broadcast %cst_11 : f32 to vector<128x128xf32>
    %20 = arith.mulf %19, %18 : vector<128x128xf32>
    %cst_12 = arith.constant 0.707106769 : f32
    %21 = vector.broadcast %cst_12 : f32 to vector<128x128xf32>
    %22 = arith.mulf %18, %21 : vector<128x128xf32>
    %23 = math.erf %22 : vector<128x128xf32>
    %cst_13 = arith.constant 1.000000e+00 : f32
    %24 = vector.broadcast %cst_13 : f32 to vector<128x128xf32>
    %25 = arith.addf %24, %23 : vector<128x128xf32>
    %26 = arith.mulf %20, %25 : vector<128x128xf32>
    %27 = arith.truncf %26 : vector<128x128xf32> to vector<128x128xbf16>
    %c0_14 = arith.constant 0 : index
    %c0_15 = arith.constant 0 : index
    %28 = vector.load %arg5[%c0_14, %c0_15] : memref<128x32xbf16, #tpu.memory_space<vmem>>, vector<128x32xbf16>
    %cst_16 = arith.constant dense<0.000000e+00> : vector<128x32xf32>
    %29 = tpu.matmul %27, %28, %cst_16 {dimension_numbers = #tpu.dot_dimension_numbers<[1], [0], [0], [1], [0, 0, 1, 1], [], []>} : vector<128x128xbf16>, vector<128x32xbf16>, vector<128x32xf32> -> vector<128x32xf32>
    %30 = arith.addf %29, %5 : vector<128x32xf32>
    %31 = arith.truncf %30 : vector<128x32xf32> to vector<128x32xbf16>
    %c0_17 = arith.constant 0 : index
    %c0_18 = arith.constant 0 : index
    %32 = vector.load %arg6[%c0_17, %c0_18] : memref<128x32xbf16, #tpu.memory_space<vmem>>, vector<128x32xbf16>
    tpu.vector_store %arg6[%c0_17, %c0_18], %31 {strides = array<i32>} : memref<128x32xbf16, #tpu.memory_space<vmem>>, vector<128x32xbf16>,
    return
  }
  func.func @transform_0(%arg0: i32) -> (i32, i32) {
    %c0_i32 = arith.constant 0 : i32
    %c0_i32_0 = arith.constant 0 : i32
    return %arg0, %c0_i32 : i32, i32
  }
  func.func @transform_1(%arg0: i32) -> (i32, i32) {
    %c0_i32 = arith.constant 0 : i32
    %c0_i32_0 = arith.constant 0 : i32
    return %arg0, %c0_i32 : i32, i32
  }
  func.func @transform_2(%arg0: i32) -> (i32, i32) {
    %c0_i32 = arith.constant 0 : i32
    %c0_i32_0 = arith.constant 0 : i32
    %c0_i32_1 = arith.constant 0 : i32
    return %c0_i32, %c0_i32_0 : i32, i32
  }
  func.func @transform_3(%arg0: i32) -> (i32, i32) {
    %c0_i32 = arith.constant 0 : i32
    %c0_i32_0 = arith.constant 0 : i32
    %c0_i32_1 = arith.constant 0 : i32
    return %c0_i32, %c0_i32_0 : i32, i32
  }
  func.func @transform_4(%arg0: i32) -> (i32, i32) {
    %c0_i32 = arith.constant 0 : i32
    %c0_i32_0 = arith.constant 0 : i32
    %c0_i32_1 = arith.constant 0 : i32
    return %c0_i32, %c0_i32_0 : i32, i32
  }
  func.func @transform_5(%arg0: i32) -> (i32, i32) {
    %c0_i32 = arith.constant 0 : i32
    %c0_i32_0 = arith.constant 0 : i32
    return %arg0, %c0_i32 : i32, i32
  }
}

module attributes {stable_mosaic.version = 11 : i64} {
  func.func @_head_kernel(%arg0: i32, %arg1: i32, %arg2: memref<1x64x32xbf16, #tpu.memory_space<vmem>>, %arg3: memref<1x32xf32, #tpu.memory_space<vmem>>, %arg4: memref<1x32xf32, #tpu.memory_space<vmem>>, %arg5: memref<32x16xf32, #tpu.memory_space<vmem>>, %arg6: memref<1x16xf32, #tpu.memory_space<vmem>>, %arg7: memref<1x1x16xf32, #tpu.memory_space<vmem>>, %arg8: memref<1x32xf32, #tpu.memory_space<vmem>>) attributes {dimension_semantics = [#tpu.dimension_semantics<parallel>, #tpu.dimension_semantics<arbitrary>], iteration_bounds = array<i64: 2, 1>, scalar_prefetch = 0 : i64, scratch_operands = 1 : i64, tpu.core_type = #tpu.core_type<tc>, window_params = [{transform_indices = @transform_0, window_bounds = array<i64: 1, 64, 32>}, {pipeline_mode = #tpu.pipeline_mode<synchronous>, transform_indices = @transform_1, window_bounds = array<i64: 1, 32>}, {pipeline_mode = #tpu.pipeline_mode<synchronous>, transform_indices = @transform_2, window_bounds = array<i64: 1, 32>}, {pipeline_mode = #tpu.pipeline_mode<synchronous>, transform_indices = @transform_3, window_bounds = array<i64: 32, 16>}, {pipeline_mode = #tpu.pipeline_mode<synchronous>, transform_indices = @transform_4, window_bounds = array<i64: 1, 16>}, {transform_indices = @transform_5, window_bounds = array<i64: 1, 1, 16>}]} {
    %c0_i32 = arith.constant 0 : i32
    %0 = arith.cmpi eq, %arg1, %c0_i32 : i32
    %1 = arith.extui %0 : i1 to i32
    %c0_i32_0 = arith.constant 0 : i32
    %2 = arith.cmpi ne, %1, %c0_i32_0 : i32
    scf.if %2 {
      %cst_18 = arith.constant 0xFF800000 : f32
      %38 = vector.broadcast %cst_18 : f32 to vector<1x32xf32>
      %c0_19 = arith.constant 0 : index
      %c0_20 = arith.constant 0 : index
      %39 = vector.load %arg8[%c0_19, %c0_20] : memref<1x32xf32, #tpu.memory_space<vmem>>, vector<1x32xf32>
      tpu.vector_store %arg8[%c0_19, %c0_20], %38 {strides = array<i32>} : memref<1x32xf32, #tpu.memory_space<vmem>>, vector<1x32xf32>,
    } else {
    }
    %c0 = arith.constant 0 : index
    %c0_1 = arith.constant 0 : index
    %c0_2 = arith.constant 0 : index
    %3 = vector.load %arg2[%c0, %c0_1, %c0_2] : memref<1x64x32xbf16, #tpu.memory_space<vmem>>, vector<1x64x32xbf16>
    %4 = vector.shape_cast %3 : vector<1x64x32xbf16> to vector<64x32xbf16>
    %5 = arith.extf %4 : vector<64x32xbf16> to vector<64x32xf32>
    %cst = arith.constant dense<0.000000e+00> : vector<64xf32>
    %6 = vector.multi_reduction <add>, %5, %cst [1] : vector<64x32xf32> to vector<64xf32>
    %7 = vector.shape_cast %6 : vector<64xf32> to vector<64x1xf32>
    %cst_3 = arith.constant 3.200000e+01 : f32
    %8 = vector.broadcast %cst_3 : f32 to vector<64x1xf32>
    %9 = arith.divf %7, %8 : vector<64x1xf32>
    %10 = vector.broadcast %9 : vector<64x1xf32> to vector<64x32xf32>
    %11 = arith.subf %5, %10 : vector<64x32xf32>
    %12 = arith.mulf %11, %11 : vector<64x32xf32>
    %cst_4 = arith.constant dense<0.000000e+00> : vector<64xf32>
    %13 = vector.multi_reduction <add>, %12, %cst_4 [1] : vector<64x32xf32> to vector<64xf32>
    %14 = vector.shape_cast %13 : vector<64xf32> to vector<64x1xf32>
    %cst_5 = arith.constant 3.200000e+01 : f32
    %15 = vector.broadcast %cst_5 : f32 to vector<64x1xf32>
    %16 = arith.divf %14, %15 : vector<64x1xf32>
    %17 = vector.broadcast %9 : vector<64x1xf32> to vector<64x32xf32>
    %18 = arith.subf %5, %17 : vector<64x32xf32>
    %cst_6 = arith.constant 9.99999974E-6 : f32
    %19 = vector.broadcast %cst_6 : f32 to vector<64x1xf32>
    %20 = arith.addf %16, %19 : vector<64x1xf32>
    %21 = math.rsqrt %20 : vector<64x1xf32>
    %22 = vector.broadcast %21 : vector<64x1xf32> to vector<64x32xf32>
    %23 = arith.mulf %18, %22 : vector<64x32xf32>
    %c0_7 = arith.constant 0 : index
    %c0_8 = arith.constant 0 : index
    %24 = vector.load %arg3[%c0_7, %c0_8] : memref<1x32xf32, #tpu.memory_space<vmem>>, vector<1x32xf32>
    %25 = vector.broadcast %24 : vector<1x32xf32> to vector<64x32xf32>
    %26 = arith.mulf %23, %25 : vector<64x32xf32>
    %c0_9 = arith.constant 0 : index
    %c0_10 = arith.constant 0 : index
    %27 = vector.load %arg4[%c0_9, %c0_10] : memref<1x32xf32, #tpu.memory_space<vmem>>, vector<1x32xf32>
    %28 = vector.broadcast %27 : vector<1x32xf32> to vector<64x32xf32>
    %29 = arith.addf %26, %28 : vector<64x32xf32>
    %c0_11 = arith.constant 0 : index
    %c0_12 = arith.constant 0 : index
    %30 = vector.load %arg8[%c0_11, %c0_12] : memref<1x32xf32, #tpu.memory_space<vmem>>, vector<1x32xf32>
    %cst_13 = arith.constant dense<0xFF800000> : vector<32xf32>
    %31 = vector.multi_reduction <maximumf>, %29, %cst_13 [0] : vector<64x32xf32> to vector<32xf32>
    %32 = vector.shape_cast %31 : vector<32xf32> to vector<1x32xf32>
    %33 = arith.maximumf %30, %32 : vector<1x32xf32>
    %c0_14 = arith.constant 0 : index
    %c0_15 = arith.constant 0 : index
    %34 = vector.load %arg8[%c0_14, %c0_15] : memref<1x32xf32, #tpu.memory_space<vmem>>, vector<1x32xf32>
    tpu.vector_store %arg8[%c0_14, %c0_15], %33 {strides = array<i32>} : memref<1x32xf32, #tpu.memory_space<vmem>>, vector<1x32xf32>,
    %c0_i32_16 = arith.constant 0 : i32
    %35 = arith.cmpi eq, %arg1, %c0_i32_16 : i32
    %36 = arith.extui %35 : i1 to i32
    %c0_i32_17 = arith.constant 0 : i32
    %37 = arith.cmpi ne, %36, %c0_i32_17 : i32
    scf.if %37 {
      %c0_18 = arith.constant 0 : index
      %c0_19 = arith.constant 0 : index
      %38 = vector.load %arg8[%c0_18, %c0_19] : memref<1x32xf32, #tpu.memory_space<vmem>>, vector<1x32xf32>
      %c0_20 = arith.constant 0 : index
      %c0_21 = arith.constant 0 : index
      %39 = vector.load %arg5[%c0_20, %c0_21] : memref<32x16xf32, #tpu.memory_space<vmem>>, vector<32x16xf32>
      %cst_22 = arith.constant dense<0.000000e+00> : vector<1x16xf32>
      %40 = tpu.matmul %38, %39, %cst_22 {dimension_numbers = #tpu.dot_dimension_numbers<[1], [0], [0], [1], [0, 0, 1, 1], [], []>} : vector<1x32xf32>, vector<32x16xf32>, vector<1x16xf32> -> vector<1x16xf32>
      %c0_23 = arith.constant 0 : index
      %c0_24 = arith.constant 0 : index
      %41 = vector.load %arg6[%c0_23, %c0_24] : memref<1x16xf32, #tpu.memory_space<vmem>>, vector<1x16xf32>
      %42 = arith.addf %40, %41 : vector<1x16xf32>
      %43 = vector.shape_cast %42 : vector<1x16xf32> to vector<1x1x16xf32>
      %c0_25 = arith.constant 0 : index
      %c0_26 = arith.constant 0 : index
      %c0_27 = arith.constant 0 : index
      %44 = vector.load %arg7[%c0_25, %c0_26, %c0_27] : memref<1x1x16xf32, #tpu.memory_space<vmem>>, vector<1x1x16xf32>
      tpu.vector_store %arg7[%c0_25, %c0_26, %c0_27], %43 {strides = array<i32>} : memref<1x1x16xf32, #tpu.memory_space<vmem>>, vector<1x1x16xf32>,
    } else {
    }
    return
  }
  func.func @transform_0(%arg0: i32, %arg1: i32) -> (i32, i32, i32) {
    %c0_i32 = arith.constant 0 : i32
    %c0_i32_0 = arith.constant 0 : i32
    return %arg0, %arg1, %c0_i32 : i32, i32, i32
  }
  func.func @transform_1(%arg0: i32, %arg1: i32) -> (i32, i32) {
    %c0_i32 = arith.constant 0 : i32
    %c0_i32_0 = arith.constant 0 : i32
    %c0_i32_1 = arith.constant 0 : i32
    return %c0_i32, %c0_i32_0 : i32, i32
  }
  func.func @transform_2(%arg0: i32, %arg1: i32) -> (i32, i32) {
    %c0_i32 = arith.constant 0 : i32
    %c0_i32_0 = arith.constant 0 : i32
    %c0_i32_1 = arith.constant 0 : i32
    return %c0_i32, %c0_i32_0 : i32, i32
  }
  func.func @transform_3(%arg0: i32, %arg1: i32) -> (i32, i32) {
    %c0_i32 = arith.constant 0 : i32
    %c0_i32_0 = arith.constant 0 : i32
    %c0_i32_1 = arith.constant 0 : i32
    return %c0_i32, %c0_i32_0 : i32, i32
  }
  func.func @transform_4(%arg0: i32, %arg1: i32) -> (i32, i32) {
    %c0_i32 = arith.constant 0 : i32
    %c0_i32_0 = arith.constant 0 : i32
    %c0_i32_1 = arith.constant 0 : i32
    return %c0_i32, %c0_i32_0 : i32, i32
  }
  func.func @transform_5(%arg0: i32, %arg1: i32) -> (i32, i32, i32) {
    %c0_i32 = arith.constant 0 : i32
    %c0_i32_0 = arith.constant 0 : i32
    %c0_i32_1 = arith.constant 0 : i32
    return %arg0, %c0_i32, %c0_i32_0 : i32, i32, i32
  }
}

</mosaic_0001>

<llo_original>
// kernel: neckformer_forward.6
$region0: #{neckformer_forward.6}
  #allocation0 [shape = 'u32[]', space=smem, size = 0x4, offset = 0x4, fixed_abs, tag = 'smem constant byte address 0x4 - core index']
  #allocation1 [shape = 'u32[72,128]{1,0:T(1,128)}', space=vmem, size = 0x9000, scoped, tag = 'internal scratch']
  %s0 = inlined_call_operand.vmem [shape: bf16[128,32], index: 0, kind: input, shape index: {}]
  %s1 = inlined_call_operand.vmem [shape: bf16[32,32], index: 1, kind: input, shape index: {}]
  %s2 = inlined_call_operand.vmem [shape: f32[1,32], index: 2, kind: input, shape index: {}]
  %s3 = inlined_call_operand.vmem [shape: bf16[128,32], index: 3, kind: output, shape index: {0}]
  %s4 = inlined_call_operand.vmem [shape: bf16[128,32], index: 4, kind: output, shape index: {1}]
  %5 = xla_tuple %s3, %s4
  %s6 = sld [smem:[#allocation0]]
  $region30: #{neckformer_forward.6} parent=0
    _
  %s8 = ssub.s32 1, %s6
  %s9 = scalar_select 0, %s8, %s6
  // Predicated region
  $region2: #{neckformer_forward.6} parent=0 // pred_check
    _
  $region3: #{neckformer_forward.6} parent=0 // pred_check_branch
    %11 = sbr.rel (0) target = $region5
  $region4: #{neckformer_forward.6} parent=0 // pred_region
    _
  $region5: #{neckformer_forward.6} parent=0 // pred_fallthru
    _
  // Predicated region
  $region6: #{neckformer_forward.6} parent=0 // pred_check
    _
  $region7: #{neckformer_forward.6} parent=0 // pred_check_branch
    %13 = sbr.rel (0) target = $region9
  $region8: #{neckformer_forward.6} parent=0 // pred_region
    _
  $region9: #{neckformer_forward.6} parent=0 // pred_fallthru
    _
  // Predicated region
  $region10: #{neckformer_forward.6} parent=0 // pred_check
    _
  $region11: #{neckformer_forward.6} parent=0 // pred_check_branch
    %15 = sbr.rel (0) target = $region13
  $region12: #{neckformer_forward.6} parent=0 // pred_region
    _
  $region13: #{neckformer_forward.6} parent=0 // pred_fallthru
    _
  %v17 = vld [vmem:[%s0] sm:$0xf]
  %v18 = vld [vmem:[%s0 + $0x4] sm:$0xf]
  %v19 = vld [vmem:[%s0 + $0x8] sm:$0xf]
  %v20 = vld [vmem:[%s0 + $0xc] sm:$0xf]
  %v21 = vld [vmem:[%s0 + $0x10] sm:$0xf]
  %v22 = vld [vmem:[%s0 + $0x14] sm:$0xf]
  %v23 = vld [vmem:[%s0 + $0x18] sm:$0xf]
  %v24 = vld [vmem:[%s0 + $0x1c] sm:$0xf]
  %v25 = vld [vmem:[%s0 + $0x20] sm:$0xf]
  %v26 = vld [vmem:[%s0 + $0x24] sm:$0xf]
  %v27 = vld [vmem:[%s0 + $0x28] sm:$0xf]
  %v28 = vld [vmem:[%s0 + $0x2c] sm:$0xf]
  %v29 = vld [vmem:[%s0 + $0x30] sm:$0xf]
  %v30 = vld [vmem:[%s0 + $0x34] sm:$0xf]
  %v31 = vld [vmem:[%s0 + $0x38] sm:$0xf]
  %v32 = vld [vmem:[%s0 + $0x3c] sm:$0xf]
  %v33 = vld [vmem:[%s1] sm:$0xf]
  %v34 = vld [vmem:[%s1 + $0x4] sm:$0xf]
  %v35 = vld [vmem:[%s1 + $0x8] sm:$0xf]
  %v36 = vld [vmem:[%s1 + $0xc] sm:$0xf]
  %v37 = vld [vmem:[%s2] sm:$0x1]
  %v39 = vperm.slane %v37, 0
  %v57 = vunpack.c.l.b16 %v17
  %v58 = vunpack.c.l.b16 %v18
  %v59 = vunpack.c.l.b16 %v19
  %v60 = vunpack.c.l.b16 %v20
  %v61 = vunpack.c.l.b16 %v21
  %v62 = vunpack.c.l.b16 %v22
  %v63 = vunpack.c.l.b16 %v23
  %v64 = vunpack.c.l.b16 %v24
  %v65 = vunpack.c.l.b16 %v25
  %v66 = vunpack.c.l.b16 %v26
  %v67 = vunpack.c.l.b16 %v27
  %v68 = vunpack.c.l.b16 %v28
  %v69 = vunpack.c.l.b16 %v29
  %v70 = vunpack.c.l.b16 %v30
  %v71 = vunpack.c.l.b16 %v31
  %v72 = vunpack.c.l.b16 %v32
  %v73 = vpack.c.b16 %v58, %v57
  %v74 = vpack.c.b16 %v60, %v59
  %v75 = vpack.c.b16 %v62, %v61
  %v76 = vpack.c.b16 %v64, %v63
  %v77 = vpack.c.b16 %v66, %v65
  %v78 = vpack.c.b16 %v68, %v67
  %v79 = vpack.c.b16 %v70, %v69
  %v80 = vpack.c.b16 %v72, %v71
  %v85 = vunpack.c.l.b16 %v33
  %v86 = vunpack.c.l.b16 %v34
  %v87 = vunpack.c.l.b16 %v35
  %v88 = vunpack.c.l.b16 %v36
  %v89 = vpack.c.b16 %v86, %v85
  %v90 = vpack.c.b16 %v88, %v87
  %vm93 = vcmask 261120
  %v95 = vsel %vm93, %v73, 0
  %v98 = vsel %vm93, %v74, 0
  %v101 = vsel %vm93, %v75, 0
  %v104 = vsel %vm93, %v76, 0
  %v107 = vsel %vm93, %v77, 0
  %v110 = vsel %vm93, %v78, 0
  %v113 = vsel %vm93, %v79, 0
  %v116 = vsel %vm93, %v80, 0
  %118 = vmatpush.bf16.msra.mxu0 0
  %119 = vmatpush.bf16.msra.mxu0 0
  %120 = vmatpush.bf16.msra.mxu0 0
  %121 = vmatpush.bf16.msra.mxu0 0
  %122 = vmatpush.bf16.msra.mxu0 0
  %123 = vmatpush.bf16.msra.mxu0 0
  %124 = vmatpush.bf16.msra.mxu0 %v90
  %125 = vmatpush.bf16.msra.mxu0 %v89
  %126 = vmatmul.bf16.gmra.mxu0 %v95
  %v127 = vpop.f32.mrf.mxu0
  %v128 = vadd.f32 %v39, %v127
  %v129 = vpop.f32.mrf.mxu0
  %v130 = vadd.f32 %v39, %v129
  %131 = vmatmul.bf16.gmra.mxu0 %v98
  %v132 = vpop.f32.mrf.mxu0
  %v133 = vadd.f32 %v39, %v132
  %v134 = vpop.f32.mrf.mxu0
  %v135 = vadd.f32 %v39, %v134
  %136 = vmatmul.bf16.gmra.mxu0 %v101
  %v137 = vpop.f32.mrf.mxu0
  %v138 = vadd.f32 %v39, %v137
  %v139 = vpop.f32.mrf.mxu0
  %v140 = vadd.f32 %v39, %v139
  %141 = vmatmul.bf16.gmra.mxu0 %v104
  %v142 = vpop.f32.mrf.mxu0
  %v143 = vadd.f32 %v39, %v142
  %v144 = vpop.f32.mrf.mxu0
  %v145 = vadd.f32 %v39, %v144
  %146 = vmatmul.bf16.gmra.mxu0 %v107
  %v147 = vpop.f32.mrf.mxu0
  %v148 = vadd.f32 %v39, %v147
  %v149 = vpop.f32.mrf.mxu0
  %v150 = vadd.f32 %v39, %v149
  %151 = vmatmul.bf16.gmra.mxu0 %v110
  %v152 = vpop.f32.mrf.mxu0
  %v153 = vadd.f32 %v39, %v152
  %v154 = vpop.f32.mrf.mxu0
  %v155 = vadd.f32 %v39, %v154
  %156 = vmatmul.bf16.gmra.mxu0 %v113
  %v157 = vpop.f32.mrf.mxu0
  %v158 = vadd.f32 %v39, %v157
  %v159 = vpop.f32.mrf.mxu0
  %v160 = vadd.f32 %v39, %v159
  %161 = vmatmul.bf16.gmra.mxu0 %v116
  %v162 = vpop.f32.mrf.mxu0
  %v163 = vadd.f32 %v39, %v162
  %v164 = vpop.f32.mrf.mxu0
  %v165 = vadd.f32 %v39, %v164
  %166 = vdwg.mxu0
  %v167 = vpack.c.bf16 %v128, %v128
  %v168 = vpack.c.bf16 %v130, %v130
  %v169 = vpack.c.bf16 %v133, %v133
  %v170 = vpack.c.bf16 %v135, %v135
  %v171 = vpack.c.bf16 %v138, %v138
  %v172 = vpack.c.bf16 %v140, %v140
  %v173 = vpack.c.bf16 %v143, %v143
  %v174 = vpack.c.bf16 %v145, %v145
  %v175 = vpack.c.bf16 %v148, %v148
  %v176 = vpack.c.bf16 %v150, %v150
  %v177 = vpack.c.bf16 %v153, %v153
  %v178 = vpack.c.bf16 %v155, %v155
  %v179 = vpack.c.bf16 %v158, %v158
  %v180 = vpack.c.bf16 %v160, %v160
  %v181 = vpack.c.bf16 %v163, %v163
  %v182 = vpack.c.bf16 %v165, %v165
  %vm183 = vcmask 257024
  %184 = vst.msk [vmem:[%s3] sm:$0xf] %vm183, %v167
  %185 = vst.msk [vmem:[%s3 + $0x4] sm:$0xf] %vm183, %v168
  %186 = vst.msk [vmem:[%s3 + $0x8] sm:$0xf] %vm183, %v169
  %187 = vst.msk [vmem:[%s3 + $0xc] sm:$0xf] %vm183, %v170
  %188 = vst.msk [vmem:[%s3 + $0x10] sm:$0xf] %vm183, %v171
  %189 = vst.msk [vmem:[%s3 + $0x14] sm:$0xf] %vm183, %v172
  %190 = vst.msk [vmem:[%s3 + $0x18] sm:$0xf] %vm183, %v173
  %191 = vst.msk [vmem:[%s3 + $0x1c] sm:$0xf] %vm183, %v174
  %192 = vst.msk [vmem:[%s3 + $0x20] sm:$0xf] %vm183, %v175
  %193 = vst.msk [vmem:[%s3 + $0x24] sm:$0xf] %vm183, %v176
  %194 = vst.msk [vmem:[%s3 + $0x28] sm:$0xf] %vm183, %v177
  %195 = vst.msk [vmem:[%s3 + $0x2c] sm:$0xf] %vm183, %v178
  %196 = vst.msk [vmem:[%s3 + $0x30] sm:$0xf] %vm183, %v179
  %197 = vst.msk [vmem:[%s3 + $0x34] sm:$0xf] %vm183, %v180
  %198 = vst.msk [vmem:[%s3 + $0x38] sm:$0xf] %vm183, %v181
  %199 = vst.msk [vmem:[%s3 + $0x3c] sm:$0xf] %vm183, %v182
  %v200 = vmul.f32 %v128, %v128
  %v201 = vmul.f32 %v130, %v130
  %v202 = vmul.f32 %v133, %v133
  %v203 = vmul.f32 %v135, %v135
  %v204 = vmul.f32 %v138, %v138
  %v205 = vmul.f32 %v140, %v140
  %v206 = vmul.f32 %v143, %v143
  %v207 = vmul.f32 %v145, %v145
  %v208 = vmul.f32 %v148, %v148
  %v209 = vmul.f32 %v150, %v150
  %v210 = vmul.f32 %v153, %v153
  %v211 = vmul.f32 %v155, %v155
  %v212 = vmul.f32 %v158, %v158
  %v213 = vmul.f32 %v160, %v160
  %v214 = vmul.f32 %v163, %v163
  %v215 = vmul.f32 %v165, %v165
  %v216 = vsel %vm93, %v200, 0.0
  %217 = vadd.xlane.f32.xlu0 %v216
  %v218 = vpop.xlane.xlu0 %217
  %v219 = vsel %vm93, %v201, 0.0
  %220 = vadd.xlane.f32.xlu0 %v219
  %v221 = vpop.xlane.xlu0 %220
  %v222 = vsel %vm93, %v202, 0.0
  %223 = vadd.xlane.f32.xlu0 %v222
  %v224 = vpop.xlane.xlu0 %223
  %v225 = vsel %vm93, %v203, 0.0
  %226 = vadd.xlane.f32.xlu0 %v225
  %v227 = vpop.xlane.xlu0 %226
  %v228 = vsel %vm93, %v204, 0.0
  %229 = vadd.xlane.f32.xlu0 %v228
  %v230 = vpop.xlane.xlu0 %229
  %v231 = vsel %vm93, %v205, 0.0
  %232 = vadd.xlane.f32.xlu0 %v231
  %v233 = vpop.xlane.xlu0 %232
  %v234 = vsel %vm93, %v206, 0.0
  %235 = vadd.xlane.f32.xlu0 %v234
  %v236 = vpop.xlane.xlu0 %235
  %v237 = vsel %vm93, %v207, 0.0
  %238 = vadd.xlane.f32.xlu0 %v237
  %v239 = vpop.xlane.xlu0 %238
  %v240 = vsel %vm93, %v208, 0.0
  %241 = vadd.xlane.f32.xlu0 %v240
  %v242 = vpop.xlane.xlu0 %241
  %v243 = vsel %vm93, %v209, 0.0
  %244 = vadd.xlane.f32.xlu0 %v243
  %v245 = vpop.xlane.xlu0 %244
  %v246 = vsel %vm93, %v210, 0.0
  %247 = vadd.xlane.f32.xlu0 %v246
  %v248 = vpop.xlane.xlu0 %247
  %v249 = vsel %vm93, %v211, 0.0
  %250 = vadd.xlane.f32.xlu0 %v249
  %v251 = vpop.xlane.xlu0 %250
  %v252 = vsel %vm93, %v212, 0.0
  %253 = vadd.xlane.f32.xlu0 %v252
  %v254 = vpop.xlane.xlu0 %253
  %v255 = vsel %vm93, %v213, 0.0
  %256 = vadd.xlane.f32.xlu0 %v255
  %v257 = vpop.xlane.xlu0 %256
  %v258 = vsel %vm93, %v214, 0.0
  %259 = vadd.xlane.f32.xlu0 %v258
  %v260 = vpop.xlane.xlu0 %259
  %v261 = vsel %vm93, %v215, 0.0
  %262 = vadd.xlane.f32.xlu0 %v261
  %v263 = vpop.xlane.xlu0 %262
  %v264 = vrsqrt.pop %v218
  %v265 = vmul.f32 %v264, %v218
  %v266 = vmul.f32 %v265, %v264
  %v267 = vmul.f32 0.5, %v266
  %v268 = vsub.f32 1.5, %v267
  %v269 = vmul.f32 %v264, %v268
  %v270 = vmul.f32 %v218, %v269
  %vm271 = vcmp.eq.f32.partialorder %v218, inf
  %v272 = vsel %vm271, %v218, %v270
  %vm273 = vcmp.eq.f32.partialorder %v218, 0.0
  %v274 = vand.u32 %v218, 2147483648
  %v275 = vsel %vm273, %v274, %v272
  %v276 = vrsqrt.pop %v221
  %v277 = vmul.f32 %v276, %v221
  %v278 = vmul.f32 %v277, %v276
  %v279 = vmul.f32 0.5, %v278
  %v280 = vsub.f32 1.5, %v279
  %v281 = vmul.f32 %v276, %v280
  %v282 = vmul.f32 %v221, %v281
  %vm283 = vcmp.eq.f32.partialorder %v221, inf
  %v284 = vsel %vm283, %v221, %v282
  %vm285 = vcmp.eq.f32.partialorder %v221, 0.0
  %v286 = vand.u32 %v221, 2147483648
  %v287 = vsel %vm285, %v286, %v284
  %v288 = vrsqrt.pop %v224
  %v289 = vmul.f32 %v288, %v224
  %v290 = vmul.f32 %v289, %v288
  %v291 = vmul.f32 0.5, %v290
  %v292 = vsub.f32 1.5, %v291
  %v293 = vmul.f32 %v288, %v292
  %v294 = vmul.f32 %v224, %v293
  %vm295 = vcmp.eq.f32.partialorder %v224, inf
  %v296 = vsel %vm295, %v224, %v294
  %vm297 = vcmp.eq.f32.partialorder %v224, 0.0
  %v298 = vand.u32 %v224, 2147483648
  %v299 = vsel %vm297, %v298, %v296
  %v300 = vrsqrt.pop %v227
  %v301 = vmul.f32 %v300, %v227
  %v302 = vmul.f32 %v301, %v300
  %v303 = vmul.f32 0.5, %v302
  %v304 = vsub.f32 1.5, %v303
  %v305 = vmul.f32 %v300, %v304
  %v306 = vmul.f32 %v227, %v305
  %vm307 = vcmp.eq.f32.partialorder %v227, inf
  %v308 = vsel %vm307, %v227, %v306
  %vm309 = vcmp.eq.f32.partialorder %v227, 0.0
  %v310 = vand.u32 %v227, 2147483648
  %v311 = vsel %vm309, %v310, %v308
  %v312 = vrsqrt.pop %v230
  %v313 = vmul.f32 %v312, %v230
  %v314 = vmul.f32 %v313, %v312
  %v315 = vmul.f32 0.5, %v314
  %v316 = vsub.f32 1.5, %v315
  %v317 = vmul.f32 %v312, %v316
  %v318 = vmul.f32 %v230, %v317
  %vm319 = vcmp.eq.f32.partialorder %v230, inf
  %v320 = vsel %vm319, %v230, %v318
  %vm321 = vcmp.eq.f32.partialorder %v230, 0.0
  %v322 = vand.u32 %v230, 2147483648
  %v323 = vsel %vm321, %v322, %v320
  %v324 = vrsqrt.pop %v233
  %v325 = vmul.f32 %v324, %v233
  %v326 = vmul.f32 %v325, %v324
  %v327 = vmul.f32 0.5, %v326
  %v328 = vsub.f32 1.5, %v327
  %v329 = vmul.f32 %v324, %v328
  %v330 = vmul.f32 %v233, %v329
  %vm331 = vcmp.eq.f32.partialorder %v233, inf
  %v332 = vsel %vm331, %v233, %v330
  %vm333 = vcmp.eq.f32.partialorder %v233, 0.0
  %v334 = vand.u32 %v233, 2147483648
  %v335 = vsel %vm333, %v334, %v332
  %v336 = vrsqrt.pop %v236
  %v337 = vmul.f32 %v336, %v236
  %v338 = vmul.f32 %v337, %v336
  %v339 = vmul.f32 0.5, %v338
  %v340 = vsub.f32 1.5, %v339
  %v341 = vmul.f32 %v336, %v340
  %v342 = vmul.f32 %v236, %v341
  %vm343 = vcmp.eq.f32.partialorder %v236, inf
  %v344 = vsel %vm343, %v236, %v342
  %vm345 = vcmp.eq.f32.partialorder %v236, 0.0
  %v346 = vand.u32 %v236, 2147483648
  %v347 = vsel %vm345, %v346, %v344
  %v348 = vrsqrt.pop %v239
  %v349 = vmul.f32 %v348, %v239
  %v350 = vmul.f32 %v349, %v348
  %v351 = vmul.f32 0.5, %v350
  %v352 = vsub.f32 1.5, %v351
  %v353 = vmul.f32 %v348, %v352
  %v354 = vmul.f32 %v239, %v353
  %vm355 = vcmp.eq.f32.partialorder %v239, inf
  %v356 = vsel %vm355, %v239, %v354
  %vm357 = vcmp.eq.f32.partialorder %v239, 0.0
  %v358 = vand.u32 %v239, 2147483648
  %v359 = vsel %vm357, %v358, %v356
  %v360 = vrsqrt.pop %v242
  %v361 = vmul.f32 %v360, %v242
  %v362 = vmul.f32 %v361, %v360
  %v363 = vmul.f32 0.5, %v362
  %v364 = vsub.f32 1.5, %v363
  %v365 = vmul.f32 %v360, %v364
  %v366 = vmul.f32 %v242, %v365
  %vm367 = vcmp.eq.f32.partialorder %v242, inf
  %v368 = vsel %vm367, %v242, %v366
  %vm369 = vcmp.eq.f32.partialorder %v242, 0.0
  %v370 = vand.u32 %v242, 2147483648
  %v371 = vsel %vm369, %v370, %v368
  %v372 = vrsqrt.pop %v245
  %v373 = vmul.f32 %v372, %v245
  %v374 = vmul.f32 %v373, %v372
  %v375 = vmul.f32 0.5, %v374
  %v376 = vsub.f32 1.5, %v375
  %v377 = vmul.f32 %v372, %v376
  %v378 = vmul.f32 %v245, %v377
  %vm379 = vcmp.eq.f32.partialorder %v245, inf
  %v380 = vsel %vm379, %v245, %v378
  %vm381 = vcmp.eq.f32.partialorder %v245, 0.0
  %v382 = vand.u32 %v245, 2147483648
  %v383 = vsel %vm381, %v382, %v380
  %v384 = vrsqrt.pop %v248
  %v385 = vmul.f32 %v384, %v248
  %v386 = vmul.f32 %v385, %v384
  %v387 = vmul.f32 0.5, %v386
  %v388 = vsub.f32 1.5, %v387
  %v389 = vmul.f32 %v384, %v388
  %v390 = vmul.f32 %v248, %v389
  %vm391 = vcmp.eq.f32.partialorder %v248, inf
  %v392 = vsel %vm391, %v248, %v390
  %vm393 = vcmp.eq.f32.partialorder %v248, 0.0
  %v394 = vand.u32 %v248, 2147483648
  %v395 = vsel %vm393, %v394, %v392
  %v396 = vrsqrt.pop %v251
  %v397 = vmul.f32 %v396, %v251
  %v398 = vmul.f32 %v397, %v396
  %v399 = vmul.f32 0.5, %v398
  %v400 = vsub.f32 1.5, %v399
  %v401 = vmul.f32 %v396, %v400
  %v402 = vmul.f32 %v251, %v401
  %vm403 = vcmp.eq.f32.partialorder %v251, inf
  %v404 = vsel %vm403, %v251, %v402
  %vm405 = vcmp.eq.f32.partialorder %v251, 0.0
  %v406 = vand.u32 %v251, 2147483648
  %v407 = vsel %vm405, %v406, %v404
  %v408 = vrsqrt.pop %v254
  %v409 = vmul.f32 %v408, %v254
  %v410 = vmul.f32 %v409, %v408
  %v411 = vmul.f32 0.5, %v410
  %v412 = vsub.f32 1.5, %v411
  %v413 = vmul.f32 %v408, %v412
  %v414 = vmul.f32 %v254, %v413
  %vm415 = vcmp.eq.f32.partialorder %v254, inf
  %v416 = vsel %vm415, %v254, %v414
  %vm417 = vcmp.eq.f32.partialorder %v254, 0.0
  %v418 = vand.u32 %v254, 2147483648
  %v419 = vsel %vm417, %v418, %v416
  %v420 = vrsqrt.pop %v257
  %v421 = vmul.f32 %v420, %v257
  %v422 = vmul.f32 %v421, %v420
  %v423 = vmul.f32 0.5, %v422
  %v424 = vsub.f32 1.5, %v423
  %v425 = vmul.f32 %v420, %v424
  %v426 = vmul.f32 %v257, %v425
  %vm427 = vcmp.eq.f32.partialorder %v257, inf
  %v428 = vsel %vm427, %v257, %v426
  %vm429 = vcmp.eq.f32.partialorder %v257, 0.0
  %v430 = vand.u32 %v257, 2147483648
  %v431 = vsel %vm429, %v430, %v428
  %v432 = vrsqrt.pop %v260
  %v433 = vmul.f32 %v432, %v260
  %v434 = vmul.f32 %v433, %v432
  %v435 = vmul.f32 0.5, %v434
  %v436 = vsub.f32 1.5, %v435
  %v437 = vmul.f32 %v432, %v436
  %v438 = vmul.f32 %v260, %v437
  %vm439 = vcmp.eq.f32.partialorder %v260, inf
  %v440 = vsel %vm439, %v260, %v438
  %vm441 = vcmp.eq.f32.partialorder %v260, 0.0
  %v442 = vand.u32 %v260, 2147483648
  %v443 = vsel %vm441, %v442, %v440
  %v444 = vrsqrt.pop %v263
  %v445 = vmul.f32 %v444, %v263
  %v446 = vmul.f32 %v445, %v444
  %v447 = vmul.f32 0.5, %v446
  %v448 = vsub.f32 1.5, %v447
  %v449 = vmul.f32 %v444, %v448
  %v450 = vmul.f32 %v263, %v449
  %vm451 = vcmp.eq.f32.partialorder %v263, inf
  %v452 = vsel %vm451, %v263, %v450
  %vm453 = vcmp.eq.f32.partialorder %v263, 0.0
  %v454 = vand.u32 %v263, 2147483648
  %v455 = vsel %vm453, %v454, %v452
  %v456 = vmax.f32 %v275, 1e-12
  %v457 = vmax.f32 %v287, 1e-12
  %v458 = vmax.f32 %v299, 1e-12
  %v459 = vmax.f32 %v311, 1e-12
  %v460 = vmax.f32 %v323, 1e-12
  %v461 = vmax.f32 %v335, 1e-12
  %v462 = vmax.f32 %v347, 1e-12
  %v463 = vmax.f32 %v359, 1e-12
  %v464 = vmax.f32 %v371, 1e-12
  %v465 = vmax.f32 %v383, 1e-12
  %v466 = vmax.f32 %v395, 1e-12
  %v467 = vmax.f32 %v407, 1e-12
  %v468 = vmax.f32 %v419, 1e-12
  %v469 = vmax.f32 %v431, 1e-12
  %v470 = vmax.f32 %v443, 1e-12
  %v471 = vmax.f32 %v455, 1e-12
  %v472 = vrcp.pop %v456
  %v473 = vmul.f32 %v456, %v472
  %v474 = vsub.f32 1.0, %v473
  %v475 = vmul.f32 %v472, %v474
  %v476 = vadd.f32 %v472, %v475
  %vm477 = vweird.f32 %v456
  %vm478 = vweird.f32 %v472
  %vm479 = vmor %vm477, %vm478
  %v480 = vsel %vm479, %v472, %v476
  %v481 = vand.u32 2147483647, %v456
  %vm482 = vcmp.eq.f32.partialorder %v481, 8.507059e+37
  %v483 = vand.u32 %v456, 2147483648
  %v484 = vor.u32 1.1754944e-38, %v483
  %v485 = vsel %vm482, %v484, %v480
  %v486 = vmul.f32 %v128, %v485
  %v487 = vrcp.pop %v457
  %v488 = vmul.f32 %v457, %v487
  %v489 = vsub.f32 1.0, %v488
  %v490 = vmul.f32 %v487, %v489
  %v491 = vadd.f32 %v487, %v490
  %vm492 = vweird.f32 %v457
  %vm493 = vweird.f32 %v487
  %vm494 = vmor %vm492, %vm493
  %v495 = vsel %vm494, %v487, %v491
  %v496 = vand.u32 2147483647, %v457
  %vm497 = vcmp.eq.f32.partialorder %v496, 8.507059e+37
  %v498 = vand.u32 %v457, 2147483648
  %v499 = vor.u32 1.1754944e-38, %v498
  %v500 = vsel %vm497, %v499, %v495
  %v501 = vmul.f32 %v130, %v500
  %v502 = vrcp.pop %v458
  %v503 = vmul.f32 %v458, %v502
  %v504 = vsub.f32 1.0, %v503
  %v505 = vmul.f32 %v502, %v504
  %v506 = vadd.f32 %v502, %v505
  %vm507 = vweird.f32 %v458
  %vm508 = vweird.f32 %v502
  %vm509 = vmor %vm507, %vm508
  %v510 = vsel %vm509, %v502, %v506
  %v511 = vand.u32 2147483647, %v458
  %vm512 = vcmp.eq.f32.partialorder %v511, 8.507059e+37
  %v513 = vand.u32 %v458, 2147483648
  %v514 = vor.u32 1.1754944e-38, %v513
  %v515 = vsel %vm512, %v514, %v510
  %v516 = vmul.f32 %v133, %v515
  %v517 = vrcp.pop %v459
  %v518 = vmul.f32 %v459, %v517
  %v519 = vsub.f32 1.0, %v518
  %v520 = vmul.f32 %v517, %v519
  %v521 = vadd.f32 %v517, %v520
  %vm522 = vweird.f32 %v459
  %vm523 = vweird.f32 %v517
  %vm524 = vmor %vm522, %vm523
  %v525 = vsel %vm524, %v517, %v521
  %v526 = vand.u32 2147483647, %v459
  %vm527 = vcmp.eq.f32.partialorder %v526, 8.507059e+37
  %v528 = vand.u32 %v459, 2147483648
  %v529 = vor.u32 1.1754944e-38, %v528
  %v530 = vsel %vm527, %v529, %v525
  %v531 = vmul.f32 %v135, %v530
  %v532 = vrcp.pop %v460
  %v533 = vmul.f32 %v460, %v532
  %v534 = vsub.f32 1.0, %v533
  %v535 = vmul.f32 %v532, %v534
  %v536 = vadd.f32 %v532, %v535
  %vm537 = vweird.f32 %v460
  %vm538 = vweird.f32 %v532
  %vm539 = vmor %vm537, %vm538
  %v540 = vsel %vm539, %v532, %v536
  %v541 = vand.u32 2147483647, %v460
  %vm542 = vcmp.eq.f32.partialorder %v541, 8.507059e+37
  %v543 = vand.u32 %v460, 2147483648
  %v544 = vor.u32 1.1754944e-38, %v543
  %v545 = vsel %vm542, %v544, %v540
  %v546 = vmul.f32 %v138, %v545
  %v547 = vrcp.pop %v461
  %v548 = vmul.f32 %v461, %v547
  %v549 = vsub.f32 1.0, %v548
  %v550 = vmul.f32 %v547, %v549
  %v551 = vadd.f32 %v547, %v550
  %vm552 = vweird.f32 %v461
  %vm553 = vweird.f32 %v547
  %vm554 = vmor %vm552, %vm553
  %v555 = vsel %vm554, %v547, %v551
  %v556 = vand.u32 2147483647, %v461
  %vm557 = vcmp.eq.f32.partialorder %v556, 8.507059e+37
  %v558 = vand.u32 %v461, 2147483648
  %v559 = vor.u32 1.1754944e-38, %v558
  %v560 = vsel %vm557, %v559, %v555
  %v561 = vmul.f32 %v140, %v560
  %v562 = vrcp.pop %v462
  %v563 = vmul.f32 %v462, %v562
  %v564 = vsub.f32 1.0, %v563
  %v565 = vmul.f32 %v562, %v564
  %v566 = vadd.f32 %v562, %v565
  %vm567 = vweird.f32 %v462
  %vm568 = vweird.f32 %v562
  %vm569 = vmor %vm567, %vm568
  %v570 = vsel %vm569, %v562, %v566
  %v571 = vand.u32 2147483647, %v462
  %vm572 = vcmp.eq.f32.partialorder %v571, 8.507059e+37
  %v573 = vand.u32 %v462, 2147483648
  %v574 = vor.u32 1.1754944e-38, %v573
  %v575 = vsel %vm572, %v574, %v570
  %v576 = vmul.f32 %v143, %v575
  %v577 = vrcp.pop %v463
  %v578 = vmul.f32 %v463, %v577
  %v579 = vsub.f32 1.0, %v578
  %v580 = vmul.f32 %v577, %v579
  %v581 = vadd.f32 %v577, %v580
  %vm582 = vweird.f32 %v463
  %vm583 = vweird.f32 %v577
  %vm584 = vmor %vm582, %vm583
  %v585 = vsel %vm584, %v577, %v581
  %v586 = vand.u32 2147483647, %v463
  %vm587 = vcmp.eq.f32.partialorder %v586, 8.507059e+37
  %v588 = vand.u32 %v463, 2147483648
  %v589 = vor.u32 1.1754944e-38, %v588
  %v590 = vsel %vm587, %v589, %v585
  %v591 = vmul.f32 %v145, %v590
  %v592 = vrcp.pop %v464
  %v593 = vmul.f32 %v464, %v592
  %v594 = vsub.f32 1.0, %v593
  %v595 = vmul.f32 %v592, %v594
  %v596 = vadd.f32 %v592, %v595
  %vm597 = vweird.f32 %v464
  %vm598 = vweird.f32 %v592
  %vm599 = vmor %vm597, %vm598
  %v600 = vsel %vm599, %v592, %v596
  %v601 = vand.u32 2147483647, %v464
  %vm602 = vcmp.eq.f32.partialorder %v601, 8.507059e+37
  %v603 = vand.u32 %v464, 2147483648
  %v604 = vor.u32 1.1754944e-38, %v603
  %v605 = vsel %vm602, %v604, %v600
  %v606 = vmul.f32 %v148, %v605
  %v607 = vrcp.pop %v465
  %v608 = vmul.f32 %v465, %v607
  %v609 = vsub.f32 1.0, %v608
  %v610 = vmul.f32 %v607, %v609
  %v611 = vadd.f32 %v607, %v610
  %vm612 = vweird.f32 %v465
  %vm613 = vweird.f32 %v607
  %vm614 = vmor %vm612, %vm613
  %v615 = vsel %vm614, %v607, %v611
  %v616 = vand.u32 2147483647, %v465
  %vm617 = vcmp.eq.f32.partialorder %v616, 8.507059e+37
  %v618 = vand.u32 %v465, 2147483648
  %v619 = vor.u32 1.1754944e-38, %v618
  %v620 = vsel %vm617, %v619, %v615
  %v621 = vmul.f32 %v150, %v620
  %v622 = vrcp.pop %v466
  %v623 = vmul.f32 %v466, %v622
  %v624 = vsub.f32 1.0, %v623
  %v625 = vmul.f32 %v622, %v624
  %v626 = vadd.f32 %v622, %v625
  %vm627 = vweird.f32 %v466
  %vm628 = vweird.f32 %v622
  %vm629 = vmor %vm627, %vm628
  %v630 = vsel %vm629, %v622, %v626
  %v631 = vand.u32 2147483647, %v466
  %vm632 = vcmp.eq.f32.partialorder %v631, 8.507059e+37
  %v633 = vand.u32 %v466, 2147483648
  %v634 = vor.u32 1.1754944e-38, %v633
  %v635 = vsel %vm632, %v634, %v630
  %v636 = vmul.f32 %v153, %v635
  %v637 = vrcp.pop %v467
  %v638 = vmul.f32 %v467, %v637
  %v639 = vsub.f32 1.0, %v638
  %v640 = vmul.f32 %v637, %v639
  %v641 = vadd.f32 %v637, %v640
  %vm642 = vweird.f32 %v467
  %vm643 = vweird.f32 %v637
  %vm644 = vmor %vm642, %vm643
  %v645 = vsel %vm644, %v637, %v641
  %v646 = vand.u32 2147483647, %v467
  %vm647 = vcmp.eq.f32.partialorder %v646, 8.507059e+37
  %v648 = vand.u32 %v467, 2147483648
  %v649 = vor.u32 1.1754944e-38, %v648
  %v650 = vsel %vm647, %v649, %v645
  %v651 = vmul.f32 %v155, %v650
  %v652 = vrcp.pop %v468
  %v653 = vmul.f32 %v468, %v652
  %v654 = vsub.f32 1.0, %v653
  %v655 = vmul.f32 %v652, %v654
  %v656 = vadd.f32 %v652, %v655
  %vm657 = vweird.f32 %v468
  %vm658 = vweird.f32 %v652
  %vm659 = vmor %vm657, %vm658
  %v660 = vsel %vm659, %v652, %v656
  %v661 = vand.u32 2147483647, %v468
  %vm662 = vcmp.eq.f32.partialorder %v661, 8.507059e+37
  %v663 = vand.u32 %v468, 2147483648
  %v664 = vor.u32 1.1754944e-38, %v663
  %v665 = vsel %vm662, %v664, %v660
  %v666 = vmul.f32 %v158, %v665
  %v667 = vrcp.pop %v469
  %v668 = vmul.f32 %v469, %v667
  %v669 = vsub.f32 1.0, %v668
  %v670 = vmul.f32 %v667, %v669
  %v671 = vadd.f32 %v667, %v670
  %vm672 = vweird.f32 %v469
  %vm673 = vweird.f32 %v667
  %vm674 = vmor %vm672, %vm673
  %v675 = vsel %vm674, %v667, %v671
  %v676 = vand.u32 2147483647, %v469
  %vm677 = vcmp.eq.f32.partialorder %v676, 8.507059e+37
  %v678 = vand.u32 %v469, 2147483648
  %v679 = vor.u32 1.1754944e-38, %v678
  %v680 = vsel %vm677, %v679, %v675
  %v681 = vmul.f32 %v160, %v680
  %v682 = vrcp.pop %v470
  %v683 = vmul.f32 %v470, %v682
  %v684 = vsub.f32 1.0, %v683
  %v685 = vmul.f32 %v682, %v684
  %v686 = vadd.f32 %v682, %v685
  %vm687 = vweird.f32 %v470
  %vm688 = vweird.f32 %v682
  %vm689 = vmor %vm687, %vm688
  %v690 = vsel %vm689, %v682, %v686
  %v691 = vand.u32 2147483647, %v470
  %vm692 = vcmp.eq.f32.partialorder %v691, 8.507059e+37
  %v693 = vand.u32 %v470, 2147483648
  %v694 = vor.u32 1.1754944e-38, %v693
  %v695 = vsel %vm692, %v694, %v690
  %v696 = vmul.f32 %v163, %v695
  %v697 = vrcp.pop %v471
  %v698 = vmul.f32 %v471, %v697
  %v699 = vsub.f32 1.0, %v698
  %v700 = vmul.f32 %v697, %v699
  %v701 = vadd.f32 %v697, %v700
  %vm702 = vweird.f32 %v471
  %vm703 = vweird.f32 %v697
  %vm704 = vmor %vm702, %vm703
  %v705 = vsel %vm704, %v697, %v701
  %v706 = vand.u32 2147483647, %v471
  %vm707 = vcmp.eq.f32.partialorder %v706, 8.507059e+37
  %v708 = vand.u32 %v471, 2147483648
  %v709 = vor.u32 1.1754944e-38, %v708
  %v710 = vsel %vm707, %v709, %v705
  %v711 = vmul.f32 %v165, %v710
  %v712 = vmul.f32 %v486, 5.656854
  %v713 = vmul.f32 %v501, 5.656854
  %v714 = vmul.f32 %v516, 5.656854
  %v715 = vmul.f32 %v531, 5.656854
  %v716 = vmul.f32 %v546, 5.656854
  %v717 = vmul.f32 %v561, 5.656854
  %v718 = vmul.f32 %v576, 5.656854
  %v719 = vmul.f32 %v591, 5.656854
  %v720 = vmul.f32 %v606, 5.656854
  %v721 = vmul.f32 %v621, 5.656854
  %v722 = vmul.f32 %v636, 5.656854
  %v723 = vmul.f32 %v651, 5.656854
  %v724 = vmul.f32 %v666, 5.656854
  %v725 = vmul.f32 %v681, 5.656854
  %v726 = vmul.f32 %v696, 5.656854
  %v727 = vmul.f32 %v711, 5.656854
  %v728 = vpack.c.bf16 %v712, %v712
  %v729 = vpack.c.bf16 %v713, %v713
  %v730 = vpack.c.bf16 %v714, %v714
  %v731 = vpack.c.bf16 %v715, %v715
  %v732 = vpack.c.bf16 %v716, %v716
  %v733 = vpack.c.bf16 %v717, %v717
  %v734 = vpack.c.bf16 %v718, %v718
  %v735 = vpack.c.bf16 %v719, %v719
  %v736 = vpack.c.bf16 %v720, %v720
  %v737 = vpack.c.bf16 %v721, %v721
  %v738 = vpack.c.bf16 %v722, %v722
  %v739 = vpack.c.bf16 %v723, %v723
  %v740 = vpack.c.bf16 %v724, %v724
  %v741 = vpack.c.bf16 %v725, %v725
  %v742 = vpack.c.bf16 %v726, %v726
  %v743 = vpack.c.bf16 %v727, %v727
  %744 = vst.msk [vmem:[%s4] sm:$0xf] %vm183, %v728
  %745 = vst.msk [vmem:[%s4 + $0x4] sm:$0xf] %vm183, %v729
  %746 = vst.msk [vmem:[%s4 + $0x8] sm:$0xf] %vm183, %v730
  %747 = vst.msk [vmem:[%s4 + $0xc] sm:$0xf] %vm183, %v731
  %748 = vst.msk [vmem:[%s4 + $0x10] sm:$0xf] %vm183, %v732
  %749 = vst.msk [vmem:[%s4 + $0x14] sm:$0xf] %vm183, %v733
  %750 = vst.msk [vmem:[%s4 + $0x18] sm:$0xf] %vm183, %v734
  %751 = vst.msk [vmem:[%s4 + $0x1c] sm:$0xf] %vm183, %v735
  %752 = vst.msk [vmem:[%s4 + $0x20] sm:$0xf] %vm183, %v736
  %753 = vst.msk [vmem:[%s4 + $0x24] sm:$0xf] %vm183, %v737
  %754 = vst.msk [vmem:[%s4 + $0x28] sm:$0xf] %vm183, %v738
  %755 = vst.msk [vmem:[%s4 + $0x2c] sm:$0xf] %vm183, %v739
  %756 = vst.msk [vmem:[%s4 + $0x30] sm:$0xf] %vm183, %v740
  %757 = vst.msk [vmem:[%s4 + $0x34] sm:$0xf] %vm183, %v741
  %758 = vst.msk [vmem:[%s4 + $0x38] sm:$0xf] %vm183, %v742
  %759 = vst.msk [vmem:[%s4 + $0x3c] sm:$0xf] %vm183, %v743
  // Predicated region
  $region14: #{neckformer_forward.6} parent=0 // pred_check
    _
  $region15: #{neckformer_forward.6} parent=0 // pred_check_branch
    %761 = sbr.rel (0) target = $region17
  $region16: #{neckformer_forward.6} parent=0 // pred_region
    _
  $region17: #{neckformer_forward.6} parent=0 // pred_fallthru
    _
  // Predicated region
  $region18: #{neckformer_forward.6} parent=0 // pred_check
    _
  $region19: #{neckformer_forward.6} parent=0 // pred_check_branch
    %763 = sbr.rel (0) target = $region21
  $region20: #{neckformer_forward.6} parent=0 // pred_region
    _
  $region21: #{neckformer_forward.6} parent=0 // pred_fallthru
    _
  // Predicated region
  $region22: #{neckformer_forward.6} parent=0 // pred_check
    _
  $region23: #{neckformer_forward.6} parent=0 // pred_check_branch
    %765 = sbr.rel (0) target = $region25
  $region24: #{neckformer_forward.6} parent=0 // pred_region
    _
  $region25: #{neckformer_forward.6} parent=0 // pred_fallthru
    _
  // Predicated region
  $region26: #{neckformer_forward.6} parent=0 // pred_check
    _
  $region27: #{neckformer_forward.6} parent=0 // pred_check_branch
    %767 = sbr.rel (0) target = $region29
  $region28: #{neckformer_forward.6} parent=0 // pred_region
    _
  $region29: #{neckformer_forward.6} parent=0 // pred_fallthru
    _

// kernel: neckformer_forward.7
$region0: #{neckformer_forward.7}
  #allocation0 [shape = 'u32[]', space=smem, size = 0x4, offset = 0x4, fixed_abs, tag = 'smem constant byte address 0x4 - core index']
  #allocation1 [shape = 'u32[72,128]{1,0:T(1,128)}', space=vmem, size = 0x9000, scoped, tag = 'internal scratch']
  %s0 = inlined_call_operand.vmem [shape: bf16[64,64], index: 0, kind: input, shape index: {}]
  %s1 = inlined_call_operand.vmem [shape: bf16[64,64], index: 1, kind: input, shape index: {}]
  %s2 = inlined_call_operand.vmem [shape: bf16[64,64], index: 2, kind: output, shape index: {}]
  %s3 = sld [smem:[#allocation0]]
  $region18: #{neckformer_forward.7} parent=0
    _
  %s5 = ssub.s32 1, %s3
  %s6 = scalar_select 0, %s5, %s3
  // Predicated region
  $region2: #{neckformer_forward.7} parent=0 // pred_check
    _
  $region3: #{neckformer_forward.7} parent=0 // pred_check_branch
    %8 = sbr.rel (0) target = $region5
  $region4: #{neckformer_forward.7} parent=0 // pred_region
    _
  $region5: #{neckformer_forward.7} parent=0 // pred_fallthru
    _
  // Predicated region
  $region6: #{neckformer_forward.7} parent=0 // pred_check
    _
  $region7: #{neckformer_forward.7} parent=0 // pred_check_branch
    %10 = sbr.rel (0) target = $region9
  $region8: #{neckformer_forward.7} parent=0 // pred_region
    _
  $region9: #{neckformer_forward.7} parent=0 // pred_fallthru
    _
  %v12 = vld [vmem:[%s0] sm:$0xf]
  %v13 = vld [vmem:[%s0 + $0x4] sm:$0xf]
  %v14 = vld [vmem:[%s0 + $0x8] sm:$0xf]
  %v15 = vld [vmem:[%s0 + $0xc] sm:$0xf]
  %v16 = vld [vmem:[%s0 + $0x10] sm:$0xf]
  %v17 = vld [vmem:[%s0 + $0x14] sm:$0xf]
  %v18 = vld [vmem:[%s0 + $0x18] sm:$0xf]
  %v19 = vld [vmem:[%s0 + $0x1c] sm:$0xf]
  %v20 = vld [vmem:[%s1] sm:$0xf]
  %v21 = vld [vmem:[%s1 + $0x4] sm:$0xf]
  %v22 = vld [vmem:[%s1 + $0x8] sm:$0xf]
  %v23 = vld [vmem:[%s1 + $0xc] sm:$0xf]
  %v24 = vld [vmem:[%s1 + $0x10] sm:$0xf]
  %v25 = vld [vmem:[%s1 + $0x14] sm:$0xf]
  %v26 = vld [vmem:[%s1 + $0x18] sm:$0xf]
  %v27 = vld [vmem:[%s1 + $0x1c] sm:$0xf]
  %v36 = vunpack.c.l.b16 %v12
  %v37 = vunpack.c.l.b16 %v13
  %v38 = vunpack.c.l.b16 %v14
  %v39 = vunpack.c.l.b16 %v15
  %v40 = vunpack.c.l.b16 %v16
  %v41 = vunpack.c.l.b16 %v17
  %v42 = vunpack.c.l.b16 %v18
  %v43 = vunpack.c.l.b16 %v19
  %v44 = vpack.c.b16 %v37, %v36
  %v45 = vpack.c.b16 %v39, %v38
  %v46 = vpack.c.b16 %v41, %v40
  %v47 = vpack.c.b16 %v43, %v42
  %v56 = vunpack.c.l.b16 %v20
  %v57 = vunpack.c.l.b16 %v21
  %v58 = vunpack.c.l.b16 %v22
  %v59 = vunpack.c.l.b16 %v23
  %v60 = vunpack.c.l.b16 %v24
  %v61 = vunpack.c.l.b16 %v25
  %v62 = vunpack.c.l.b16 %v26
  %v63 = vunpack.c.l.b16 %v27
  %v64 = vpack.c.b16 %v57, %v56
  %v65 = vpack.c.b16 %v59, %v58
  %v66 = vpack.c.b16 %v61, %v60
  %v67 = vpack.c.b16 %v63, %v62
  %vm72 = vcmask 523264
  %v74 = vsel %vm72, %v44, 0
  %v77 = vsel %vm72, %v45, 0
  %v80 = vsel %vm72, %v46, 0
  %v83 = vsel %vm72, %v47, 0
  %85 = vmatpush.bf16.msra.mxu0 0
  %86 = vmatpush.bf16.msra.mxu0 0
  %87 = vmatpush.bf16.msra.mxu0 0
  %88 = vmatpush.bf16.msra.mxu0 0
  %89 = vmatpush.bf16.msra.mxu0 %v67
  %90 = vmatpush.bf16.msra.mxu0 %v66
  %91 = vmatpush.bf16.msra.mxu0 %v65
  %92 = vmatpush.bf16.msra.mxu0 %v64
  %93 = vmatmul.bf16.gmra.mxu0 %v74
  %v94 = vpop.f32.mrf.mxu0
  %v95 = vadd.f32 0.0, %v94
  %v96 = vpop.f32.mrf.mxu0
  %v97 = vadd.f32 0.0, %v96
  %98 = vmatmul.bf16.gmra.mxu0 %v77
  %v99 = vpop.f32.mrf.mxu0
  %v100 = vadd.f32 0.0, %v99
  %v101 = vpop.f32.mrf.mxu0
  %v102 = vadd.f32 0.0, %v101
  %103 = vmatmul.bf16.gmra.mxu0 %v80
  %v104 = vpop.f32.mrf.mxu0
  %v105 = vadd.f32 0.0, %v104
  %v106 = vpop.f32.mrf.mxu0
  %v107 = vadd.f32 0.0, %v106
  %108 = vmatmul.bf16.gmra.mxu0 %v83
  %v109 = vpop.f32.mrf.mxu0
  %v110 = vadd.f32 0.0, %v109
  %v111 = vpop.f32.mrf.mxu0
  %v112 = vadd.f32 0.0, %v111
  %113 = vdwg.mxu0
  %v114 = vpack.c.bf16 %v95, %v95
  %v115 = vpack.c.bf16 %v97, %v97
  %v116 = vpack.c.bf16 %v100, %v100
  %v117 = vpack.c.bf16 %v102, %v102
  %v118 = vpack.c.bf16 %v105, %v105
  %v119 = vpack.c.bf16 %v107, %v107
  %v120 = vpack.c.bf16 %v110, %v110
  %v121 = vpack.c.bf16 %v112, %v112
  %vm122 = vcmask 519168
  %123 = vst.msk [vmem:[%s2] sm:$0xf] %vm122, %v114
  %124 = vst.msk [vmem:[%s2 + $0x4] sm:$0xf] %vm122, %v115
  %125 = vst.msk [vmem:[%s2 + $0x8] sm:$0xf] %vm122, %v116
  %126 = vst.msk [vmem:[%s2 + $0xc] sm:$0xf] %vm122, %v117
  %127 = vst.msk [vmem:[%s2 + $0x10] sm:$0xf] %vm122, %v118
  %128 = vst.msk [vmem:[%s2 + $0x14] sm:$0xf] %vm122, %v119
  %129 = vst.msk [vmem:[%s2 + $0x18] sm:$0xf] %vm122, %v120
  %130 = vst.msk [vmem:[%s2 + $0x1c] sm:$0xf] %vm122, %v121
  // Predicated region
  $region10: #{neckformer_forward.7} parent=0 // pred_check
    _
  $region11: #{neckformer_forward.7} parent=0 // pred_check_branch
    %132 = sbr.rel (0) target = $region13
  $region12: #{neckformer_forward.7} parent=0 // pred_region
    _
  $region13: #{neckformer_forward.7} parent=0 // pred_fallthru
    _
  // Predicated region
  $region14: #{neckformer_forward.7} parent=0 // pred_check
    _
  $region15: #{neckformer_forward.7} parent=0 // pred_check_branch
    %134 = sbr.rel (0) target = $region17
  $region16: #{neckformer_forward.7} parent=0 // pred_region
    _
  $region17: #{neckformer_forward.7} parent=0 // pred_fallthru
    _

// kernel: neckformer_forward.8
$region0: #{neckformer_forward.8}
  #allocation0 [shape = 'u32[]', space=smem, size = 0x4, offset = 0x4, fixed_abs, tag = 'smem constant byte address 0x4 - core index']
  #allocation1 [shape = 'u32[72,128]{1,0:T(1,128)}', space=vmem, size = 0x9000, scoped, tag = 'internal scratch']
  %s0 = inlined_call_operand.vmem [shape: bf16[128,32], index: 0, kind: input, shape index: {}]
  %s1 = inlined_call_operand.vmem [shape: bf16[32,32], index: 1, kind: input, shape index: {}]
  %s2 = inlined_call_operand.vmem [shape: bf16[128,32], index: 2, kind: output, shape index: {}]
  %s3 = sld [smem:[#allocation0]]
  $region18: #{neckformer_forward.8} parent=0
    _
  %s5 = ssub.s32 1, %s3
  %s6 = scalar_select 0, %s5, %s3
  // Predicated region
  $region2: #{neckformer_forward.8} parent=0 // pred_check
    _
  $region3: #{neckformer_forward.8} parent=0 // pred_check_branch
    %8 = sbr.rel (0) target = $region5
  $region4: #{neckformer_forward.8} parent=0 // pred_region
    _
  $region5: #{neckformer_forward.8} parent=0 // pred_fallthru
    _
  // Predicated region
  $region6: #{neckformer_forward.8} parent=0 // pred_check
    _
  $region7: #{neckformer_forward.8} parent=0 // pred_check_branch
    %10 = sbr.rel (0) target = $region9
  $region8: #{neckformer_forward.8} parent=0 // pred_region
    _
  $region9: #{neckformer_forward.8} parent=0 // pred_fallthru
    _
  %v12 = vld [vmem:[%s0] sm:$0xf]
  %v13 = vld [vmem:[%s0 + $0x4] sm:$0xf]
  %v14 = vld [vmem:[%s0 + $0x8] sm:$0xf]
  %v15 = vld [vmem:[%s0 + $0xc] sm:$0xf]
  %v16 = vld [vmem:[%s0 + $0x10] sm:$0xf]
  %v17 = vld [vmem:[%s0 + $0x14] sm:$0xf]
  %v18 = vld [vmem:[%s0 + $0x18] sm:$0xf]
  %v19 = vld [vmem:[%s0 + $0x1c] sm:$0xf]
  %v20 = vld [vmem:[%s0 + $0x20] sm:$0xf]
  %v21 = vld [vmem:[%s0 + $0x24] sm:$0xf]
  %v22 = vld [vmem:[%s0 + $0x28] sm:$0xf]
  %v23 = vld [vmem:[%s0 + $0x2c] sm:$0xf]
  %v24 = vld [vmem:[%s0 + $0x30] sm:$0xf]
  %v25 = vld [vmem:[%s0 + $0x34] sm:$0xf]
  %v26 = vld [vmem:[%s0 + $0x38] sm:$0xf]
  %v27 = vld [vmem:[%s0 + $0x3c] sm:$0xf]
  %v28 = vld [vmem:[%s1] sm:$0xf]
  %v29 = vld [vmem:[%s1 + $0x4] sm:$0xf]
  %v30 = vld [vmem:[%s1 + $0x8] sm:$0xf]
  %v31 = vld [vmem:[%s1 + $0xc] sm:$0xf]
  %v48 = vunpack.c.l.b16 %v12
  %v49 = vunpack.c.l.b16 %v13
  %v50 = vunpack.c.l.b16 %v14
  %v51 = vunpack.c.l.b16 %v15
  %v52 = vunpack.c.l.b16 %v16
  %v53 = vunpack.c.l.b16 %v17
  %v54 = vunpack.c.l.b16 %v18
  %v55 = vunpack.c.l.b16 %v19
  %v56 = vunpack.c.l.b16 %v20
  %v57 = vunpack.c.l.b16 %v21
  %v58 = vunpack.c.l.b16 %v22
  %v59 = vunpack.c.l.b16 %v23
  %v60 = vunpack.c.l.b16 %v24
  %v61 = vunpack.c.l.b16 %v25
  %v62 = vunpack.c.l.b16 %v26
  %v63 = vunpack.c.l.b16 %v27
  %v64 = vpack.c.b16 %v49, %v48
  %v65 = vpack.c.b16 %v51, %v50
  %v66 = vpack.c.b16 %v53, %v52
  %v67 = vpack.c.b16 %v55, %v54
  %v68 = vpack.c.b16 %v57, %v56
  %v69 = vpack.c.b16 %v59, %v58
  %v70 = vpack.c.b16 %v61, %v60
  %v71 = vpack.c.b16 %v63, %v62
  %v76 = vunpack.c.l.b16 %v28
  %v77 = vunpack.c.l.b16 %v29
  %v78 = vunpack.c.l.b16 %v30
  %v79 = vunpack.c.l.b16 %v31
  %v80 = vpack.c.b16 %v77, %v76
  %v81 = vpack.c.b16 %v79, %v78
  %vm84 = vcmask 261120
  %v86 = vsel %vm84, %v64, 0
  %v89 = vsel %vm84, %v65, 0
  %v92 = vsel %vm84, %v66, 0
  %v95 = vsel %vm84, %v67, 0
  %v98 = vsel %vm84, %v68, 0
  %v101 = vsel %vm84, %v69, 0
  %v104 = vsel %vm84, %v70, 0
  %v107 = vsel %vm84, %v71, 0
  %109 = vmatpush.bf16.msra.mxu0 0
  %110 = vmatpush.bf16.msra.mxu0 0
  %111 = vmatpush.bf16.msra.mxu0 0
  %112 = vmatpush.bf16.msra.mxu0 0
  %113 = vmatpush.bf16.msra.mxu0 0
  %114 = vmatpush.bf16.msra.mxu0 0
  %115 = vmatpush.bf16.msra.mxu0 %v81
  %116 = vmatpush.bf16.msra.mxu0 %v80
  %117 = vmatmul.bf16.gmra.mxu0 %v86
  %v118 = vpop.f32.mrf.mxu0
  %v119 = vadd.f32 0.0, %v118
  %v120 = vpop.f32.mrf.mxu0
  %v121 = vadd.f32 0.0, %v120
  %122 = vmatmul.bf16.gmra.mxu0 %v89
  %v123 = vpop.f32.mrf.mxu0
  %v124 = vadd.f32 0.0, %v123
  %v125 = vpop.f32.mrf.mxu0
  %v126 = vadd.f32 0.0, %v125
  %127 = vmatmul.bf16.gmra.mxu0 %v92
  %v128 = vpop.f32.mrf.mxu0
  %v129 = vadd.f32 0.0, %v128
  %v130 = vpop.f32.mrf.mxu0
  %v131 = vadd.f32 0.0, %v130
  %132 = vmatmul.bf16.gmra.mxu0 %v95
  %v133 = vpop.f32.mrf.mxu0
  %v134 = vadd.f32 0.0, %v133
  %v135 = vpop.f32.mrf.mxu0
  %v136 = vadd.f32 0.0, %v135
  %137 = vmatmul.bf16.gmra.mxu0 %v98
  %v138 = vpop.f32.mrf.mxu0
  %v139 = vadd.f32 0.0, %v138
  %v140 = vpop.f32.mrf.mxu0
  %v141 = vadd.f32 0.0, %v140
  %142 = vmatmul.bf16.gmra.mxu0 %v101
  %v143 = vpop.f32.mrf.mxu0
  %v144 = vadd.f32 0.0, %v143
  %v145 = vpop.f32.mrf.mxu0
  %v146 = vadd.f32 0.0, %v145
  %147 = vmatmul.bf16.gmra.mxu0 %v104
  %v148 = vpop.f32.mrf.mxu0
  %v149 = vadd.f32 0.0, %v148
  %v150 = vpop.f32.mrf.mxu0
  %v151 = vadd.f32 0.0, %v150
  %152 = vmatmul.bf16.gmra.mxu0 %v107
  %v153 = vpop.f32.mrf.mxu0
  %v154 = vadd.f32 0.0, %v153
  %v155 = vpop.f32.mrf.mxu0
  %v156 = vadd.f32 0.0, %v155
  %157 = vdwg.mxu0
  %v158 = vpack.c.bf16 %v119, %v119
  %v159 = vpack.c.bf16 %v121, %v121
  %v160 = vpack.c.bf16 %v124, %v124
  %v161 = vpack.c.bf16 %v126, %v126
  %v162 = vpack.c.bf16 %v129, %v129
  %v163 = vpack.c.bf16 %v131, %v131
  %v164 = vpack.c.bf16 %v134, %v134
  %v165 = vpack.c.bf16 %v136, %v136
  %v166 = vpack.c.bf16 %v139, %v139
  %v167 = vpack.c.bf16 %v141, %v141
  %v168 = vpack.c.bf16 %v144, %v144
  %v169 = vpack.c.bf16 %v146, %v146
  %v170 = vpack.c.bf16 %v149, %v149
  %v171 = vpack.c.bf16 %v151, %v151
  %v172 = vpack.c.bf16 %v154, %v154
  %v173 = vpack.c.bf16 %v156, %v156
  %vm174 = vcmask 257024
  %175 = vst.msk [vmem:[%s2] sm:$0xf] %vm174, %v158
  %176 = vst.msk [vmem:[%s2 + $0x4] sm:$0xf] %vm174, %v159
  %177 = vst.msk [vmem:[%s2 + $0x8] sm:$0xf] %vm174, %v160
  %178 = vst.msk [vmem:[%s2 + $0xc] sm:$0xf] %vm174, %v161
  %179 = vst.msk [vmem:[%s2 + $0x10] sm:$0xf] %vm174, %v162
  %180 = vst.msk [vmem:[%s2 + $0x14] sm:$0xf] %vm174, %v163
  %181 = vst.msk [vmem:[%s2 + $0x18] sm:$0xf] %vm174, %v164
  %182 = vst.msk [vmem:[%s2 + $0x1c] sm:$0xf] %vm174, %v165
  %183 = vst.msk [vmem:[%s2 + $0x20] sm:$0xf] %vm174, %v166
  %184 = vst.msk [vmem:[%s2 + $0x24] sm:$0xf] %vm174, %v167
  %185 = vst.msk [vmem:[%s2 + $0x28] sm:$0xf] %vm174, %v168
  %186 = vst.msk [vmem:[%s2 + $0x2c] sm:$0xf] %vm174, %v169
  %187 = vst.msk [vmem:[%s2 + $0x30] sm:$0xf] %vm174, %v170
  %188 = vst.msk [vmem:[%s2 + $0x34] sm:$0xf] %vm174, %v171
  %189 = vst.msk [vmem:[%s2 + $0x38] sm:$0xf] %vm174, %v172
  %190 = vst.msk [vmem:[%s2 + $0x3c] sm:$0xf] %vm174, %v173
  // Predicated region
  $region10: #{neckformer_forward.8} parent=0 // pred_check
    _
  $region11: #{neckformer_forward.8} parent=0 // pred_check_branch
    %192 = sbr.rel (0) target = $region13
  $region12: #{neckformer_forward.8} parent=0 // pred_region
    _
  $region13: #{neckformer_forward.8} parent=0 // pred_fallthru
    _
  // Predicated region
  $region14: #{neckformer_forward.8} parent=0 // pred_check
    _
  $region15: #{neckformer_forward.8} parent=0 // pred_check_branch
    %194 = sbr.rel (0) target = $region17
  $region16: #{neckformer_forward.8} parent=0 // pred_region
    _
  $region17: #{neckformer_forward.8} parent=0 // pred_fallthru
    _

// kernel: neckformer_forward.10
$region0: #{neckformer_forward.10}
  #allocation0 [shape = 'u32[]', space=smem, size = 0x4, offset = 0x4, fixed_abs, tag = 'smem constant byte address 0x4 - core index']
  #allocation1 [shape = 'u32[72,128]{1,0:T(1,128)}', space=vmem, size = 0x9000, scoped, tag = 'internal scratch']
  %s0 = inlined_call_operand.vmem [shape: bf16[128,32], index: 0, kind: input, shape index: {}]
  %s1 = inlined_call_operand.vmem [shape: bf16[128,32], index: 1, kind: input, shape index: {}]
  %s2 = inlined_call_operand.vmem [shape: bf16[32,32], index: 2, kind: input, shape index: {}]
  %s3 = inlined_call_operand.vmem [shape: bf16[32,128], index: 3, kind: input, shape index: {}]
  %s4 = inlined_call_operand.vmem [shape: bf16[128,32], index: 4, kind: input, shape index: {}]
  %s5 = inlined_call_operand.vmem [shape: bf16[128,32], index: 5, kind: output, shape index: {}]
  %s6 = sld [smem:[#allocation0]]
  $region30: #{neckformer_forward.10} parent=0
    _
  %s8 = ssub.s32 1, %s6
  %s9 = scalar_select 0, %s8, %s6
  // Predicated region
  $region2: #{neckformer_forward.10} parent=0 // pred_check
    _
  $region3: #{neckformer_forward.10} parent=0 // pred_check_branch
    %11 = sbr.rel (0) target = $region5
  $region4: #{neckformer_forward.10} parent=0 // pred_region
    _
  $region5: #{neckformer_forward.10} parent=0 // pred_fallthru
    _
  // Predicated region
  $region6: #{neckformer_forward.10} parent=0 // pred_check
    _
  $region7: #{neckformer_forward.10} parent=0 // pred_check_branch
    %13 = sbr.rel (0) target = $region9
  $region8: #{neckformer_forward.10} parent=0 // pred_region
    _
  $region9: #{neckformer_forward.10} parent=0 // pred_fallthru
    _
  // Predicated region
  $region10: #{neckformer_forward.10} parent=0 // pred_check
    _
  $region11: #{neckformer_forward.10} parent=0 // pred_check_branch
    %15 = sbr.rel (0) target = $region13
  $region12: #{neckformer_forward.10} parent=0 // pred_region
    _
  $region13: #{neckformer_forward.10} parent=0 // pred_fallthru
    _
  // Predicated region
  $region14: #{neckformer_forward.10} parent=0 // pred_check
    _
  $region15: #{neckformer_forward.10} parent=0 // pred_check_branch
    %17 = sbr.rel (0) target = $region17
  $region16: #{neckformer_forward.10} parent=0 // pred_region
    _
  $region17: #{neckformer_forward.10} parent=0 // pred_fallthru
    _
  // Predicated region
  $region18: #{neckformer_forward.10} parent=0 // pred_check
    _
  $region19: #{neckformer_forward.10} parent=0 // pred_check_branch
    %19 = sbr.rel (0) target = $region21
  $region20: #{neckformer_forward.10} parent=0 // pred_region
    _
  $region21: #{neckformer_forward.10} parent=0 // pred_fallthru
    _
  %v21 = vld [vmem:[%s0] sm:$0xf]
  %v22 = vld [vmem:[%s0 + $0x4] sm:$0xf]
  %v23 = vld [vmem:[%s0 + $0x8] sm:$0xf]
  %v24 = vld [vmem:[%s0 + $0xc] sm:$0xf]
  %v25 = vld [vmem:[%s0 + $0x10] sm:$0xf]
  %v26 = vld [vmem:[%s0 + $0x14] sm:$0xf]
  %v27 = vld [vmem:[%s0 + $0x18] sm:$0xf]
  %v28 = vld [vmem:[%s0 + $0x1c] sm:$0xf]
  %v29 = vld [vmem:[%s0 + $0x20] sm:$0xf]
  %v30 = vld [vmem:[%s0 + $0x24] sm:$0xf]
  %v31 = vld [vmem:[%s0 + $0x28] sm:$0xf]
  %v32 = vld [vmem:[%s0 + $0x2c] sm:$0xf]
  %v33 = vld [vmem:[%s0 + $0x30] sm:$0xf]
  %v34 = vld [vmem:[%s0 + $0x34] sm:$0xf]
  %v35 = vld [vmem:[%s0 + $0x38] sm:$0xf]
  %v36 = vld [vmem:[%s0 + $0x3c] sm:$0xf]
  %v37 = vld [vmem:[%s2] sm:$0xf]
  %v38 = vld [vmem:[%s2 + $0x4] sm:$0xf]
  %v39 = vld [vmem:[%s2 + $0x8] sm:$0xf]
  %v40 = vld [vmem:[%s2 + $0xc] sm:$0xf]
  %v41 = vld [vmem:[%s1] sm:$0xf]
  %v42 = vld [vmem:[%s1 + $0x4] sm:$0xf]
  %v43 = vld [vmem:[%s1 + $0x8] sm:$0xf]
  %v44 = vld [vmem:[%s1 + $0xc] sm:$0xf]
  %v45 = vld [vmem:[%s1 + $0x10] sm:$0xf]
  %v46 = vld [vmem:[%s1 + $0x14] sm:$0xf]
  %v47 = vld [vmem:[%s1 + $0x18] sm:$0xf]
  %v48 = vld [vmem:[%s1 + $0x1c] sm:$0xf]
  %v49 = vld [vmem:[%s1 + $0x20] sm:$0xf]
  %v50 = vld [vmem:[%s1 + $0x24] sm:$0xf]
  %v51 = vld [vmem:[%s1 + $0x28] sm:$0xf]
  %v52 = vld [vmem:[%s1 + $0x2c] sm:$0xf]
  %v53 = vld [vmem:[%s1 + $0x30] sm:$0xf]
  %v54 = vld [vmem:[%s1 + $0x34] sm:$0xf]
  %v55 = vld [vmem:[%s1 + $0x38] sm:$0xf]
  %v56 = vld [vmem:[%s1 + $0x3c] sm:$0xf]
  %v57 = vunpack.c.l.bf16 %v41
  %v58 = vunpack.c.l.bf16 %v42
  %v59 = vunpack.c.l.bf16 %v43
  %v60 = vunpack.c.l.bf16 %v44
  %v61 = vunpack.c.l.bf16 %v45
  %v62 = vunpack.c.l.bf16 %v46
  %v63 = vunpack.c.l.bf16 %v47
  %v64 = vunpack.c.l.bf16 %v48
  %v65 = vunpack.c.l.bf16 %v49
  %v66 = vunpack.c.l.bf16 %v50
  %v67 = vunpack.c.l.bf16 %v51
  %v68 = vunpack.c.l.bf16 %v52
  %v69 = vunpack.c.l.bf16 %v53
  %v70 = vunpack.c.l.bf16 %v54
  %v71 = vunpack.c.l.bf16 %v55
  %v72 = vunpack.c.l.bf16 %v56
  %v89 = vunpack.c.l.b16 %v21
  %v90 = vunpack.c.l.b16 %v22
  %v91 = vunpack.c.l.b16 %v23
  %v92 = vunpack.c.l.b16 %v24
  %v93 = vunpack.c.l.b16 %v25
  %v94 = vunpack.c.l.b16 %v26
  %v95 = vunpack.c.l.b16 %v27
  %v96 = vunpack.c.l.b16 %v28
  %v97 = vunpack.c.l.b16 %v29
  %v98 = vunpack.c.l.b16 %v30
  %v99 = vunpack.c.l.b16 %v31
  %v100 = vunpack.c.l.b16 %v32
  %v101 = vunpack.c.l.b16 %v33
  %v102 = vunpack.c.l.b16 %v34
  %v103 = vunpack.c.l.b16 %v35
  %v104 = vunpack.c.l.b16 %v36
  %v105 = vpack.c.b16 %v90, %v89
  %v106 = vpack.c.b16 %v92, %v91
  %v107 = vpack.c.b16 %v94, %v93
  %v108 = vpack.c.b16 %v96, %v95
  %v109 = vpack.c.b16 %v98, %v97
  %v110 = vpack.c.b16 %v100, %v99
  %v111 = vpack.c.b16 %v102, %v101
  %v112 = vpack.c.b16 %v104, %v103
  %v117 = vunpack.c.l.b16 %v37
  %v118 = vunpack.c.l.b16 %v38
  %v119 = vunpack.c.l.b16 %v39
  %v120 = vunpack.c.l.b16 %v40
  %v121 = vpack.c.b16 %v118, %v117
  %v122 = vpack.c.b16 %v120, %v119
  %vm125 = vcmask 261120
  %v127 = vsel %vm125, %v105, 0
  %v130 = vsel %vm125, %v106, 0
  %v133 = vsel %vm125, %v107, 0
  %v136 = vsel %vm125, %v108, 0
  %v139 = vsel %vm125, %v109, 0
  %v142 = vsel %vm125, %v110, 0
  %v145 = vsel %vm125, %v111, 0
  %v148 = vsel %vm125, %v112, 0
  %150 = vmatpush.bf16.msra.mxu0 0
  %151 = vmatpush.bf16.msra.mxu0 0
  %152 = vmatpush.bf16.msra.mxu0 0
  %153 = vmatpush.bf16.msra.mxu0 0
  %154 = vmatpush.bf16.msra.mxu0 0
  %155 = vmatpush.bf16.msra.mxu0 0
  %156 = vmatpush.bf16.msra.mxu0 %v122
  %157 = vmatpush.bf16.msra.mxu0 %v121
  %158 = vmatmul.bf16.gmra.mxu0 %v127
  %v159 = vpop.f32.mrf.mxu0
  %v160 = vadd.f32 %v57, %v159
  %v161 = vpop.f32.mrf.mxu0
  %v162 = vadd.f32 %v58, %v161
  %163 = vmatmul.bf16.gmra.mxu0 %v130
  %v164 = vpop.f32.mrf.mxu0
  %v165 = vadd.f32 %v59, %v164
  %v166 = vpop.f32.mrf.mxu0
  %v167 = vadd.f32 %v60, %v166
  %168 = vmatmul.bf16.gmra.mxu0 %v133
  %v169 = vpop.f32.mrf.mxu0
  %v170 = vadd.f32 %v61, %v169
  %v171 = vpop.f32.mrf.mxu0
  %v172 = vadd.f32 %v62, %v171
  %173 = vmatmul.bf16.gmra.mxu0 %v136
  %v174 = vpop.f32.mrf.mxu0
  %v175 = vadd.f32 %v63, %v174
  %v176 = vpop.f32.mrf.mxu0
  %v177 = vadd.f32 %v64, %v176
  %178 = vmatmul.bf16.gmra.mxu0 %v139
  %v179 = vpop.f32.mrf.mxu0
  %v180 = vadd.f32 %v65, %v179
  %v181 = vpop.f32.mrf.mxu0
  %v182 = vadd.f32 %v66, %v181
  %183 = vmatmul.bf16.gmra.mxu0 %v142
  %v184 = vpop.f32.mrf.mxu0
  %v185 = vadd.f32 %v67, %v184
  %v186 = vpop.f32.mrf.mxu0
  %v187 = vadd.f32 %v68, %v186
  %188 = vmatmul.bf16.gmra.mxu0 %v145
  %v189 = vpop.f32.mrf.mxu0
  %v190 = vadd.f32 %v69, %v189
  %v191 = vpop.f32.mrf.mxu0
  %v192 = vadd.f32 %v70, %v191
  %193 = vmatmul.bf16.gmra.mxu0 %v148
  %v194 = vpop.f32.mrf.mxu0
  %v195 = vadd.f32 %v71, %v194
  %v196 = vpop.f32.mrf.mxu0
  %v197 = vadd.f32 %v72, %v196
  %198 = vdwg.mxu0
  %v199 = vmul.f32 %v160, %v160
  %v200 = vmul.f32 %v162, %v162
  %v201 = vmul.f32 %v165, %v165
  %v202 = vmul.f32 %v167, %v167
  %v203 = vmul.f32 %v170, %v170
  %v204 = vmul.f32 %v172, %v172
  %v205 = vmul.f32 %v175, %v175
  %v206 = vmul.f32 %v177, %v177
  %v207 = vmul.f32 %v180, %v180
  %v208 = vmul.f32 %v182, %v182
  %v209 = vmul.f32 %v185, %v185
  %v210 = vmul.f32 %v187, %v187
  %v211 = vmul.f32 %v190, %v190
  %v212 = vmul.f32 %v192, %v192
  %v213 = vmul.f32 %v195, %v195
  %v214 = vmul.f32 %v197, %v197
  %v215 = vsel %vm125, %v199, 0.0
  %216 = vadd.xlane.f32.xlu0 %v215
  %v217 = vpop.xlane.xlu0 %216
  %v218 = vsel %vm125, %v200, 0.0
  %219 = vadd.xlane.f32.xlu0 %v218
  %v220 = vpop.xlane.xlu0 %219
  %v221 = vsel %vm125, %v201, 0.0
  %222 = vadd.xlane.f32.xlu0 %v221
  %v223 = vpop.xlane.xlu0 %222
  %v224 = vsel %vm125, %v202, 0.0
  %225 = vadd.xlane.f32.xlu0 %v224
  %v226 = vpop.xlane.xlu0 %225
  %v227 = vsel %vm125, %v203, 0.0
  %228 = vadd.xlane.f32.xlu0 %v227
  %v229 = vpop.xlane.xlu0 %228
  %v230 = vsel %vm125, %v204, 0.0
  %231 = vadd.xlane.f32.xlu0 %v230
  %v232 = vpop.xlane.xlu0 %231
  %v233 = vsel %vm125, %v205, 0.0
  %234 = vadd.xlane.f32.xlu0 %v233
  %v235 = vpop.xlane.xlu0 %234
  %v236 = vsel %vm125, %v206, 0.0
  %237 = vadd.xlane.f32.xlu0 %v236
  %v238 = vpop.xlane.xlu0 %237
  %v239 = vsel %vm125, %v207, 0.0
  %240 = vadd.xlane.f32.xlu0 %v239
  %v241 = vpop.xlane.xlu0 %240
  %v242 = vsel %vm125, %v208, 0.0
  %243 = vadd.xlane.f32.xlu0 %v242
  %v244 = vpop.xlane.xlu0 %243
  %v245 = vsel %vm125, %v209, 0.0
  %246 = vadd.xlane.f32.xlu0 %v245
  %v247 = vpop.xlane.xlu0 %246
  %v248 = vsel %vm125, %v210, 0.0
  %249 = vadd.xlane.f32.xlu0 %v248
  %v250 = vpop.xlane.xlu0 %249
  %v251 = vsel %vm125, %v211, 0.0
  %252 = vadd.xlane.f32.xlu0 %v251
  %v253 = vpop.xlane.xlu0 %252
  %v254 = vsel %vm125, %v212, 0.0
  %255 = vadd.xlane.f32.xlu0 %v254
  %v256 = vpop.xlane.xlu0 %255
  %v257 = vsel %vm125, %v213, 0.0
  %258 = vadd.xlane.f32.xlu0 %v257
  %v259 = vpop.xlane.xlu0 %258
  %v260 = vsel %vm125, %v214, 0.0
  %261 = vadd.xlane.f32.xlu0 %v260
  %v262 = vpop.xlane.xlu0 %261
  %v263 = vrsqrt.pop %v217
  %v264 = vmul.f32 %v263, %v217
  %v265 = vmul.f32 %v264, %v263
  %v266 = vmul.f32 0.5, %v265
  %v267 = vsub.f32 1.5, %v266
  %v268 = vmul.f32 %v263, %v267
  %v269 = vmul.f32 %v217, %v268
  %vm270 = vcmp.eq.f32.partialorder %v217, inf
  %v271 = vsel %vm270, %v217, %v269
  %vm272 = vcmp.eq.f32.partialorder %v217, 0.0
  %v273 = vand.u32 %v217, 2147483648
  %v274 = vsel %vm272, %v273, %v271
  %v275 = vrsqrt.pop %v220
  %v276 = vmul.f32 %v275, %v220
  %v277 = vmul.f32 %v276, %v275
  %v278 = vmul.f32 0.5, %v277
  %v279 = vsub.f32 1.5, %v278
  %v280 = vmul.f32 %v275, %v279
  %v281 = vmul.f32 %v220, %v280
  %vm282 = vcmp.eq.f32.partialorder %v220, inf
  %v283 = vsel %vm282, %v220, %v281
  %vm284 = vcmp.eq.f32.partialorder %v220, 0.0
  %v285 = vand.u32 %v220, 2147483648
  %v286 = vsel %vm284, %v285, %v283
  %v287 = vrsqrt.pop %v223
  %v288 = vmul.f32 %v287, %v223
  %v289 = vmul.f32 %v288, %v287
  %v290 = vmul.f32 0.5, %v289
  %v291 = vsub.f32 1.5, %v290
  %v292 = vmul.f32 %v287, %v291
  %v293 = vmul.f32 %v223, %v292
  %vm294 = vcmp.eq.f32.partialorder %v223, inf
  %v295 = vsel %vm294, %v223, %v293
  %vm296 = vcmp.eq.f32.partialorder %v223, 0.0
  %v297 = vand.u32 %v223, 2147483648
  %v298 = vsel %vm296, %v297, %v295
  %v299 = vrsqrt.pop %v226
  %v300 = vmul.f32 %v299, %v226
  %v301 = vmul.f32 %v300, %v299
  %v302 = vmul.f32 0.5, %v301
  %v303 = vsub.f32 1.5, %v302
  %v304 = vmul.f32 %v299, %v303
  %v305 = vmul.f32 %v226, %v304
  %vm306 = vcmp.eq.f32.partialorder %v226, inf
  %v307 = vsel %vm306, %v226, %v305
  %vm308 = vcmp.eq.f32.partialorder %v226, 0.0
  %v309 = vand.u32 %v226, 2147483648
  %v310 = vsel %vm308, %v309, %v307
  %v311 = vrsqrt.pop %v229
  %v312 = vmul.f32 %v311, %v229
  %v313 = vmul.f32 %v312, %v311
  %v314 = vmul.f32 0.5, %v313
  %v315 = vsub.f32 1.5, %v314
  %v316 = vmul.f32 %v311, %v315
  %v317 = vmul.f32 %v229, %v316
  %vm318 = vcmp.eq.f32.partialorder %v229, inf
  %v319 = vsel %vm318, %v229, %v317
  %vm320 = vcmp.eq.f32.partialorder %v229, 0.0
  %v321 = vand.u32 %v229, 2147483648
  %v322 = vsel %vm320, %v321, %v319
  %v323 = vrsqrt.pop %v232
  %v324 = vmul.f32 %v323, %v232
  %v325 = vmul.f32 %v324, %v323
  %v326 = vmul.f32 0.5, %v325
  %v327 = vsub.f32 1.5, %v326
  %v328 = vmul.f32 %v323, %v327
  %v329 = vmul.f32 %v232, %v328
  %vm330 = vcmp.eq.f32.partialorder %v232, inf
  %v331 = vsel %vm330, %v232, %v329
  %vm332 = vcmp.eq.f32.partialorder %v232, 0.0
  %v333 = vand.u32 %v232, 2147483648
  %v334 = vsel %vm332, %v333, %v331
  %v335 = vrsqrt.pop %v235
  %v336 = vmul.f32 %v335, %v235
  %v337 = vmul.f32 %v336, %v335
  %v338 = vmul.f32 0.5, %v337
  %v339 = vsub.f32 1.5, %v338
  %v340 = vmul.f32 %v335, %v339
  %v341 = vmul.f32 %v235, %v340
  %vm342 = vcmp.eq.f32.partialorder %v235, inf
  %v343 = vsel %vm342, %v235, %v341
  %vm344 = vcmp.eq.f32.partialorder %v235, 0.0
  %v345 = vand.u32 %v235, 2147483648
  %v346 = vsel %vm344, %v345, %v343
  %v347 = vrsqrt.pop %v238
  %v348 = vmul.f32 %v347, %v238
  %v349 = vmul.f32 %v348, %v347
  %v350 = vmul.f32 0.5, %v349
  %v351 = vsub.f32 1.5, %v350
  %v352 = vmul.f32 %v347, %v351
  %v353 = vmul.f32 %v238, %v352
  %vm354 = vcmp.eq.f32.partialorder %v238, inf
  %v355 = vsel %vm354, %v238, %v353
  %vm356 = vcmp.eq.f32.partialorder %v238, 0.0
  %v357 = vand.u32 %v238, 2147483648
  %v358 = vsel %vm356, %v357, %v355
  %v359 = vrsqrt.pop %v241
  %v360 = vmul.f32 %v359, %v241
  %v361 = vmul.f32 %v360, %v359
  %v362 = vmul.f32 0.5, %v361
  %v363 = vsub.f32 1.5, %v362
  %v364 = vmul.f32 %v359, %v363
  %v365 = vmul.f32 %v241, %v364
  %vm366 = vcmp.eq.f32.partialorder %v241, inf
  %v367 = vsel %vm366, %v241, %v365
  %vm368 = vcmp.eq.f32.partialorder %v241, 0.0
  %v369 = vand.u32 %v241, 2147483648
  %v370 = vsel %vm368, %v369, %v367
  %v371 = vrsqrt.pop %v244
  %v372 = vmul.f32 %v371, %v244
  %v373 = vmul.f32 %v372, %v371
  %v374 = vmul.f32 0.5, %v373
  %v375 = vsub.f32 1.5, %v374
  %v376 = vmul.f32 %v371, %v375
  %v377 = vmul.f32 %v244, %v376
  %vm378 = vcmp.eq.f32.partialorder %v244, inf
  %v379 = vsel %vm378, %v244, %v377
  %vm380 = vcmp.eq.f32.partialorder %v244, 0.0
  %v381 = vand.u32 %v244, 2147483648
  %v382 = vsel %vm380, %v381, %v379
  %v383 = vrsqrt.pop %v247
  %v384 = vmul.f32 %v383, %v247
  %v385 = vmul.f32 %v384, %v383
  %v386 = vmul.f32 0.5, %v385
  %v387 = vsub.f32 1.5, %v386
  %v388 = vmul.f32 %v383, %v387
  %v389 = vmul.f32 %v247, %v388
  %vm390 = vcmp.eq.f32.partialorder %v247, inf
  %v391 = vsel %vm390, %v247, %v389
  %vm392 = vcmp.eq.f32.partialorder %v247, 0.0
  %v393 = vand.u32 %v247, 2147483648
  %v394 = vsel %vm392, %v393, %v391
  %v395 = vrsqrt.pop %v250
  %v396 = vmul.f32 %v395, %v250
  %v397 = vmul.f32 %v396, %v395
  %v398 = vmul.f32 0.5, %v397
  %v399 = vsub.f32 1.5, %v398
  %v400 = vmul.f32 %v395, %v399
  %v401 = vmul.f32 %v250, %v400
  %vm402 = vcmp.eq.f32.partialorder %v250, inf
  %v403 = vsel %vm402, %v250, %v401
  %vm404 = vcmp.eq.f32.partialorder %v250, 0.0
  %v405 = vand.u32 %v250, 2147483648
  %v406 = vsel %vm404, %v405, %v403
  %v407 = vrsqrt.pop %v253
  %v408 = vmul.f32 %v407, %v253
  %v409 = vmul.f32 %v408, %v407
  %v410 = vmul.f32 0.5, %v409
  %v411 = vsub.f32 1.5, %v410
  %v412 = vmul.f32 %v407, %v411
  %v413 = vmul.f32 %v253, %v412
  %vm414 = vcmp.eq.f32.partialorder %v253, inf
  %v415 = vsel %vm414, %v253, %v413
  %vm416 = vcmp.eq.f32.partialorder %v253, 0.0
  %v417 = vand.u32 %v253, 2147483648
  %v418 = vsel %vm416, %v417, %v415
  %v419 = vrsqrt.pop %v256
  %v420 = vmul.f32 %v419, %v256
  %v421 = vmul.f32 %v420, %v419
  %v422 = vmul.f32 0.5, %v421
  %v423 = vsub.f32 1.5, %v422
  %v424 = vmul.f32 %v419, %v423
  %v425 = vmul.f32 %v256, %v424
  %vm426 = vcmp.eq.f32.partialorder %v256, inf
  %v427 = vsel %vm426, %v256, %v425
  %vm428 = vcmp.eq.f32.partialorder %v256, 0.0
  %v429 = vand.u32 %v256, 2147483648
  %v430 = vsel %vm428, %v429, %v427
  %v431 = vrsqrt.pop %v259
  %v432 = vmul.f32 %v431, %v259
  %v433 = vmul.f32 %v432, %v431
  %v434 = vmul.f32 0.5, %v433
  %v435 = vsub.f32 1.5, %v434
  %v436 = vmul.f32 %v431, %v435
  %v437 = vmul.f32 %v259, %v436
  %vm438 = vcmp.eq.f32.partialorder %v259, inf
  %v439 = vsel %vm438, %v259, %v437
  %vm440 = vcmp.eq.f32.partialorder %v259, 0.0
  %v441 = vand.u32 %v259, 2147483648
  %v442 = vsel %vm440, %v441, %v439
  %v443 = vrsqrt.pop %v262
  %v444 = vmul.f32 %v443, %v262
  %v445 = vmul.f32 %v444, %v443
  %v446 = vmul.f32 0.5, %v445
  %v447 = vsub.f32 1.5, %v446
  %v448 = vmul.f32 %v443, %v447
  %v449 = vmul.f32 %v262, %v448
  %vm450 = vcmp.eq.f32.partialorder %v262, inf
  %v451 = vsel %vm450, %v262, %v449
  %vm452 = vcmp.eq.f32.partialorder %v262, 0.0
  %v453 = vand.u32 %v262, 2147483648
  %v454 = vsel %vm452, %v453, %v451
  %v455 = vmax.f32 %v274, 1e-12
  %v456 = vmax.f32 %v286, 1e-12
  %v457 = vmax.f32 %v298, 1e-12
  %v458 = vmax.f32 %v310, 1e-12
  %v459 = vmax.f32 %v322, 1e-12
  %v460 = vmax.f32 %v334, 1e-12
  %v461 = vmax.f32 %v346, 1e-12
  %v462 = vmax.f32 %v358, 1e-12
  %v463 = vmax.f32 %v370, 1e-12
  %v464 = vmax.f32 %v382, 1e-12
  %v465 = vmax.f32 %v394, 1e-12
  %v466 = vmax.f32 %v406, 1e-12
  %v467 = vmax.f32 %v418, 1e-12
  %v468 = vmax.f32 %v430, 1e-12
  %v469 = vmax.f32 %v442, 1e-12
  %v470 = vmax.f32 %v454, 1e-12
  %v471 = vrcp.pop %v455
  %v472 = vmul.f32 %v455, %v471
  %v473 = vsub.f32 1.0, %v472
  %v474 = vmul.f32 %v471, %v473
  %v475 = vadd.f32 %v471, %v474
  %vm476 = vweird.f32 %v455
  %vm477 = vweird.f32 %v471
  %vm478 = vmor %vm476, %vm477
  %v479 = vsel %vm478, %v471, %v475
  %v480 = vand.u32 2147483647, %v455
  %vm481 = vcmp.eq.f32.partialorder %v480, 8.507059e+37
  %v482 = vand.u32 %v455, 2147483648
  %v483 = vor.u32 1.1754944e-38, %v482
  %v484 = vsel %vm481, %v483, %v479
  %v485 = vmul.f32 %v160, %v484
  %v486 = vrcp.pop %v456
  %v487 = vmul.f32 %v456, %v486
  %v488 = vsub.f32 1.0, %v487
  %v489 = vmul.f32 %v486, %v488
  %v490 = vadd.f32 %v486, %v489
  %vm491 = vweird.f32 %v456
  %vm492 = vweird.f32 %v486
  %vm493 = vmor %vm491, %vm492
  %v494 = vsel %vm493, %v486, %v490
  %v495 = vand.u32 2147483647, %v456
  %vm496 = vcmp.eq.f32.partialorder %v495, 8.507059e+37
  %v497 = vand.u32 %v456, 2147483648
  %v498 = vor.u32 1.1754944e-38, %v497
  %v499 = vsel %vm496, %v498, %v494
  %v500 = vmul.f32 %v162, %v499
  %v501 = vrcp.pop %v457
  %v502 = vmul.f32 %v457, %v501
  %v503 = vsub.f32 1.0, %v502
  %v504 = vmul.f32 %v501, %v503
  %v505 = vadd.f32 %v501, %v504
  %vm506 = vweird.f32 %v457
  %vm507 = vweird.f32 %v501
  %vm508 = vmor %vm506, %vm507
  %v509 = vsel %vm508, %v501, %v505
  %v510 = vand.u32 2147483647, %v457
  %vm511 = vcmp.eq.f32.partialorder %v510, 8.507059e+37
  %v512 = vand.u32 %v457, 2147483648
  %v513 = vor.u32 1.1754944e-38, %v512
  %v514 = vsel %vm511, %v513, %v509
  %v515 = vmul.f32 %v165, %v514
  %v516 = vrcp.pop %v458
  %v517 = vmul.f32 %v458, %v516
  %v518 = vsub.f32 1.0, %v517
  %v519 = vmul.f32 %v516, %v518
  %v520 = vadd.f32 %v516, %v519
  %vm521 = vweird.f32 %v458
  %vm522 = vweird.f32 %v516
  %vm523 = vmor %vm521, %vm522
  %v524 = vsel %vm523, %v516, %v520
  %v525 = vand.u32 2147483647, %v458
  %vm526 = vcmp.eq.f32.partialorder %v525, 8.507059e+37
  %v527 = vand.u32 %v458, 2147483648
  %v528 = vor.u32 1.1754944e-38, %v527
  %v529 = vsel %vm526, %v528, %v524
  %v530 = vmul.f32 %v167, %v529
  %v531 = vrcp.pop %v459
  %v532 = vmul.f32 %v459, %v531
  %v533 = vsub.f32 1.0, %v532
  %v534 = vmul.f32 %v531, %v533
  %v535 = vadd.f32 %v531, %v534
  %vm536 = vweird.f32 %v459
  %vm537 = vweird.f32 %v531
  %vm538 = vmor %vm536, %vm537
  %v539 = vsel %vm538, %v531, %v535
  %v540 = vand.u32 2147483647, %v459
  %vm541 = vcmp.eq.f32.partialorder %v540, 8.507059e+37
  %v542 = vand.u32 %v459, 2147483648
  %v543 = vor.u32 1.1754944e-38, %v542
  %v544 = vsel %vm541, %v543, %v539
  %v545 = vmul.f32 %v170, %v544
  %v546 = vrcp.pop %v460
  %v547 = vmul.f32 %v460, %v546
  %v548 = vsub.f32 1.0, %v547
  %v549 = vmul.f32 %v546, %v548
  %v550 = vadd.f32 %v546, %v549
  %vm551 = vweird.f32 %v460
  %vm552 = vweird.f32 %v546
  %vm553 = vmor %vm551, %vm552
  %v554 = vsel %vm553, %v546, %v550
  %v555 = vand.u32 2147483647, %v460
  %vm556 = vcmp.eq.f32.partialorder %v555, 8.507059e+37
  %v557 = vand.u32 %v460, 2147483648
  %v558 = vor.u32 1.1754944e-38, %v557
  %v559 = vsel %vm556, %v558, %v554
  %v560 = vmul.f32 %v172, %v559
  %v561 = vrcp.pop %v461
  %v562 = vmul.f32 %v461, %v561
  %v563 = vsub.f32 1.0, %v562
  %v564 = vmul.f32 %v561, %v563
  %v565 = vadd.f32 %v561, %v564
  %vm566 = vweird.f32 %v461
  %vm567 = vweird.f32 %v561
  %vm568 = vmor %vm566, %vm567
  %v569 = vsel %vm568, %v561, %v565
  %v570 = vand.u32 2147483647, %v461
  %vm571 = vcmp.eq.f32.partialorder %v570, 8.507059e+37
  %v572 = vand.u32 %v461, 2147483648
  %v573 = vor.u32 1.1754944e-38, %v572
  %v574 = vsel %vm571, %v573, %v569
  %v575 = vmul.f32 %v175, %v574
  %v576 = vrcp.pop %v462
  %v577 = vmul.f32 %v462, %v576
  %v578 = vsub.f32 1.0, %v577
  %v579 = vmul.f32 %v576, %v578
  %v580 = vadd.f32 %v576, %v579
  %vm581 = vweird.f32 %v462
  %vm582 = vweird.f32 %v576
  %vm583 = vmor %vm581, %vm582
  %v584 = vsel %vm583, %v576, %v580
  %v585 = vand.u32 2147483647, %v462
  %vm586 = vcmp.eq.f32.partialorder %v585, 8.507059e+37
  %v587 = vand.u32 %v462, 2147483648
  %v588 = vor.u32 1.1754944e-38, %v587
  %v589 = vsel %vm586, %v588, %v584
  %v590 = vmul.f32 %v177, %v589
  %v591 = vrcp.pop %v463
  %v592 = vmul.f32 %v463, %v591
  %v593 = vsub.f32 1.0, %v592
  %v594 = vmul.f32 %v591, %v593
  %v595 = vadd.f32 %v591, %v594
  %vm596 = vweird.f32 %v463
  %vm597 = vweird.f32 %v591
  %vm598 = vmor %vm596, %vm597
  %v599 = vsel %vm598, %v591, %v595
  %v600 = vand.u32 2147483647, %v463
  %vm601 = vcmp.eq.f32.partialorder %v600, 8.507059e+37
  %v602 = vand.u32 %v463, 2147483648
  %v603 = vor.u32 1.1754944e-38, %v602
  %v604 = vsel %vm601, %v603, %v599
  %v605 = vmul.f32 %v180, %v604
  %v606 = vrcp.pop %v464
  %v607 = vmul.f32 %v464, %v606
  %v608 = vsub.f32 1.0, %v607
  %v609 = vmul.f32 %v606, %v608
  %v610 = vadd.f32 %v606, %v609
  %vm611 = vweird.f32 %v464
  %vm612 = vweird.f32 %v606
  %vm613 = vmor %vm611, %vm612
  %v614 = vsel %vm613, %v606, %v610
  %v615 = vand.u32 2147483647, %v464
  %vm616 = vcmp.eq.f32.partialorder %v615, 8.507059e+37
  %v617 = vand.u32 %v464, 2147483648
  %v618 = vor.u32 1.1754944e-38, %v617
  %v619 = vsel %vm616, %v618, %v614
  %v620 = vmul.f32 %v182, %v619
  %v621 = vrcp.pop %v465
  %v622 = vmul.f32 %v465, %v621
  %v623 = vsub.f32 1.0, %v622
  %v624 = vmul.f32 %v621, %v623
  %v625 = vadd.f32 %v621, %v624
  %vm626 = vweird.f32 %v465
  %vm627 = vweird.f32 %v621
  %vm628 = vmor %vm626, %vm627
  %v629 = vsel %vm628, %v621, %v625
  %v630 = vand.u32 2147483647, %v465
  %vm631 = vcmp.eq.f32.partialorder %v630, 8.507059e+37
  %v632 = vand.u32 %v465, 2147483648
  %v633 = vor.u32 1.1754944e-38, %v632
  %v634 = vsel %vm631, %v633, %v629
  %v635 = vmul.f32 %v185, %v634
  %v636 = vrcp.pop %v466
  %v637 = vmul.f32 %v466, %v636
  %v638 = vsub.f32 1.0, %v637
  %v639 = vmul.f32 %v636, %v638
  %v640 = vadd.f32 %v636, %v639
  %vm641 = vweird.f32 %v466
  %vm642 = vweird.f32 %v636
  %vm643 = vmor %vm641, %vm642
  %v644 = vsel %vm643, %v636, %v640
  %v645 = vand.u32 2147483647, %v466
  %vm646 = vcmp.eq.f32.partialorder %v645, 8.507059e+37
  %v647 = vand.u32 %v466, 2147483648
  %v648 = vor.u32 1.1754944e-38, %v647
  %v649 = vsel %vm646, %v648, %v644
  %v650 = vmul.f32 %v187, %v649
  %v651 = vrcp.pop %v467
  %v652 = vmul.f32 %v467, %v651
  %v653 = vsub.f32 1.0, %v652
  %v654 = vmul.f32 %v651, %v653
  %v655 = vadd.f32 %v651, %v654
  %vm656 = vweird.f32 %v467
  %vm657 = vweird.f32 %v651
  %vm658 = vmor %vm656, %vm657
  %v659 = vsel %vm658, %v651, %v655
  %v660 = vand.u32 2147483647, %v467
  %vm661 = vcmp.eq.f32.partialorder %v660, 8.507059e+37
  %v662 = vand.u32 %v467, 2147483648
  %v663 = vor.u32 1.1754944e-38, %v662
  %v664 = vsel %vm661, %v663, %v659
  %v665 = vmul.f32 %v190, %v664
  %v666 = vrcp.pop %v468
  %v667 = vmul.f32 %v468, %v666
  %v668 = vsub.f32 1.0, %v667
  %v669 = vmul.f32 %v666, %v668
  %v670 = vadd.f32 %v666, %v669
  %vm671 = vweird.f32 %v468
  %vm672 = vweird.f32 %v666
  %vm673 = vmor %vm671, %vm672
  %v674 = vsel %vm673, %v666, %v670
  %v675 = vand.u32 2147483647, %v468
  %vm676 = vcmp.eq.f32.partialorder %v675, 8.507059e+37
  %v677 = vand.u32 %v468, 2147483648
  %v678 = vor.u32 1.1754944e-38, %v677
  %v679 = vsel %vm676, %v678, %v674
  %v680 = vmul.f32 %v192, %v679
  %v681 = vrcp.pop %v469
  %v682 = vmul.f32 %v469, %v681
  %v683 = vsub.f32 1.0, %v682
  %v684 = vmul.f32 %v681, %v683
  %v685 = vadd.f32 %v681, %v684
  %vm686 = vweird.f32 %v469
  %vm687 = vweird.f32 %v681
  %vm688 = vmor %vm686, %vm687
  %v689 = vsel %vm688, %v681, %v685
  %v690 = vand.u32 2147483647, %v469
  %vm691 = vcmp.eq.f32.partialorder %v690, 8.507059e+37
  %v692 = vand.u32 %v469, 2147483648
  %v693 = vor.u32 1.1754944e-38, %v692
  %v694 = vsel %vm691, %v693, %v689
  %v695 = vmul.f32 %v195, %v694
  %v696 = vrcp.pop %v470
  %v697 = vmul.f32 %v470, %v696
  %v698 = vsub.f32 1.0, %v697
  %v699 = vmul.f32 %v696, %v698
  %v700 = vadd.f32 %v696, %v699
  %vm701 = vweird.f32 %v470
  %vm702 = vweird.f32 %v696
  %vm703 = vmor %vm701, %vm702
  %v704 = vsel %vm703, %v696, %v700
  %v705 = vand.u32 2147483647, %v470
  %vm706 = vcmp.eq.f32.partialorder %v705, 8.507059e+37
  %v707 = vand.u32 %v470, 2147483648
  %v708 = vor.u32 1.1754944e-38, %v707
  %v709 = vsel %vm706, %v708, %v704
  %v710 = vmul.f32 %v197, %v709
  %v711 = vmul.f32 %v485, 5.656854
  %v712 = vmul.f32 %v500, 5.656854
  %v713 = vmul.f32 %v515, 5.656854
  %v714 = vmul.f32 %v530, 5.656854
  %v715 = vmul.f32 %v545, 5.656854
  %v716 = vmul.f32 %v560, 5.656854
  %v717 = vmul.f32 %v575, 5.656854
  %v718 = vmul.f32 %v590, 5.656854
  %v719 = vmul.f32 %v605, 5.656854
  %v720 = vmul.f32 %v620, 5.656854
  %v721 = vmul.f32 %v635, 5.656854
  %v722 = vmul.f32 %v650, 5.656854
  %v723 = vmul.f32 %v665, 5.656854
  %v724 = vmul.f32 %v680, 5.656854
  %v725 = vmul.f32 %v695, 5.656854
  %v726 = vmul.f32 %v710, 5.656854
  %v727 = vpack.c.bf16 %v712, %v711
  %v728 = vpack.c.bf16 %v714, %v713
  %v729 = vpack.c.bf16 %v716, %v715
  %v730 = vpack.c.bf16 %v718, %v717
  %v731 = vpack.c.bf16 %v720, %v719
  %v732 = vpack.c.bf16 %v722, %v721
  %v733 = vpack.c.bf16 %v724, %v723
  %v734 = vpack.c.bf16 %v726, %v725
  %v735 = vld [vmem:[%s3] sm:$0xf]
  %v736 = vld [vmem:[%s3 + $0x4] sm:$0xf]
  %v737 = vld [vmem:[%s3 + $0x8] sm:$0xf]
  %v738 = vld [vmem:[%s3 + $0xc] sm:$0xf]
  %v743 = vunpack.c.l.b16 %v735
  %v744 = vunpack.c.l.b16 %v736
  %v745 = vunpack.c.l.b16 %v737
  %v746 = vunpack.c.l.b16 %v738
  %v747 = vpack.c.b16 %v744, %v743
  %v748 = vpack.c.b16 %v746, %v745
  %v752 = vsel %vm125, %v727, 0
  %v755 = vsel %vm125, %v728, 0
  %v758 = vsel %vm125, %v729, 0
  %v761 = vsel %vm125, %v730, 0
  %v764 = vsel %vm125, %v731, 0
  %v767 = vsel %vm125, %v732, 0
  %v770 = vsel %vm125, %v733, 0
  %v773 = vsel %vm125, %v734, 0
  %775 = vmatpush.bf16.msra.mxu0 0
  %776 = vmatpush.bf16.msra.mxu0 0
  %777 = vmatpush.bf16.msra.mxu0 0
  %778 = vmatpush.bf16.msra.mxu0 0
  %779 = vmatpush.bf16.msra.mxu0 0
  %780 = vmatpush.bf16.msra.mxu0 0
  %781 = vmatpush.bf16.msra.mxu0 %v748
  %782 = vmatpush.bf16.msra.mxu0 %v747
  %783 = vmatmul.bf16.gmra.mxu0 %v752
  %v784 = vpop.f32.mrf.mxu0
  %v785 = vadd.f32 0.0, %v784
  %v786 = vpop.f32.mrf.mxu0
  %v787 = vadd.f32 0.0, %v786
  %788 = vmatmul.bf16.gmra.mxu0 %v755
  %v789 = vpop.f32.mrf.mxu0
  %v790 = vadd.f32 0.0, %v789
  %v791 = vpop.f32.mrf.mxu0
  %v792 = vadd.f32 0.0, %v791
  %793 = vmatmul.bf16.gmra.mxu0 %v758
  %v794 = vpop.f32.mrf.mxu0
  %v795 = vadd.f32 0.0, %v794
  %v796 = vpop.f32.mrf.mxu0
  %v797 = vadd.f32 0.0, %v796
  %798 = vmatmul.bf16.gmra.mxu0 %v761
  %v799 = vpop.f32.mrf.mxu0
  %v800 = vadd.f32 0.0, %v799
  %v801 = vpop.f32.mrf.mxu0
  %v802 = vadd.f32 0.0, %v801
  %803 = vmatmul.bf16.gmra.mxu0 %v764
  %v804 = vpop.f32.mrf.mxu0
  %v805 = vadd.f32 0.0, %v804
  %v806 = vpop.f32.mrf.mxu0
  %v807 = vadd.f32 0.0, %v806
  %808 = vmatmul.bf16.gmra.mxu0 %v767
  %v809 = vpop.f32.mrf.mxu0
  %v810 = vadd.f32 0.0, %v809
  %v811 = vpop.f32.mrf.mxu0
  %v812 = vadd.f32 0.0, %v811
  %813 = vmatmul.bf16.gmra.mxu0 %v770
  %v814 = vpop.f32.mrf.mxu0
  %v815 = vadd.f32 0.0, %v814
  %v816 = vpop.f32.mrf.mxu0
  %v817 = vadd.f32 0.0, %v816
  %818 = vmatmul.bf16.gmra.mxu0 %v773
  %v819 = vpop.f32.mrf.mxu0
  %v820 = vadd.f32 0.0, %v819
  %v821 = vpop.f32.mrf.mxu0
  %v822 = vadd.f32 0.0, %v821
  %823 = vdwg.mxu0
  %v824 = vmul.f32 %v785, 0.5
  %v825 = vmul.f32 %v787, 0.5
  %v826 = vmul.f32 %v790, 0.5
  %v827 = vmul.f32 %v792, 0.5
  %v828 = vmul.f32 %v795, 0.5
  %v829 = vmul.f32 %v797, 0.5
  %v830 = vmul.f32 %v800, 0.5
  %v831 = vmul.f32 %v802, 0.5
  %v832 = vmul.f32 %v805, 0.5
  %v833 = vmul.f32 %v807, 0.5
  %v834 = vmul.f32 %v810, 0.5
  %v835 = vmul.f32 %v812, 0.5
  %v836 = vmul.f32 %v815, 0.5
  %v837 = vmul.f32 %v817, 0.5
  %v838 = vmul.f32 %v820, 0.5
  %v839 = vmul.f32 %v822, 0.5
  %v840 = vmul.f32 %v785, 0.70710677
  %v841 = vmul.f32 %v787, 0.70710677
  %v842 = vmul.f32 %v790, 0.70710677
  %v843 = vmul.f32 %v792, 0.70710677
  %v844 = vmul.f32 %v795, 0.70710677
  %v845 = vmul.f32 %v797, 0.70710677
  %v846 = vmul.f32 %v800, 0.70710677
  %v847 = vmul.f32 %v802, 0.70710677
  %v848 = vmul.f32 %v805, 0.70710677
  %v849 = vmul.f32 %v807, 0.70710677
  %v850 = vmul.f32 %v810, 0.70710677
  %v851 = vmul.f32 %v812, 0.70710677
  %v852 = vmul.f32 %v815, 0.70710677
  %v853 = vmul.f32 %v817, 0.70710677
  %v854 = vmul.f32 %v820, 0.70710677
  %v855 = vmul.f32 %v822, 0.70710677
  %v856 = vmul.f32 %v840, %v840
  %v857 = vmin.f32 16.0, %v856
  %v858 = vmul.f32 %v857, 2.1237322e-06
  %v859 = vadd.f32 %v858, 0.00028619796
  %v860 = vmul.f32 %v857, %v859
  %v861 = vadd.f32 %v860, 0.0036580483
  %v862 = vmul.f32 %v857, %v861
  %v863 = vadd.f32 %v862, 0.05243302
  %v864 = vmul.f32 %v857, %v863
  %v865 = vadd.f32 %v864, 0.18741608
  %v866 = vmul.f32 %v857, %v865
  %v867 = vadd.f32 %v866, 1.1283791
  %v868 = vmul.f32 %v840, %v867
  %v869 = vmul.f32 %v857, 3.8918573e-05
  %v870 = vadd.f32 %v869, 0.001143296
  %v871 = vmul.f32 %v857, %v870
  %v872 = vadd.f32 %v871, 0.014752088
  %v873 = vmul.f32 %v857, %v872
  %v874 = vadd.f32 %v873, 0.112945676
  %v875 = vmul.f32 %v857, %v874
  %v876 = vadd.f32 %v875, 0.4994258
  %v877 = vmul.f32 %v857, %v876
  %v878 = vadd.f32 %v877, 1.0
  %v879 = vrcp.pop %v878
  %v880 = vmul.f32 %v878, %v879
  %v881 = vsub.f32 1.0, %v880
  %v882 = vmul.f32 %v879, %v881
  %v883 = vadd.f32 %v879, %v882
  %vm884 = vweird.f32 %v878
  %vm885 = vweird.f32 %v879
  %vm886 = vmor %vm884, %vm885
  %v887 = vsel %vm886, %v879, %v883
  %v888 = vand.u32 2147483647, %v878
  %vm889 = vcmp.eq.f32.partialorder %v888, 8.507059e+37
  %v890 = vand.u32 %v878, 2147483648
  %v891 = vor.u32 1.1754944e-38, %v890
  %v892 = vsel %vm889, %v891, %v887
  %v893 = vmul.f32 %v868, %v892
  %v894 = vmin.f32 %v893, 1.0
  %v895 = vmax.f32 %v894, -1.0
  %v896 = vmul.f32 %v841, %v841
  %v897 = vmin.f32 16.0, %v896
  %v898 = vmul.f32 %v897, 2.1237322e-06
  %v899 = vadd.f32 %v898, 0.00028619796
  %v900 = vmul.f32 %v897, %v899
  %v901 = vadd.f32 %v900, 0.0036580483
  %v902 = vmul.f32 %v897, %v901
  %v903 = vadd.f32 %v902, 0.05243302
  %v904 = vmul.f32 %v897, %v903
  %v905 = vadd.f32 %v904, 0.18741608
  %v906 = vmul.f32 %v897, %v905
  %v907 = vadd.f32 %v906, 1.1283791
  %v908 = vmul.f32 %v841, %v907
  %v909 = vmul.f32 %v897, 3.8918573e-05
  %v910 = vadd.f32 %v909, 0.001143296
  %v911 = vmul.f32 %v897, %v910
  %v912 = vadd.f32 %v911, 0.014752088
  %v913 = vmul.f32 %v897, %v912
  %v914 = vadd.f32 %v913, 0.112945676
  %v915 = vmul.f32 %v897, %v914
  %v916 = vadd.f32 %v915, 0.4994258
  %v917 = vmul.f32 %v897, %v916
  %v918 = vadd.f32 %v917, 1.0
  %v919 = vrcp.pop %v918
  %v920 = vmul.f32 %v918, %v919
  %v921 = vsub.f32 1.0, %v920
  %v922 = vmul.f32 %v919, %v921
  %v923 = vadd.f32 %v919, %v922
  %vm924 = vweird.f32 %v918
  %vm925 = vweird.f32 %v919
  %vm926 = vmor %vm924, %vm925
  %v927 = vsel %vm926, %v919, %v923
  %v928 = vand.u32 2147483647, %v918
  %vm929 = vcmp.eq.f32.partialorder %v928, 8.507059e+37
  %v930 = vand.u32 %v918, 2147483648
  %v931 = vor.u32 1.1754944e-38, %v930
  %v932 = vsel %vm929, %v931, %v927
  %v933 = vmul.f32 %v908, %v932
  %v934 = vmin.f32 %v933, 1.0
  %v935 = vmax.f32 %v934, -1.0
  %v936 = vmul.f32 %v842, %v842
  %v937 = vmin.f32 16.0, %v936
  %v938 = vmul.f32 %v937, 2.1237322e-06
  %v939 = vadd.f32 %v938, 0.00028619796
  %v940 = vmul.f32 %v937, %v939
  %v941 = vadd.f32 %v940, 0.0036580483
  %v942 = vmul.f32 %v937, %v941
  %v943 = vadd.f32 %v942, 0.05243302
  %v944 = vmul.f32 %v937, %v943
  %v945 = vadd.f32 %v944, 0.18741608
  %v946 = vmul.f32 %v937, %v945
  %v947 = vadd.f32 %v946, 1.1283791
  %v948 = vmul.f32 %v842, %v947
  %v949 = vmul.f32 %v937, 3.8918573e-05
  %v950 = vadd.f32 %v949, 0.001143296
  %v951 = vmul.f32 %v937, %v950
  %v952 = vadd.f32 %v951, 0.014752088
  %v953 = vmul.f32 %v937, %v952
  %v954 = vadd.f32 %v953, 0.112945676
  %v955 = vmul.f32 %v937, %v954
  %v956 = vadd.f32 %v955, 0.4994258
  %v957 = vmul.f32 %v937, %v956
  %v958 = vadd.f32 %v957, 1.0
  %v959 = vrcp.pop %v958
  %v960 = vmul.f32 %v958, %v959
  %v961 = vsub.f32 1.0, %v960
  %v962 = vmul.f32 %v959, %v961
  %v963 = vadd.f32 %v959, %v962
  %vm964 = vweird.f32 %v958
  %vm965 = vweird.f32 %v959
  %vm966 = vmor %vm964, %vm965
  %v967 = vsel %vm966, %v959, %v963
  %v968 = vand.u32 2147483647, %v958
  %vm969 = vcmp.eq.f32.partialorder %v968, 8.507059e+37
  %v970 = vand.u32 %v958, 2147483648
  %v971 = vor.u32 1.1754944e-38, %v970
  %v972 = vsel %vm969, %v971, %v967
  %v973 = vmul.f32 %v948, %v972
  %v974 = vmin.f32 %v973, 1.0
  %v975 = vmax.f32 %v974, -1.0
  %v976 = vmul.f32 %v843, %v843
  %v977 = vmin.f32 16.0, %v976
  %v978 = vmul.f32 %v977, 2.1237322e-06
  %v979 = vadd.f32 %v978, 0.00028619796
  %v980 = vmul.f32 %v977, %v979
  %v981 = vadd.f32 %v980, 0.0036580483
  %v982 = vmul.f32 %v977, %v981
  %v983 = vadd.f32 %v982, 0.05243302
  %v984 = vmul.f32 %v977, %v983
  %v985 = vadd.f32 %v984, 0.18741608
  %v986 = vmul.f32 %v977, %v985
  %v987 = vadd.f32 %v986, 1.1283791
  %v988 = vmul.f32 %v843, %v987
  %v989 = vmul.f32 %v977, 3.8918573e-05
  %v990 = vadd.f32 %v989, 0.001143296
  %v991 = vmul.f32 %v977, %v990
  %v992 = vadd.f32 %v991, 0.014752088
  %v993 = vmul.f32 %v977, %v992
  %v994 = vadd.f32 %v993, 0.112945676
  %v995 = vmul.f32 %v977, %v994
  %v996 = vadd.f32 %v995, 0.4994258
  %v997 = vmul.f32 %v977, %v996
  %v998 = vadd.f32 %v997, 1.0
  %v999 = vrcp.pop %v998
  %v1000 = vmul.f32 %v998, %v999
  %v1001 = vsub.f32 1.0, %v1000
  %v1002 = vmul.f32 %v999, %v1001
  %v1003 = vadd.f32 %v999, %v1002
  %vm1004 = vweird.f32 %v998
  %vm1005 = vweird.f32 %v999
  %vm1006 = vmor %vm1004, %vm1005
  %v1007 = vsel %vm1006, %v999, %v1003
  %v1008 = vand.u32 2147483647, %v998
  %vm1009 = vcmp.eq.f32.partialorder %v1008, 8.507059e+37
  %v1010 = vand.u32 %v998, 2147483648
  %v1011 = vor.u32 1.1754944e-38, %v1010
  %v1012 = vsel %vm1009, %v1011, %v1007
  %v1013 = vmul.f32 %v988, %v1012
  %v1014 = vmin.f32 %v1013, 1.0
  %v1015 = vmax.f32 %v1014, -1.0
  %v1016 = vmul.f32 %v844, %v844
  %v1017 = vmin.f32 16.0, %v1016
  %v1018 = vmul.f32 %v1017, 2.1237322e-06
  %v1019 = vadd.f32 %v1018, 0.00028619796
  %v1020 = vmul.f32 %v1017, %v1019
  %v1021 = vadd.f32 %v1020, 0.0036580483
  %v1022 = vmul.f32 %v1017, %v1021
  %v1023 = vadd.f32 %v1022, 0.05243302
  %v1024 = vmul.f32 %v1017, %v1023
  %v1025 = vadd.f32 %v1024, 0.18741608
  %v1026 = vmul.f32 %v1017, %v1025
  %v1027 = vadd.f32 %v1026, 1.1283791
  %v1028 = vmul.f32 %v844, %v1027
  %v1029 = vmul.f32 %v1017, 3.8918573e-05
  %v1030 = vadd.f32 %v1029, 0.001143296
  %v1031 = vmul.f32 %v1017, %v1030
  %v1032 = vadd.f32 %v1031, 0.014752088
  %v1033 = vmul.f32 %v1017, %v1032
  %v1034 = vadd.f32 %v1033, 0.112945676
  %v1035 = vmul.f32 %v1017, %v1034
  %v1036 = vadd.f32 %v1035, 0.4994258
  %v1037 = vmul.f32 %v1017, %v1036
  %v1038 = vadd.f32 %v1037, 1.0
  %v1039 = vrcp.pop %v1038
  %v1040 = vmul.f32 %v1038, %v1039
  %v1041 = vsub.f32 1.0, %v1040
  %v1042 = vmul.f32 %v1039, %v1041
  %v1043 = vadd.f32 %v1039, %v1042
  %vm1044 = vweird.f32 %v1038
  %vm1045 = vweird.f32 %v1039
  %vm1046 = vmor %vm1044, %vm1045
  %v1047 = vsel %vm1046, %v1039, %v1043
  %v1048 = vand.u32 2147483647, %v1038
  %vm1049 = vcmp.eq.f32.partialorder %v1048, 8.507059e+37
  %v1050 = vand.u32 %v1038, 2147483648
  %v1051 = vor.u32 1.1754944e-38, %v1050
  %v1052 = vsel %vm1049, %v1051, %v1047
  %v1053 = vmul.f32 %v1028, %v1052
  %v1054 = vmin.f32 %v1053, 1.0
  %v1055 = vmax.f32 %v1054, -1.0
  %v1056 = vmul.f32 %v845, %v845
  %v1057 = vmin.f32 16.0, %v1056
  %v1058 = vmul.f32 %v1057, 2.1237322e-06
  %v1059 = vadd.f32 %v1058, 0.00028619796
  %v1060 = vmul.f32 %v1057, %v1059
  %v1061 = vadd.f32 %v1060, 0.0036580483
  %v1062 = vmul.f32 %v1057, %v1061
  %v1063 = vadd.f32 %v1062, 0.05243302
  %v1064 = vmul.f32 %v1057, %v1063
  %v1065 = vadd.f32 %v1064, 0.18741608
  %v1066 = vmul.f32 %v1057, %v1065
  %v1067 = vadd.f32 %v1066, 1.1283791
  %v1068 = vmul.f32 %v845, %v1067
  %v1069 = vmul.f32 %v1057, 3.8918573e-05
  %v1070 = vadd.f32 %v1069, 0.001143296
  %v1071 = vmul.f32 %v1057, %v1070
  %v1072 = vadd.f32 %v1071, 0.014752088
  %v1073 = vmul.f32 %v1057, %v1072
  %v1074 = vadd.f32 %v1073, 0.112945676
  %v1075 = vmul.f32 %v1057, %v1074
  %v1076 = vadd.f32 %v1075, 0.4994258
  %v1077 = vmul.f32 %v1057, %v1076
  %v1078 = vadd.f32 %v1077, 1.0
  %v1079 = vrcp.pop %v1078
  %v1080 = vmul.f32 %v1078, %v1079
  %v1081 = vsub.f32 1.0, %v1080
  %v1082 = vmul.f32 %v1079, %v1081
  %v1083 = vadd.f32 %v1079, %v1082
  %vm1084 = vweird.f32 %v1078
  %vm1085 = vweird.f32 %v1079
  %vm1086 = vmor %vm1084, %vm1085
  %v1087 = vsel %vm1086, %v1079, %v1083
  %v1088 = vand.u32 2147483647, %v1078
  %vm1089 = vcmp.eq.f32.partialorder %v1088, 8.507059e+37
  %v1090 = vand.u32 %v1078, 2147483648
  %v1091 = vor.u32 1.1754944e-38, %v1090
  %v1092 = vsel %vm1089, %v1091, %v1087
  %v1093 = vmul.f32 %v1068, %v1092
  %v1094 = vmin.f32 %v1093, 1.0
  %v1095 = vmax.f32 %v1094, -1.0
  %v1096 = vmul.f32 %v846, %v846
  %v1097 = vmin.f32 16.0, %v1096
  %v1098 = vmul.f32 %v1097, 2.1237322e-06
  %v1099 = vadd.f32 %v1098, 0.00028619796
  %v1100 = vmul.f32 %v1097, %v1099
  %v1101 = vadd.f32 %v1100, 0.0036580483
  %v1102 = vmul.f32 %v1097, %v1101
  %v1103 = vadd.f32 %v1102, 0.05243302
  %v1104 = vmul.f32 %v1097, %v1103
  %v1105 = vadd.f32 %v1104, 0.18741608
  %v1106 = vmul.f32 %v1097, %v1105
  %v1107 = vadd.f32 %v1106, 1.1283791
  %v1108 = vmul.f32 %v846, %v1107
  %v1109 = vmul.f32 %v1097, 3.8918573e-05
  %v1110 = vadd.f32 %v1109, 0.001143296
  %v1111 = vmul.f32 %v1097, %v1110
  %v1112 = vadd.f32 %v1111, 0.014752088
  %v1113 = vmul.f32 %v1097, %v1112
  %v1114 = vadd.f32 %v1113, 0.112945676
  %v1115 = vmul.f32 %v1097, %v1114
  %v1116 = vadd.f32 %v1115, 0.4994258
  %v1117 = vmul.f32 %v1097, %v1116
  %v1118 = vadd.f32 %v1117, 1.0
  %v1119 = vrcp.pop %v1118
  %v1120 = vmul.f32 %v1118, %v1119
  %v1121 = vsub.f32 1.0, %v1120
  %v1122 = vmul.f32 %v1119, %v1121
  %v1123 = vadd.f32 %v1119, %v1122
  %vm1124 = vweird.f32 %v1118
  %vm1125 = vweird.f32 %v1119
  %vm1126 = vmor %vm1124, %vm1125
  %v1127 = vsel %vm1126, %v1119, %v1123
  %v1128 = vand.u32 2147483647, %v1118
  %vm1129 = vcmp.eq.f32.partialorder %v1128, 8.507059e+37
  %v1130 = vand.u32 %v1118, 2147483648
  %v1131 = vor.u32 1.1754944e-38, %v1130
  %v1132 = vsel %vm1129, %v1131, %v1127
  %v1133 = vmul.f32 %v1108, %v1132
  %v1134 = vmin.f32 %v1133, 1.0
  %v1135 = vmax.f32 %v1134, -1.0
  %v1136 = vmul.f32 %v847, %v847
  %v1137 = vmin.f32 16.0, %v1136
  %v1138 = vmul.f32 %v1137, 2.1237322e-06
  %v1139 = vadd.f32 %v1138, 0.00028619796
  %v1140 = vmul.f32 %v1137, %v1139
  %v1141 = vadd.f32 %v1140, 0.0036580483
  %v1142 = vmul.f32 %v1137, %v1141
  %v1143 = vadd.f32 %v1142, 0.05243302
  %v1144 = vmul.f32 %v1137, %v1143
  %v1145 = vadd.f32 %v1144, 0.18741608
  %v1146 = vmul.f32 %v1137, %v1145
  %v1147 = vadd.f32 %v1146, 1.1283791
  %v1148 = vmul.f32 %v847, %v1147
  %v1149 = vmul.f32 %v1137, 3.8918573e-05
  %v1150 = vadd.f32 %v1149, 0.001143296
  %v1151 = vmul.f32 %v1137, %v1150
  %v1152 = vadd.f32 %v1151, 0.014752088
  %v1153 = vmul.f32 %v1137, %v1152
  %v1154 = vadd.f32 %v1153, 0.112945676
  %v1155 = vmul.f32 %v1137, %v1154
  %v1156 = vadd.f32 %v1155, 0.4994258
  %v1157 = vmul.f32 %v1137, %v1156
  %v1158 = vadd.f32 %v1157, 1.0
  %v1159 = vrcp.pop %v1158
  %v1160 = vmul.f32 %v1158, %v1159
  %v1161 = vsub.f32 1.0, %v1160
  %v1162 = vmul.f32 %v1159, %v1161
  %v1163 = vadd.f32 %v1159, %v1162
  %vm1164 = vweird.f32 %v1158
  %vm1165 = vweird.f32 %v1159
  %vm1166 = vmor %vm1164, %vm1165
  %v1167 = vsel %vm1166, %v1159, %v1163
  %v1168 = vand.u32 2147483647, %v1158
  %vm1169 = vcmp.eq.f32.partialorder %v1168, 8.507059e+37
  %v1170 = vand.u32 %v1158, 2147483648
  %v1171 = vor.u32 1.1754944e-38, %v1170
  %v1172 = vsel %vm1169, %v1171, %v1167
  %v1173 = vmul.f32 %v1148, %v1172
  %v1174 = vmin.f32 %v1173, 1.0
  %v1175 = vmax.f32 %v1174, -1.0
  %v1176 = vmul.f32 %v848, %v848
  %v1177 = vmin.f32 16.0, %v1176
  %v1178 = vmul.f32 %v1177, 2.1237322e-06
  %v1179 = vadd.f32 %v1178, 0.00028619796
  %v1180 = vmul.f32 %v1177, %v1179
  %v1181 = vadd.f32 %v1180, 0.0036580483
  %v1182 = vmul.f32 %v1177, %v1181
  %v1183 = vadd.f32 %v1182, 0.05243302
  %v1184 = vmul.f32 %v1177, %v1183
  %v1185 = vadd.f32 %v1184, 0.18741608
  %v1186 = vmul.f32 %v1177, %v1185
  %v1187 = vadd.f32 %v1186, 1.1283791
  %v1188 = vmul.f32 %v848, %v1187
  %v1189 = vmul.f32 %v1177, 3.8918573e-05
  %v1190 = vadd.f32 %v1189, 0.001143296
  %v1191 = vmul.f32 %v1177, %v1190
  %v1192 = vadd.f32 %v1191, 0.014752088
  %v1193 = vmul.f32 %v1177, %v1192
  %v1194 = vadd.f32 %v1193, 0.112945676
  %v1195 = vmul.f32 %v1177, %v1194
  %v1196 = vadd.f32 %v1195, 0.4994258
  %v1197 = vmul.f32 %v1177, %v1196
  %v1198 = vadd.f32 %v1197, 1.0
  %v1199 = vrcp.pop %v1198
  %v1200 = vmul.f32 %v1198, %v1199
  %v1201 = vsub.f32 1.0, %v1200
  %v1202 = vmul.f32 %v1199, %v1201
  %v1203 = vadd.f32 %v1199, %v1202
  %vm1204 = vweird.f32 %v1198
  %vm1205 = vweird.f32 %v1199
  %vm1206 = vmor %vm1204, %vm1205
  %v1207 = vsel %vm1206, %v1199, %v1203
  %v1208 = vand.u32 2147483647, %v1198
  %vm1209 = vcmp.eq.f32.partialorder %v1208, 8.507059e+37
  %v1210 = vand.u32 %v1198, 2147483648
  %v1211 = vor.u32 1.1754944e-38, %v1210
  %v1212 = vsel %vm1209, %v1211, %v1207
  %v1213 = vmul.f32 %v1188, %v1212
  %v1214 = vmin.f32 %v1213, 1.0
  %v1215 = vmax.f32 %v1214, -1.0
  %v1216 = vmul.f32 %v849, %v849
  %v1217 = vmin.f32 16.0, %v1216
  %v1218 = vmul.f32 %v1217, 2.1237322e-06
  %v1219 = vadd.f32 %v1218, 0.00028619796
  %v1220 = vmul.f32 %v1217, %v1219
  %v1221 = vadd.f32 %v1220, 0.0036580483
  %v1222 = vmul.f32 %v1217, %v1221
  %v1223 = vadd.f32 %v1222, 0.05243302
  %v1224 = vmul.f32 %v1217, %v1223
  %v1225 = vadd.f32 %v1224, 0.18741608
  %v1226 = vmul.f32 %v1217, %v1225
  %v1227 = vadd.f32 %v1226, 1.1283791
  %v1228 = vmul.f32 %v849, %v1227
  %v1229 = vmul.f32 %v1217, 3.8918573e-05
  %v1230 = vadd.f32 %v1229, 0.001143296
  %v1231 = vmul.f32 %v1217, %v1230
  %v1232 = vadd.f32 %v1231, 0.014752088
  %v1233 = vmul.f32 %v1217, %v1232
  %v1234 = vadd.f32 %v1233, 0.112945676
  %v1235 = vmul.f32 %v1217, %v1234
  %v1236 = vadd.f32 %v1235, 0.4994258
  %v1237 = vmul.f32 %v1217, %v1236
  %v1238 = vadd.f32 %v1237, 1.0
  %v1239 = vrcp.pop %v1238
  %v1240 = vmul.f32 %v1238, %v1239
  %v1241 = vsub.f32 1.0, %v1240
  %v1242 = vmul.f32 %v1239, %v1241
  %v1243 = vadd.f32 %v1239, %v1242
  %vm1244 = vweird.f32 %v1238
  %vm1245 = vweird.f32 %v1239
  %vm1246 = vmor %vm1244, %vm1245
  %v1247 = vsel %vm1246, %v1239, %v1243
  %v1248 = vand.u32 2147483647, %v1238
  %vm1249 = vcmp.eq.f32.partialorder %v1248, 8.507059e+37
  %v1250 = vand.u32 %v1238, 2147483648
  %v1251 = vor.u32 1.1754944e-38, %v1250
  %v1252 = vsel %vm1249, %v1251, %v1247
  %v1253 = vmul.f32 %v1228, %v1252
  %v1254 = vmin.f32 %v1253, 1.0
  %v1255 = vmax.f32 %v1254, -1.0
  %v1256 = vmul.f32 %v850, %v850
  %v1257 = vmin.f32 16.0, %v1256
  %v1258 = vmul.f32 %v1257, 2.1237322e-06
  %v1259 = vadd.f32 %v1258, 0.00028619796
  %v1260 = vmul.f32 %v1257, %v1259
  %v1261 = vadd.f32 %v1260, 0.0036580483
  %v1262 = vmul.f32 %v1257, %v1261
  %v1263 = vadd.f32 %v1262, 0.05243302
  %v1264 = vmul.f32 %v1257, %v1263
  %v1265 = vadd.f32 %v1264, 0.18741608
  %v1266 = vmul.f32 %v1257, %v1265
  %v1267 = vadd.f32 %v1266, 1.1283791
  %v1268 = vmul.f32 %v850, %v1267
  %v1269 = vmul.f32 %v1257, 3.8918573e-05
  %v1270 = vadd.f32 %v1269, 0.001143296
  %v1271 = vmul.f32 %v1257, %v1270
  %v1272 = vadd.f32 %v1271, 0.014752088
  %v1273 = vmul.f32 %v1257, %v1272
  %v1274 = vadd.f32 %v1273, 0.112945676
  %v1275 = vmul.f32 %v1257, %v1274
  %v1276 = vadd.f32 %v1275, 0.4994258
  %v1277 = vmul.f32 %v1257, %v1276
  %v1278 = vadd.f32 %v1277, 1.0
  %v1279 = vrcp.pop %v1278
  %v1280 = vmul.f32 %v1278, %v1279
  %v1281 = vsub.f32 1.0, %v1280
  %v1282 = vmul.f32 %v1279, %v1281
  %v1283 = vadd.f32 %v1279, %v1282
  %vm1284 = vweird.f32 %v1278
  %vm1285 = vweird.f32 %v1279
  %vm1286 = vmor %vm1284, %vm1285
  %v1287 = vsel %vm1286, %v1279, %v1283
  %v1288 = vand.u32 2147483647, %v1278
  %vm1289 = vcmp.eq.f32.partialorder %v1288, 8.507059e+37
  %v1290 = vand.u32 %v1278, 2147483648
  %v1291 = vor.u32 1.1754944e-38, %v1290
  %v1292 = vsel %vm1289, %v1291, %v1287
  %v1293 = vmul.f32 %v1268, %v1292
  %v1294 = vmin.f32 %v1293, 1.0
  %v1295 = vmax.f32 %v1294, -1.0
  %v1296 = vmul.f32 %v851, %v851
  %v1297 = vmin.f32 16.0, %v1296
  %v1298 = vmul.f32 %v1297, 2.1237322e-06
  %v1299 = vadd.f32 %v1298, 0.00028619796
  %v1300 = vmul.f32 %v1297, %v1299
  %v1301 = vadd.f32 %v1300, 0.0036580483
  %v1302 = vmul.f32 %v1297, %v1301
  %v1303 = vadd.f32 %v1302, 0.05243302
  %v1304 = vmul.f32 %v1297, %v1303
  %v1305 = vadd.f32 %v1304, 0.18741608
  %v1306 = vmul.f32 %v1297, %v1305
  %v1307 = vadd.f32 %v1306, 1.1283791
  %v1308 = vmul.f32 %v851, %v1307
  %v1309 = vmul.f32 %v1297, 3.8918573e-05
  %v1310 = vadd.f32 %v1309, 0.001143296
  %v1311 = vmul.f32 %v1297, %v1310
  %v1312 = vadd.f32 %v1311, 0.014752088
  %v1313 = vmul.f32 %v1297, %v1312
  %v1314 = vadd.f32 %v1313, 0.112945676
  %v1315 = vmul.f32 %v1297, %v1314
  %v1316 = vadd.f32 %v1315, 0.4994258
  %v1317 = vmul.f32 %v1297, %v1316
  %v1318 = vadd.f32 %v1317, 1.0
  %v1319 = vrcp.pop %v1318
  %v1320 = vmul.f32 %v1318, %v1319
  %v1321 = vsub.f32 1.0, %v1320
  %v1322 = vmul.f32 %v1319, %v1321
  %v1323 = vadd.f32 %v1319, %v1322
  %vm1324 = vweird.f32 %v1318
  %vm1325 = vweird.f32 %v1319
  %vm1326 = vmor %vm1324, %vm1325
  %v1327 = vsel %vm1326, %v1319, %v1323
  %v1328 = vand.u32 2147483647, %v1318
  %vm1329 = vcmp.eq.f32.partialorder %v1328, 8.507059e+37
  %v1330 = vand.u32 %v1318, 2147483648
  %v1331 = vor.u32 1.1754944e-38, %v1330
  %v1332 = vsel %vm1329, %v1331, %v1327
  %v1333 = vmul.f32 %v1308, %v1332
  %v1334 = vmin.f32 %v1333, 1.0
  %v1335 = vmax.f32 %v1334, -1.0
  %v1336 = vmul.f32 %v852, %v852
  %v1337 = vmin.f32 16.0, %v1336
  %v1338 = vmul.f32 %v1337, 2.1237322e-06
  %v1339 = vadd.f32 %v1338, 0.00028619796
  %v1340 = vmul.f32 %v1337, %v1339
  %v1341 = vadd.f32 %v1340, 0.0036580483
  %v1342 = vmul.f32 %v1337, %v1341
  %v1343 = vadd.f32 %v1342, 0.05243302
  %v1344 = vmul.f32 %v1337, %v1343
  %v1345 = vadd.f32 %v1344, 0.18741608
  %v1346 = vmul.f32 %v1337, %v1345
  %v1347 = vadd.f32 %v1346, 1.1283791
  %v1348 = vmul.f32 %v852, %v1347
  %v1349 = vmul.f32 %v1337, 3.8918573e-05
  %v1350 = vadd.f32 %v1349, 0.001143296
  %v1351 = vmul.f32 %v1337, %v1350
  %v1352 = vadd.f32 %v1351, 0.014752088
  %v1353 = vmul.f32 %v1337, %v1352
  %v1354 = vadd.f32 %v1353, 0.112945676
  %v1355 = vmul.f32 %v1337, %v1354
  %v1356 = vadd.f32 %v1355, 0.4994258
  %v1357 = vmul.f32 %v1337, %v1356
  %v1358 = vadd.f32 %v1357, 1.0
  %v1359 = vrcp.pop %v1358
  %v1360 = vmul.f32 %v1358, %v1359
  %v1361 = vsub.f32 1.0, %v1360
  %v1362 = vmul.f32 %v1359, %v1361
  %v1363 = vadd.f32 %v1359, %v1362
  %vm1364 = vweird.f32 %v1358
  %vm1365 = vweird.f32 %v1359
  %vm1366 = vmor %vm1364, %vm1365
  %v1367 = vsel %vm1366, %v1359, %v1363
  %v1368 = vand.u32 2147483647, %v1358
  %vm1369 = vcmp.eq.f32.partialorder %v1368, 8.507059e+37
  %v1370 = vand.u32 %v1358, 2147483648
  %v1371 = vor.u32 1.1754944e-38, %v1370
  %v1372 = vsel %vm1369, %v1371, %v1367
  %v1373 = vmul.f32 %v1348, %v1372
  %v1374 = vmin.f32 %v1373, 1.0
  %v1375 = vmax.f32 %v1374, -1.0
  %v1376 = vmul.f32 %v853, %v853
  %v1377 = vmin.f32 16.0, %v1376
  %v1378 = vmul.f32 %v1377, 2.1237322e-06
  %v1379 = vadd.f32 %v1378, 0.00028619796
  %v1380 = vmul.f32 %v1377, %v1379
  %v1381 = vadd.f32 %v1380, 0.0036580483
  %v1382 = vmul.f32 %v1377, %v1381
  %v1383 = vadd.f32 %v1382, 0.05243302
  %v1384 = vmul.f32 %v1377, %v1383
  %v1385 = vadd.f32 %v1384, 0.18741608
  %v1386 = vmul.f32 %v1377, %v1385
  %v1387 = vadd.f32 %v1386, 1.1283791
  %v1388 = vmul.f32 %v853, %v1387
  %v1389 = vmul.f32 %v1377, 3.8918573e-05
  %v1390 = vadd.f32 %v1389, 0.001143296
  %v1391 = vmul.f32 %v1377, %v1390
  %v1392 = vadd.f32 %v1391, 0.014752088
  %v1393 = vmul.f32 %v1377, %v1392
  %v1394 = vadd.f32 %v1393, 0.112945676
  %v1395 = vmul.f32 %v1377, %v1394
  %v1396 = vadd.f32 %v1395, 0.4994258
  %v1397 = vmul.f32 %v1377, %v1396
  %v1398 = vadd.f32 %v1397, 1.0
  %v1399 = vrcp.pop %v1398
  %v1400 = vmul.f32 %v1398, %v1399
  %v1401 = vsub.f32 1.0, %v1400
  %v1402 = vmul.f32 %v1399, %v1401
  %v1403 = vadd.f32 %v1399, %v1402
  %vm1404 = vweird.f32 %v1398
  %vm1405 = vweird.f32 %v1399
  %vm1406 = vmor %vm1404, %vm1405
  %v1407 = vsel %vm1406, %v1399, %v1403
  %v1408 = vand.u32 2147483647, %v1398
  %vm1409 = vcmp.eq.f32.partialorder %v1408, 8.507059e+37
  %v1410 = vand.u32 %v1398, 2147483648
  %v1411 = vor.u32 1.1754944e-38, %v1410
  %v1412 = vsel %vm1409, %v1411, %v1407
  %v1413 = vmul.f32 %v1388, %v1412
  %v1414 = vmin.f32 %v1413, 1.0
  %v1415 = vmax.f32 %v1414, -1.0
  %v1416 = vmul.f32 %v854, %v854
  %v1417 = vmin.f32 16.0, %v1416
  %v1418 = vmul.f32 %v1417, 2.1237322e-06
  %v1419 = vadd.f32 %v1418, 0.00028619796
  %v1420 = vmul.f32 %v1417, %v1419
  %v1421 = vadd.f32 %v1420, 0.0036580483
  %v1422 = vmul.f32 %v1417, %v1421
  %v1423 = vadd.f32 %v1422, 0.05243302
  %v1424 = vmul.f32 %v1417, %v1423
  %v1425 = vadd.f32 %v1424, 0.18741608
  %v1426 = vmul.f32 %v1417, %v1425
  %v1427 = vadd.f32 %v1426, 1.1283791
  %v1428 = vmul.f32 %v854, %v1427
  %v1429 = vmul.f32 %v1417, 3.8918573e-05
  %v1430 = vadd.f32 %v1429, 0.001143296
  %v1431 = vmul.f32 %v1417, %v1430
  %v1432 = vadd.f32 %v1431, 0.014752088
  %v1433 = vmul.f32 %v1417, %v1432
  %v1434 = vadd.f32 %v1433, 0.112945676
  %v1435 = vmul.f32 %v1417, %v1434
  %v1436 = vadd.f32 %v1435, 0.4994258
  %v1437 = vmul.f32 %v1417, %v1436
  %v1438 = vadd.f32 %v1437, 1.0
  %v1439 = vrcp.pop %v1438
  %v1440 = vmul.f32 %v1438, %v1439
  %v1441 = vsub.f32 1.0, %v1440
  %v1442 = vmul.f32 %v1439, %v1441
  %v1443 = vadd.f32 %v1439, %v1442
  %vm1444 = vweird.f32 %v1438
  %vm1445 = vweird.f32 %v1439
  %vm1446 = vmor %vm1444, %vm1445
  %v1447 = vsel %vm1446, %v1439, %v1443
  %v1448 = vand.u32 2147483647, %v1438
  %vm1449 = vcmp.eq.f32.partialorder %v1448, 8.507059e+37
  %v1450 = vand.u32 %v1438, 2147483648
  %v1451 = vor.u32 1.1754944e-38, %v1450
  %v1452 = vsel %vm1449, %v1451, %v1447
  %v1453 = vmul.f32 %v1428, %v1452
  %v1454 = vmin.f32 %v1453, 1.0
  %v1455 = vmax.f32 %v1454, -1.0
  %v1456 = vmul.f32 %v855, %v855
  %v1457 = vmin.f32 16.0, %v1456
  %v1458 = vmul.f32 %v1457, 2.1237322e-06
  %v1459 = vadd.f32 %v1458, 0.00028619796
  %v1460 = vmul.f32 %v1457, %v1459
  %v1461 = vadd.f32 %v1460, 0.0036580483
  %v1462 = vmul.f32 %v1457, %v1461
  %v1463 = vadd.f32 %v1462, 0.05243302
  %v1464 = vmul.f32 %v1457, %v1463
  %v1465 = vadd.f32 %v1464, 0.18741608
  %v1466 = vmul.f32 %v1457, %v1465
  %v1467 = vadd.f32 %v1466, 1.1283791
  %v1468 = vmul.f32 %v855, %v1467
  %v1469 = vmul.f32 %v1457, 3.8918573e-05
  %v1470 = vadd.f32 %v1469, 0.001143296
  %v1471 = vmul.f32 %v1457, %v1470
  %v1472 = vadd.f32 %v1471, 0.014752088
  %v1473 = vmul.f32 %v1457, %v1472
  %v1474 = vadd.f32 %v1473, 0.112945676
  %v1475 = vmul.f32 %v1457, %v1474
  %v1476 = vadd.f32 %v1475, 0.4994258
  %v1477 = vmul.f32 %v1457, %v1476
  %v1478 = vadd.f32 %v1477, 1.0
  %v1479 = vrcp.pop %v1478
  %v1480 = vmul.f32 %v1478, %v1479
  %v1481 = vsub.f32 1.0, %v1480
  %v1482 = vmul.f32 %v1479, %v1481
  %v1483 = vadd.f32 %v1479, %v1482
  %vm1484 = vweird.f32 %v1478
  %vm1485 = vweird.f32 %v1479
  %vm1486 = vmor %vm1484, %vm1485
  %v1487 = vsel %vm1486, %v1479, %v1483
  %v1488 = vand.u32 2147483647, %v1478
  %vm1489 = vcmp.eq.f32.partialorder %v1488, 8.507059e+37
  %v1490 = vand.u32 %v1478, 2147483648
  %v1491 = vor.u32 1.1754944e-38, %v1490
  %v1492 = vsel %vm1489, %v1491, %v1487
  %v1493 = vmul.f32 %v1468, %v1492
  %v1494 = vmin.f32 %v1493, 1.0
  %v1495 = vmax.f32 %v1494, -1.0
  %v1496 = vadd.f32 %v895, 1.0
  %v1497 = vadd.f32 %v935, 1.0
  %v1498 = vadd.f32 %v975, 1.0
  %v1499 = vadd.f32 %v1015, 1.0
  %v1500 = vadd.f32 %v1055, 1.0
  %v1501 = vadd.f32 %v1095, 1.0
  %v1502 = vadd.f32 %v1135, 1.0
  %v1503 = vadd.f32 %v1175, 1.0
  %v1504 = vadd.f32 %v1215, 1.0
  %v1505 = vadd.f32 %v1255, 1.0
  %v1506 = vadd.f32 %v1295, 1.0
  %v1507 = vadd.f32 %v1335, 1.0
  %v1508 = vadd.f32 %v1375, 1.0
  %v1509 = vadd.f32 %v1415, 1.0
  %v1510 = vadd.f32 %v1455, 1.0
  %v1511 = vadd.f32 %v1495, 1.0
  %v1512 = vmul.f32 %v824, %v1496
  %v1513 = vmul.f32 %v825, %v1497
  %v1514 = vmul.f32 %v826, %v1498
  %v1515 = vmul.f32 %v827, %v1499
  %v1516 = vmul.f32 %v828, %v1500
  %v1517 = vmul.f32 %v829, %v1501
  %v1518 = vmul.f32 %v830, %v1502
  %v1519 = vmul.f32 %v831, %v1503
  %v1520 = vmul.f32 %v832, %v1504
  %v1521 = vmul.f32 %v833, %v1505
  %v1522 = vmul.f32 %v834, %v1506
  %v1523 = vmul.f32 %v835, %v1507
  %v1524 = vmul.f32 %v836, %v1508
  %v1525 = vmul.f32 %v837, %v1509
  %v1526 = vmul.f32 %v838, %v1510
  %v1527 = vmul.f32 %v839, %v1511
  %v1528 = vpack.c.bf16 %v1513, %v1512
  %v1529 = vpack.c.bf16 %v1515, %v1514
  %v1530 = vpack.c.bf16 %v1517, %v1516
  %v1531 = vpack.c.bf16 %v1519, %v1518
  %v1532 = vpack.c.bf16 %v1521, %v1520
  %v1533 = vpack.c.bf16 %v1523, %v1522
  %v1534 = vpack.c.bf16 %v1525, %v1524
  %v1535 = vpack.c.bf16 %v1527, %v1526
  %v1536 = vld [vmem:[%s4] sm:$0xf]
  %v1537 = vld [vmem:[%s4 + $0x4] sm:$0xf]
  %v1538 = vld [vmem:[%s4 + $0x8] sm:$0xf]
  %v1539 = vld [vmem:[%s4 + $0xc] sm:$0xf]
  %v1540 = vld [vmem:[%s4 + $0x10] sm:$0xf]
  %v1541 = vld [vmem:[%s4 + $0x14] sm:$0xf]
  %v1542 = vld [vmem:[%s4 + $0x18] sm:$0xf]
  %v1543 = vld [vmem:[%s4 + $0x1c] sm:$0xf]
  %v1544 = vld [vmem:[%s4 + $0x20] sm:$0xf]
  %v1545 = vld [vmem:[%s4 + $0x24] sm:$0xf]
  %v1546 = vld [vmem:[%s4 + $0x28] sm:$0xf]
  %v1547 = vld [vmem:[%s4 + $0x2c] sm:$0xf]
  %v1548 = vld [vmem:[%s4 + $0x30] sm:$0xf]
  %v1549 = vld [vmem:[%s4 + $0x34] sm:$0xf]
  %v1550 = vld [vmem:[%s4 + $0x38] sm:$0xf]
  %v1551 = vld [vmem:[%s4 + $0x3c] sm:$0xf]
  %v1568 = vunpack.c.l.b16 %v1536
  %v1569 = vunpack.c.l.b16 %v1537
  %v1570 = vunpack.c.l.b16 %v1538
  %v1571 = vunpack.c.l.b16 %v1539
  %v1572 = vunpack.c.l.b16 %v1540
  %v1573 = vunpack.c.l.b16 %v1541
  %v1574 = vunpack.c.l.b16 %v1542
  %v1575 = vunpack.c.l.b16 %v1543
  %v1576 = vunpack.c.l.b16 %v1544
  %v1577 = vunpack.c.l.b16 %v1545
  %v1578 = vunpack.c.l.b16 %v1546
  %v1579 = vunpack.c.l.b16 %v1547
  %v1580 = vunpack.c.l.b16 %v1548
  %v1581 = vunpack.c.l.b16 %v1549
  %v1582 = vunpack.c.l.b16 %v1550
  %v1583 = vunpack.c.l.b16 %v1551
  %v1584 = vpack.c.b16 %v1569, %v1568
  %v1585 = vpack.c.b16 %v1571, %v1570
  %v1586 = vpack.c.b16 %v1573, %v1572
  %v1587 = vpack.c.b16 %v1575, %v1574
  %v1588 = vpack.c.b16 %v1577, %v1576
  %v1589 = vpack.c.b16 %v1579, %v1578
  %v1590 = vpack.c.b16 %v1581, %v1580
  %v1591 = vpack.c.b16 %v1583, %v1582
  %1600 = vmatpush.bf16.msra.mxu0 %v1591
  %1601 = vmatpush.bf16.msra.mxu0 %v1590
  %1602 = vmatpush.bf16.msra.mxu0 %v1589
  %1603 = vmatpush.bf16.msra.mxu0 %v1588
  %1604 = vmatpush.bf16.msra.mxu0 %v1587
  %1605 = vmatpush.bf16.msra.mxu0 %v1586
  %1606 = vmatpush.bf16.msra.mxu0 %v1585
  %1607 = vmatpush.bf16.msra.mxu0 %v1584
  %1608 = vmatmul.bf16.gmra.mxu0 %v1528
  %v1609 = vpop.f32.mrf.mxu0
  %v1610 = vadd.f32 %v160, %v1609
  %v1611 = vpop.f32.mrf.mxu0
  %v1612 = vadd.f32 %v162, %v1611
  %1613 = vmatmul.bf16.gmra.mxu0 %v1529
  %v1614 = vpop.f32.mrf.mxu0
  %v1615 = vadd.f32 %v165, %v1614
  %v1616 = vpop.f32.mrf.mxu0
  %v1617 = vadd.f32 %v167, %v1616
  %1618 = vmatmul.bf16.gmra.mxu0 %v1530
  %v1619 = vpop.f32.mrf.mxu0
  %v1620 = vadd.f32 %v170, %v1619
  %v1621 = vpop.f32.mrf.mxu0
  %v1622 = vadd.f32 %v172, %v1621
  %1623 = vmatmul.bf16.gmra.mxu0 %v1531
  %v1624 = vpop.f32.mrf.mxu0
  %v1625 = vadd.f32 %v175, %v1624
  %v1626 = vpop.f32.mrf.mxu0
  %v1627 = vadd.f32 %v177, %v1626
  %1628 = vmatmul.bf16.gmra.mxu0 %v1532
  %v1629 = vpop.f32.mrf.mxu0
  %v1630 = vadd.f32 %v180, %v1629
  %v1631 = vpop.f32.mrf.mxu0
  %v1632 = vadd.f32 %v182, %v1631
  %1633 = vmatmul.bf16.gmra.mxu0 %v1533
  %v1634 = vpop.f32.mrf.mxu0
  %v1635 = vadd.f32 %v185, %v1634
  %v1636 = vpop.f32.mrf.mxu0
  %v1637 = vadd.f32 %v187, %v1636
  %1638 = vmatmul.bf16.gmra.mxu0 %v1534
  %v1639 = vpop.f32.mrf.mxu0
  %v1640 = vadd.f32 %v190, %v1639
  %v1641 = vpop.f32.mrf.mxu0
  %v1642 = vadd.f32 %v192, %v1641
  %1643 = vmatmul.bf16.gmra.mxu0 %v1535
  %v1644 = vpop.f32.mrf.mxu0
  %v1645 = vadd.f32 %v195, %v1644
  %v1646 = vpop.f32.mrf.mxu0
  %v1647 = vadd.f32 %v197, %v1646
  %1648 = vdwg.mxu0
  %v1649 = vpack.c.bf16 %v1610, %v1610
  %v1650 = vpack.c.bf16 %v1612, %v1612
  %v1651 = vpack.c.bf16 %v1615, %v1615
  %v1652 = vpack.c.bf16 %v1617, %v1617
  %v1653 = vpack.c.bf16 %v1620, %v1620
  %v1654 = vpack.c.bf16 %v1622, %v1622
  %v1655 = vpack.c.bf16 %v1625, %v1625
  %v1656 = vpack.c.bf16 %v1627, %v1627
  %v1657 = vpack.c.bf16 %v1630, %v1630
  %v1658 = vpack.c.bf16 %v1632, %v1632
  %v1659 = vpack.c.bf16 %v1635, %v1635
  %v1660 = vpack.c.bf16 %v1637, %v1637
  %v1661 = vpack.c.bf16 %v1640, %v1640
  %v1662 = vpack.c.bf16 %v1642, %v1642
  %v1663 = vpack.c.bf16 %v1645, %v1645
  %v1664 = vpack.c.bf16 %v1647, %v1647
  %vm1665 = vcmask 257024
  %1666 = vst.msk [vmem:[%s5] sm:$0xf] %vm1665, %v1649
  %1667 = vst.msk [vmem:[%s5 + $0x4] sm:$0xf] %vm1665, %v1650
  %1668 = vst.msk [vmem:[%s5 + $0x8] sm:$0xf] %vm1665, %v1651
  %1669 = vst.msk [vmem:[%s5 + $0xc] sm:$0xf] %vm1665, %v1652
  %1670 = vst.msk [vmem:[%s5 + $0x10] sm:$0xf] %vm1665, %v1653
  %1671 = vst.msk [vmem:[%s5 + $0x14] sm:$0xf] %vm1665, %v1654
  %1672 = vst.msk [vmem:[%s5 + $0x18] sm:$0xf] %vm1665, %v1655
  %1673 = vst.msk [vmem:[%s5 + $0x1c] sm:$0xf] %vm1665, %v1656
  %1674 = vst.msk [vmem:[%s5 + $0x20] sm:$0xf] %vm1665, %v1657
  %1675 = vst.msk [vmem:[%s5 + $0x24] sm:$0xf] %vm1665, %v1658
  %1676 = vst.msk [vmem:[%s5 + $0x28] sm:$0xf] %vm1665, %v1659
  %1677 = vst.msk [vmem:[%s5 + $0x2c] sm:$0xf] %vm1665, %v1660
  %1678 = vst.msk [vmem:[%s5 + $0x30] sm:$0xf] %vm1665, %v1661
  %1679 = vst.msk [vmem:[%s5 + $0x34] sm:$0xf] %vm1665, %v1662
  %1680 = vst.msk [vmem:[%s5 + $0x38] sm:$0xf] %vm1665, %v1663
  %1681 = vst.msk [vmem:[%s5 + $0x3c] sm:$0xf] %vm1665, %v1664
  // Predicated region
  $region22: #{neckformer_forward.10} parent=0 // pred_check
    _
  $region23: #{neckformer_forward.10} parent=0 // pred_check_branch
    %1683 = sbr.rel (0) target = $region25
  $region24: #{neckformer_forward.10} parent=0 // pred_region
    _
  $region25: #{neckformer_forward.10} parent=0 // pred_fallthru
    _
  // Predicated region
  $region26: #{neckformer_forward.10} parent=0 // pred_check
    _
  $region27: #{neckformer_forward.10} parent=0 // pred_check_branch
    %1685 = sbr.rel (0) target = $region29
  $region28: #{neckformer_forward.10} parent=0 // pred_region
    _
  $region29: #{neckformer_forward.10} parent=0 // pred_fallthru
    _

// kernel: neckformer_forward.11
$region0: #{neckformer_forward.11}
  #allocation0 [shape = 'u32[]', space=smem, size = 0x4, offset = 0x4, fixed_abs, tag = 'smem constant byte address 0x4 - core index']
  #allocation1 [shape = 'u32[72,128]{1,0:T(1,128)}', space=vmem, size = 0x9000, scoped, tag = 'internal scratch']
  #allocation2 [shape = 'f32[1,32]{1,0:T(1,128)}', space=vmem, size = 0x200, scoped, tag = 'scratch operand']
  %s0 = inlined_call_operand.vmem [shape: bf16[2,64,32], index: 0, kind: input, shape index: {}]
  %s1 = inlined_call_operand.vmem [shape: f32[1,32], index: 1, kind: input, shape index: {}]
  %s2 = inlined_call_operand.vmem [shape: f32[1,32], index: 2, kind: input, shape index: {}]
  %s3 = inlined_call_operand.vmem [shape: f32[32,16], index: 3, kind: input, shape index: {}]
  %s4 = inlined_call_operand.vmem [shape: f32[1,16], index: 4, kind: input, shape index: {}]
  %s5 = inlined_call_operand.hbm [shape: f32[2,1,16], index: 5, kind: output, shape index: {}]
  %s6 = sld [smem:[#allocation0]]
  $region61: #{neckformer_forward.11} parent=0
    _
  %s8 = ssub.s32 1, %s6
  %s9 = scalar_select 0, %s8, %s6
  $region1: #{neckformer_forward.11} parent=0
    #allocation3 [shape = 'u8[1024]{0}', space=vmem, size = 0x400, scoped, tag = 'output window, operand 0']
    #allocation4 [shape = 's32[2]{0}', space=sflag, size = 0x8, scoped, tag = 'scoped memory for neckformer_forward.11']
    %10 = vsyncpa [#allocation4], 0
    %s11 = scalar_lea.sflag [#allocation4], 1
    %12 = vsyncpa %s11, 0
    loop: start=0, step=1, limit=4
    $region2: #{neckformer_forward.11} parent=1 // loop_pre_header
      _
    $region3: #{neckformer_forward.11} parent=1 // loop_header
      %s14 = sphi 0, %s18
      %p15 = scmp.ge.s32.totalorder %s14, 4
      %s21 = sphi 0, %s33
      %s22 = sphi 0, %s29
      %s23 = sphi 0, %s21
      %s24 = sphi 0, %s22
      %s25 = sphi 0, %s23
      %s26 = sphi 0, %s24
      %s38 = sphi 0, %s40
      %s41 = sphi 0, %s38
      %s42 = sphi 0, %s41
      %s58 = sphi 0, %s42
      %s62 = sphi 0, %s62
      %s64 = sphi 0, %s62
      %s65 = sphi 0, %s64
      %s79 = sphi 0, %s65
      %s83 = sphi 0, %s83
      %s85 = sphi 0, %s83
      %s86 = sphi 0, %s85
      %s100 = sphi 0, %s86
      %s104 = sphi 0, %s104
      %s106 = sphi 0, %s104
      %s107 = sphi 0, %s106
      %s121 = sphi 0, %s107
      %s125 = sphi 0, %s125
      %s127 = sphi 0, %s125
      %s128 = sphi 0, %s127
      %s142 = sphi 0, %s128
      %s148 = sphi 0, %s150
      %s151 = sphi 0, %s148
      %s152 = sphi 0, %s151
      %s168 = sphi 0, %s152
    $region4: #{neckformer_forward.11} parent=1 // loop_header_branch
      %17 = sbr.rel (%p15) target = $region8
    $region5: #{neckformer_forward.11} parent=1 // loop_body
      %s19 = ssub.s32 %s14, 1
      %s20 = ssub.s32 %s14, 2
      %s27 = sadd.s32 1, %s22
      %p28 = scmp.ge.s32.totalorder %s27, 1
      %s29 = scalar_select %p28, 0, %s27
      %s30 = sadd.s32 1, %s21
      %s31 = scalar_select %p28, %s30, %s21
      %p32 = scmp.ge.s32.totalorder %s31, 2
      %s33 = scalar_select %p32, 0, %s31
      %s34 = ssub.s32 %s21, %s33
      %s35 = ssub.s32 %s22, %s29
      %s36 = sor.u32 %s34, %s35
      %p37 = scmp.eq.s32.totalorder %s36, 0
      %s39 = sadd.s32 %s38, 1
      %s40 = scalar_select %p37, %s38, %s39
      %p43 = pneg %p37
      %p44 = scmp.eq.s32.totalorder %s14, 1
      %p45 = por %p43, %p44
      %p46 = scmp.ne.s32.totalorder %s38, %s41
      %p47 = scmp.eq.s32.totalorder %s14, 0
      %p48 = por %p46, %p47
      %p49 = scmp.ne.s32.totalorder %s38, %s41
      %p50 = scmp.eq.s32.totalorder %s19, 1
      %p51 = por %p49, %p50
      %p52 = scmp.ne.s32.totalorder %s41, %s42
      %p53 = scmp.eq.s32.totalorder %s19, 0
      %p54 = por %p52, %p53
      %p55 = scmp.ne.s32.totalorder %s41, %s42
      %p56 = scmp.eq.s32.totalorder %s20, 1
      %p57 = por %p55, %p56
      %p59 = scmp.ne.s32.totalorder %s42, %s58
      %p60 = scmp.eq.s32.totalorder %s20, 0
      %p61 = por %p59, %p60
      %s63 = sadd.s32 %s62, 1
      %p66 = scmp.eq.s32.totalorder %s14, 1
      %p67 = scmp.ne.s32.totalorder %s62, %s64
      %p68 = scmp.eq.s32.totalorder %s14, 0
      %p69 = por %p67, %p68
      %p70 = scmp.ne.s32.totalorder %s62, %s64
      %p71 = scmp.eq.s32.totalorder %s19, 1
      %p72 = por %p70, %p71
      %p73 = scmp.ne.s32.totalorder %s64, %s65
      %p74 = scmp.eq.s32.totalorder %s19, 0
      %p75 = por %p73, %p74
      %p76 = scmp.ne.s32.totalorder %s64, %s65
      %p77 = scmp.eq.s32.totalorder %s20, 1
      %p78 = por %p76, %p77
      %p80 = scmp.ne.s32.totalorder %s65, %s79
      %p81 = scmp.eq.s32.totalorder %s20, 0
      %p82 = por %p80, %p81
      %s84 = sadd.s32 %s83, 1
      %p87 = scmp.eq.s32.totalorder %s14, 1
      %p88 = scmp.ne.s32.totalorder %s83, %s85
      %p89 = scmp.eq.s32.totalorder %s14, 0
      %p90 = por %p88, %p89
      %p91 = scmp.ne.s32.totalorder %s83, %s85
      %p92 = scmp.eq.s32.totalorder %s19, 1
      %p93 = por %p91, %p92
      %p94 = scmp.ne.s32.totalorder %s85, %s86
      %p95 = scmp.eq.s32.totalorder %s19, 0
      %p96 = por %p94, %p95
      %p97 = scmp.ne.s32.totalorder %s85, %s86
      %p98 = scmp.eq.s32.totalorder %s20, 1
      %p99 = por %p97, %p98
      %p101 = scmp.ne.s32.totalorder %s86, %s100
      %p102 = scmp.eq.s32.totalorder %s20, 0
      %p103 = por %p101, %p102
      %s105 = sadd.s32 %s104, 1
      %p108 = scmp.eq.s32.totalorder %s14, 1
      %p109 = scmp.ne.s32.totalorder %s104, %s106
      %p110 = scmp.eq.s32.totalorder %s14, 0
      %p111 = por %p109, %p110
      %p112 = scmp.ne.s32.totalorder %s104, %s106
      %p113 = scmp.eq.s32.totalorder %s19, 1
      %p114 = por %p112, %p113
      %p115 = scmp.ne.s32.totalorder %s106, %s107
      %p116 = scmp.eq.s32.totalorder %s19, 0
      %p117 = por %p115, %p116
      %p118 = scmp.ne.s32.totalorder %s106, %s107
      %p119 = scmp.eq.s32.totalorder %s20, 1
      %p120 = por %p118, %p119
      %p122 = scmp.ne.s32.totalorder %s107, %s121
      %p123 = scmp.eq.s32.totalorder %s20, 0
      %p124 = por %p122, %p123
      %s126 = sadd.s32 %s125, 1
      %p129 = scmp.eq.s32.totalorder %s14, 1
      %p130 = scmp.ne.s32.totalorder %s125, %s127
      %p131 = scmp.eq.s32.totalorder %s14, 0
      %p132 = por %p130, %p131
      %p133 = scmp.ne.s32.totalorder %s125, %s127
      %p134 = scmp.eq.s32.totalorder %s19, 1
      %p135 = por %p133, %p134
      %p136 = scmp.ne.s32.totalorder %s127, %s128
      %p137 = scmp.eq.s32.totalorder %s19, 0
      %p138 = por %p136, %p137
      %p139 = scmp.ne.s32.totalorder %s127, %s128
      %p140 = scmp.eq.s32.totalorder %s20, 1
      %p141 = por %p139, %p140
      %p143 = scmp.ne.s32.totalorder %s128, %s142
      %p144 = scmp.eq.s32.totalorder %s20, 0
      %p145 = por %p143, %p144
      %s146 = ssub.s32 %s21, %s33
      %p147 = scmp.eq.s32.totalorder %s146, 0
      %s149 = sadd.s32 %s148, 1
      %s150 = scalar_select %p147, %s148, %s149
      %p153 = pneg %p147
      %p154 = scmp.eq.s32.totalorder %s14, 1
      %p155 = por %p153, %p154
      %p156 = scmp.ne.s32.totalorder %s148, %s151
      %p157 = scmp.eq.s32.totalorder %s14, 0
      %p158 = por %p156, %p157
      %p159 = scmp.ne.s32.totalorder %s148, %s151
      %p160 = scmp.eq.s32.totalorder %s19, 1
      %p161 = por %p159, %p160
      %p162 = scmp.ne.s32.totalorder %s151, %s152
      %p163 = scmp.eq.s32.totalorder %s19, 0
      %p164 = por %p162, %p163
      %p165 = scmp.ne.s32.totalorder %s151, %s152
      %p166 = scmp.eq.s32.totalorder %s20, 1
      %p167 = por %p165, %p166
      %p169 = scmp.ne.s32.totalorder %s152, %s168
      %p170 = scmp.eq.s32.totalorder %s20, 0
      %p171 = por %p169, %p170
      %p172 = scmp.le.s32.totalorder 1, %s14
      %p173 = scmp.lt.s32.totalorder %s14, 3
      %p174 = pnand %p172, %p173
      %p175 = pneg %p174
      // Predicated region
      $region9: #{neckformer_forward.11} parent=5 // pred_check
        _
      $region10: #{neckformer_forward.11} parent=5 // pred_check_branch
        %177 = sbr.rel (%p174) target = $region12
      $region11: #{neckformer_forward.11} parent=5 // pred_region
        %s178 = ssub.s32 %s14, 1
        // Predicated region
        $region13: #{neckformer_forward.11} parent=11 // pred_check
          %p179 = pneg %p75
        $region14: #{neckformer_forward.11} parent=11 // pred_check_branch
          %181 = sbr.rel (%p179) target = $region16
        $region15: #{neckformer_forward.11} parent=11 // pred_region
          _
        $region16: #{neckformer_forward.11} parent=11 // pred_fallthru
          _
        // Predicated region
        $region17: #{neckformer_forward.11} parent=11 // pred_check
          %p182 = pneg %p96
        $region18: #{neckformer_forward.11} parent=11 // pred_check_branch
          %184 = sbr.rel (%p182) target = $region20
        $region19: #{neckformer_forward.11} parent=11 // pred_region
          _
        $region20: #{neckformer_forward.11} parent=11 // pred_fallthru
          _
        // Predicated region
        $region21: #{neckformer_forward.11} parent=11 // pred_check
          %p185 = pneg %p117
        $region22: #{neckformer_forward.11} parent=11 // pred_check_branch
          %187 = sbr.rel (%p185) target = $region24
        $region23: #{neckformer_forward.11} parent=11 // pred_region
          _
        $region24: #{neckformer_forward.11} parent=11 // pred_fallthru
          _
        // Predicated region
        $region25: #{neckformer_forward.11} parent=11 // pred_check
          %p188 = pneg %p138
        $region26: #{neckformer_forward.11} parent=11 // pred_check_branch
          %190 = sbr.rel (%p188) target = $region28
        $region27: #{neckformer_forward.11} parent=11 // pred_region
          _
        $region28: #{neckformer_forward.11} parent=11 // pred_fallthru
          _
      $region12: #{neckformer_forward.11} parent=5 // pred_fallthru
        _
      %p191 = scmp.lt.s32.totalorder %s14, 2
      // Predicated region
      $region29: #{neckformer_forward.11} parent=5 // pred_check
        %p192 = pneg %p191
      $region30: #{neckformer_forward.11} parent=5 // pred_check_branch
        %194 = sbr.rel (%p192) target = $region32
      $region31: #{neckformer_forward.11} parent=5 // pred_region
        // Predicated region
        $region33: #{neckformer_forward.11} parent=31 // pred_check
          %p195 = pneg %p48
        $region34: #{neckformer_forward.11} parent=31 // pred_check_branch
          %197 = sbr.rel (%p195) target = $region36
        $region35: #{neckformer_forward.11} parent=31 // pred_region
          %s198 = smul.u32 8, %s22
          %p199 = scmp.lt.s32.totalorder %s21, 1
          %s200 = scalar_select %p199, %s21, 1
          %p201 = scmp.lt.s32.totalorder %s198, 7
          %s202 = scalar_select %p201, %s198, 7
          %s203 = smul.addr %s200, 8
          %s204 = sadd.s32 %s202, %s203
          %s205 = smul.addr %s204, 4
          %s206 = scalar_lea.vmem %s0, %s205
          %s207 = smul.u32 8, %s22
        $region36: #{neckformer_forward.11} parent=31 // pred_fallthru
          _
      $region32: #{neckformer_forward.11} parent=5 // pred_fallthru
        _
      %p208 = scmp.le.s32.totalorder 1, %s14
      %p209 = scmp.lt.s32.totalorder %s14, 3
      %p210 = pnand %p208, %p209
      %p211 = pneg %p210
      // Predicated region
      $region37: #{neckformer_forward.11} parent=5 // pred_check
        _
      $region38: #{neckformer_forward.11} parent=5 // pred_check_branch
        %213 = sbr.rel (%p210) target = $region40
      $region39: #{neckformer_forward.11} parent=5 // pred_region
        %s214 = ssub.s32 %s14, 1
        %s215 = smul.u32 8, %s24
        %p216 = scmp.lt.s32.totalorder %s23, 1
        %s217 = scalar_select %p216, %s23, 1
        %p218 = scmp.lt.s32.totalorder %s215, 7
        %s219 = scalar_select %p218, %s215, 7
        %s220 = smul.addr %s217, 8
        %s221 = sadd.s32 %s219, %s220
        %s222 = smul.addr %s221, 4
        %s223 = scalar_lea.vmem %s0, %s222
        %p224 = pneg %p54
        %p225 = pneg %p51
        %p226 = pneg %p75
        %p227 = pneg %p72
        %p228 = pneg %p96
        %p229 = pneg %p93
        %p230 = pneg %p117
        %p231 = pneg %p114
        %p232 = pneg %p138
        %p233 = pneg %p135
        %p234 = pneg %p164
        %p235 = pneg %p161
        %s236 = sand.u32 %s151, 1
        %s237 = scalar_lea.sflag [#allocation4], %s236
        %s238 = sand.u32 %s151, 1
        %s239 = scalar_lea.vmem [#allocation3], %s238
        %s240 = smul.u32 8, %s24
        %p241 = scmp.lt.s32.totalorder %s23, 1
        %s242 = scalar_select %p241, %s23, 1
        %p243 = scmp.lt.s32.totalorder %s240, 7
        %s244 = scalar_select %p243, %s240, 7
        %s245 = smul.addr %s242, 8
        %s246 = sadd.s32 %s244, %s245
        %s247 = smul.addr %s246, 4
        %s248 = scalar_lea.vmem %s0, %s247
        %s249 = smul.u32 8, %s24
        %p250 = scmp.eq.s32.totalorder %s24, 0
        // Predicated region
        $region41: #{neckformer_forward.11} parent=39 // pred_check
          %p251 = pneg %p250
        $region42: #{neckformer_forward.11} parent=39 // pred_check_branch
          %253 = sbr.rel (%p251) target = $region44
        $region43: #{neckformer_forward.11} parent=39 // pred_region
          %vm254 = vcmask 253952
          %255 = vst.msk [vmem:[#allocation2] sm:$0x1] %vm254, -inf
        $region44: #{neckformer_forward.11} parent=39 // pred_fallthru
          _
        %v256 = vld [vmem:[%s248] sm:$0xf]
        %v257 = vld [vmem:[%s248 + $0x4] sm:$0xf]
        %v258 = vld [vmem:[%s248 + $0x8] sm:$0xf]
        %v259 = vld [vmem:[%s248 + $0xc] sm:$0xf]
        %v260 = vld [vmem:[%s248 + $0x10] sm:$0xf]
        %v261 = vld [vmem:[%s248 + $0x14] sm:$0xf]
        %v262 = vld [vmem:[%s248 + $0x18] sm:$0xf]
        %v263 = vld [vmem:[%s248 + $0x1c] sm:$0xf]
        %v264 = vunpack.c.l.bf16 %v256
        %v265 = vunpack.c.l.bf16 %v257
        %v266 = vunpack.c.l.bf16 %v258
        %v267 = vunpack.c.l.bf16 %v259
        %v268 = vunpack.c.l.bf16 %v260
        %v269 = vunpack.c.l.bf16 %v261
        %v270 = vunpack.c.l.bf16 %v262
        %v271 = vunpack.c.l.bf16 %v263
        %vm272 = vcmask 261120
        %v273 = vsel %vm272, %v264, 0.0
        %274 = vadd.xlane.f32.xlu0 %v273
        %v275 = vpop.xlane.xlu0 %274
        %v276 = vsel %vm272, %v265, 0.0
        %277 = vadd.xlane.f32.xlu0 %v276
        %v278 = vpop.xlane.xlu0 %277
        %v279 = vsel %vm272, %v266, 0.0
        %280 = vadd.xlane.f32.xlu0 %v279
        %v281 = vpop.xlane.xlu0 %280
        %v282 = vsel %vm272, %v267, 0.0
        %283 = vadd.xlane.f32.xlu0 %v282
        %v284 = vpop.xlane.xlu0 %283
        %v285 = vsel %vm272, %v268, 0.0
        %286 = vadd.xlane.f32.xlu0 %v285
        %v287 = vpop.xlane.xlu0 %286
        %v288 = vsel %vm272, %v269, 0.0
        %289 = vadd.xlane.f32.xlu0 %v288
        %v290 = vpop.xlane.xlu0 %289
        %v291 = vsel %vm272, %v270, 0.0
        %292 = vadd.xlane.f32.xlu0 %v291
        %v293 = vpop.xlane.xlu0 %292
        %v294 = vsel %vm272, %v271, 0.0
        %295 = vadd.xlane.f32.xlu0 %v294
        %v296 = vpop.xlane.xlu0 %295
        %v297 = vrcp.pop 32.0
        %v298 = vmul.f32 32.0, %v297
        %v299 = vsub.f32 1.0, %v298
        %v300 = vmul.f32 %v297, %v299
        %v301 = vadd.f32 %v297, %v300
        %vm302 = vweird.f32 %v297
        %v303 = vsel %vm302, %v297, %v301
        %v304 = vmul.f32 %v275, %v303
        %v305 = vmul.f32 %v278, %v303
        %v306 = vmul.f32 %v281, %v303
        %v307 = vmul.f32 %v284, %v303
        %v308 = vmul.f32 %v287, %v303
        %v309 = vmul.f32 %v290, %v303
        %v310 = vmul.f32 %v293, %v303
        %v311 = vmul.f32 %v296, %v303
        %v312 = vsub.f32 %v264, %v304
        %v313 = vsub.f32 %v265, %v305
        %v314 = vsub.f32 %v266, %v306
        %v315 = vsub.f32 %v267, %v307
        %v316 = vsub.f32 %v268, %v308
        %v317 = vsub.f32 %v269, %v309
        %v318 = vsub.f32 %v270, %v310
        %v319 = vsub.f32 %v271, %v311
        %v320 = vmul.f32 %v312, %v312
        %v321 = vmul.f32 %v313, %v313
        %v322 = vmul.f32 %v314, %v314
        %v323 = vmul.f32 %v315, %v315
        %v324 = vmul.f32 %v316, %v316
        %v325 = vmul.f32 %v317, %v317
        %v326 = vmul.f32 %v318, %v318
        %v327 = vmul.f32 %v319, %v319
        %v328 = vsel %vm272, %v320, 0.0
        %329 = vadd.xlane.f32.xlu0 %v328
        %v330 = vpop.xlane.xlu0 %329
        %v331 = vsel %vm272, %v321, 0.0
        %332 = vadd.xlane.f32.xlu0 %v331
        %v333 = vpop.xlane.xlu0 %332
        %v334 = vsel %vm272, %v322, 0.0
        %335 = vadd.xlane.f32.xlu0 %v334
        %v336 = vpop.xlane.xlu0 %335
        %v337 = vsel %vm272, %v323, 0.0
        %338 = vadd.xlane.f32.xlu0 %v337
        %v339 = vpop.xlane.xlu0 %338
        %v340 = vsel %vm272, %v324, 0.0
        %341 = vadd.xlane.f32.xlu0 %v340
        %v342 = vpop.xlane.xlu0 %341
        %v343 = vsel %vm272, %v325, 0.0
        %344 = vadd.xlane.f32.xlu0 %v343
        %v345 = vpop.xlane.xlu0 %344
        %v346 = vsel %vm272, %v326, 0.0
        %347 = vadd.xlane.f32.xlu0 %v346
        %v348 = vpop.xlane.xlu0 %347
        %v349 = vsel %vm272, %v327, 0.0
        %350 = vadd.xlane.f32.xlu0 %v349
        %v351 = vpop.xlane.xlu0 %350
        %v352 = vmul.f32 %v330, %v303
        %v353 = vmul.f32 %v333, %v303
        %v354 = vmul.f32 %v336, %v303
        %v355 = vmul.f32 %v339, %v303
        %v356 = vmul.f32 %v342, %v303
        %v357 = vmul.f32 %v345, %v303
        %v358 = vmul.f32 %v348, %v303
        %v359 = vmul.f32 %v351, %v303
        %v360 = vadd.f32 %v352, 1e-05
        %v361 = vadd.f32 %v353, 1e-05
        %v362 = vadd.f32 %v354, 1e-05
        %v363 = vadd.f32 %v355, 1e-05
        %v364 = vadd.f32 %v356, 1e-05
        %v365 = vadd.f32 %v357, 1e-05
        %v366 = vadd.f32 %v358, 1e-05
        %v367 = vadd.f32 %v359, 1e-05
        %v368 = vrsqrt.pop %v360
        %v369 = vmul.f32 %v368, %v360
        %v370 = vmul.f32 %v369, %v368
        %v371 = vmul.f32 0.5, %v370
        %v372 = vsub.f32 1.5, %v371
        %v373 = vmul.f32 %v368, %v372
        %vm374 = vweird.f32 %v360
        %vm375 = vweird.f32 %v368
        %vm376 = vmor %vm374, %vm375
        %v377 = vsel %vm376, %v368, %v373
        %v378 = vrsqrt.pop %v361
        %v379 = vmul.f32 %v378, %v361
        %v380 = vmul.f32 %v379, %v378
        %v381 = vmul.f32 0.5, %v380
        %v382 = vsub.f32 1.5, %v381
        %v383 = vmul.f32 %v378, %v382
        %vm384 = vweird.f32 %v361
        %vm385 = vweird.f32 %v378
        %vm386 = vmor %vm384, %vm385
        %v387 = vsel %vm386, %v378, %v383
        %v388 = vrsqrt.pop %v362
        %v389 = vmul.f32 %v388, %v362
        %v390 = vmul.f32 %v389, %v388
        %v391 = vmul.f32 0.5, %v390
        %v392 = vsub.f32 1.5, %v391
        %v393 = vmul.f32 %v388, %v392
        %vm394 = vweird.f32 %v362
        %vm395 = vweird.f32 %v388
        %vm396 = vmor %vm394, %vm395
        %v397 = vsel %vm396, %v388, %v393
        %v398 = vrsqrt.pop %v363
        %v399 = vmul.f32 %v398, %v363
        %v400 = vmul.f32 %v399, %v398
        %v401 = vmul.f32 0.5, %v400
        %v402 = vsub.f32 1.5, %v401
        %v403 = vmul.f32 %v398, %v402
        %vm404 = vweird.f32 %v363
        %vm405 = vweird.f32 %v398
        %vm406 = vmor %vm404, %vm405
        %v407 = vsel %vm406, %v398, %v403
        %v408 = vrsqrt.pop %v364
        %v409 = vmul.f32 %v408, %v364
        %v410 = vmul.f32 %v409, %v408
        %v411 = vmul.f32 0.5, %v410
        %v412 = vsub.f32 1.5, %v411
        %v413 = vmul.f32 %v408, %v412
        %vm414 = vweird.f32 %v364
        %vm415 = vweird.f32 %v408
        %vm416 = vmor %vm414, %vm415
        %v417 = vsel %vm416, %v408, %v413
        %v418 = vrsqrt.pop %v365
        %v419 = vmul.f32 %v418, %v365
        %v420 = vmul.f32 %v419, %v418
        %v421 = vmul.f32 0.5, %v420
        %v422 = vsub.f32 1.5, %v421
        %v423 = vmul.f32 %v418, %v422
        %vm424 = vweird.f32 %v365
        %vm425 = vweird.f32 %v418
        %vm426 = vmor %vm424, %vm425
        %v427 = vsel %vm426, %v418, %v423
        %v428 = vrsqrt.pop %v366
        %v429 = vmul.f32 %v428, %v366
        %v430 = vmul.f32 %v429, %v428
        %v431 = vmul.f32 0.5, %v430
        %v432 = vsub.f32 1.5, %v431
        %v433 = vmul.f32 %v428, %v432
        %vm434 = vweird.f32 %v366
        %vm435 = vweird.f32 %v428
        %vm436 = vmor %vm434, %vm435
        %v437 = vsel %vm436, %v428, %v433
        %v438 = vrsqrt.pop %v367
        %v439 = vmul.f32 %v438, %v367
        %v440 = vmul.f32 %v439, %v438
        %v441 = vmul.f32 0.5, %v440
        %v442 = vsub.f32 1.5, %v441
        %v443 = vmul.f32 %v438, %v442
        %vm444 = vweird.f32 %v367
        %vm445 = vweird.f32 %v438
        %vm446 = vmor %vm444, %vm445
        %v447 = vsel %vm446, %v438, %v443
        %v448 = vmul.f32 %v312, %v377
        %v449 = vmul.f32 %v313, %v387
        %v450 = vmul.f32 %v314, %v397
        %v451 = vmul.f32 %v315, %v407
        %v452 = vmul.f32 %v316, %v417
        %v453 = vmul.f32 %v317, %v427
        %v454 = vmul.f32 %v318, %v437
        %v455 = vmul.f32 %v319, %v447
        %v456 = vld [vmem:[%s1] sm:$0x1]
        %v458 = vperm.slane %v456, 0
        %v460 = vmul.f32 %v448, %v458
        %v461 = vmul.f32 %v449, %v458
        %v462 = vmul.f32 %v450, %v458
        %v463 = vmul.f32 %v451, %v458
        %v464 = vmul.f32 %v452, %v458
        %v465 = vmul.f32 %v453, %v458
        %v466 = vmul.f32 %v454, %v458
        %v467 = vmul.f32 %v455, %v458
        %v468 = vld [vmem:[%s2] sm:$0x1]
        %v470 = vperm.slane %v468, 0
        %v472 = vadd.f32 %v460, %v470
        %v473 = vadd.f32 %v461, %v470
        %v474 = vadd.f32 %v462, %v470
        %v475 = vadd.f32 %v463, %v470
        %v476 = vadd.f32 %v464, %v470
        %v477 = vadd.f32 %v465, %v470
        %v478 = vadd.f32 %v466, %v470
        %v479 = vadd.f32 %v467, %v470
        %v480 = vld [vmem:[#allocation2] sm:$0x1]
        %v481 = vsel %vm272, %v472, -inf
        %v482 = vsel %vm272, %v473, -inf
        %v483 = vsel %vm272, %v474, -inf
        %v484 = vsel %vm272, %v475, -inf
        %v485 = vsel %vm272, %v476, -inf
        %v486 = vmax.f32 %v481, %v485
        %v487 = vsel %vm272, %v477, -inf
        %v488 = vmax.f32 %v482, %v487
        %v489 = vsel %vm272, %v478, -inf
        %v490 = vmax.f32 %v483, %v489
        %v491 = vsel %vm272, %v479, -inf
        %v492 = vmax.f32 %v484, %v491
        %v493 = vmax.f32 %v486, %v488
        %v494 = vmax.f32 %v490, %v492
        %v495 = vmax.f32 %v493, %v494
        %v496 = vrot.slane %v495, 4
        %v497 = vmax.f32 %v495, %v496
        %v498 = vrot.slane %v497, 2
        %v499 = vmax.f32 %v497, %v498
        %v500 = vrot.slane %v499, 1
        %v501 = vmax.f32 %v499, %v500
        %v502 = vmax.f32 %v480, %v501
        %vm503 = vcmask 253952
        %504 = vst.msk [vmem:[#allocation2] sm:$0x1] %vm503, %v502
        // Predicated region
        $region45: #{neckformer_forward.11} parent=39 // pred_check
          %p505 = pneg %p250
        $region46: #{neckformer_forward.11} parent=39 // pred_check_branch
          %507 = sbr.rel (%p505) target = $region48
        $region47: #{neckformer_forward.11} parent=39 // pred_region
          %v508 = vld [vmem:[#allocation2] sm:$0x1]
          %v509 = vld [vmem:[%s3] sm:$0xff]
          %v510 = vld [vmem:[%s3 + $0x8] sm:$0xff]
          %v511 = vld [vmem:[%s3 + $0x10] sm:$0xff]
          %v512 = vld [vmem:[%s3 + $0x18] sm:$0xff]
          %v513 = vld [vmem:[%s4] sm:$0x1]
          %v515 = vsel %vm272, %v508, 0
          %517 = vmatpush.msra.mxu0 0.0
          %518 = vmatpush.msra.mxu0 0.0
          %519 = vmatpush.msra.mxu0 0.0
          %520 = vmatpush.msra.mxu0 0.0
          %521 = vmatpush.msra.mxu0 0.0
          %522 = vmatpush.msra.mxu0 0.0
          %523 = vmatpush.msra.mxu0 0.0
          %524 = vmatpush.msra.mxu0 0.0
          %525 = vmatpush.msra.mxu0 0.0
          %526 = vmatpush.msra.mxu0 0.0
          %527 = vmatpush.msra.mxu0 0.0
          %528 = vmatpush.msra.mxu0 0.0
          %529 = vmatpush.msra.mxu0 %v512
          %530 = vmatpush.msra.mxu0 %v511
          %531 = vmatpush.msra.mxu0 %v510
          %532 = vmatpush.msra.mxu0 %v509
          %533 = vmatmul.f32.gmra.mxu0 %v515
          %v534 = vpop.f32.mrf.mxu0
          %v535 = vadd.f32 %v513, %v534
          %536 = vdwg.mxu0
          %vm537 = vcmask 122880
          %538 = vst.msk [vmem:[%s239] sm:$0x1] %vm537, %v535
        $region48: #{neckformer_forward.11} parent=39 // pred_fallthru
          _
        %s539 = sand.u32 %s151, 1
        %s540 = scalar_lea.sflag [#allocation4], %s539
        %s541 = sand.u32 %s151, 1
        %s542 = scalar_lea.vmem [#allocation3], %s541
        // Predicated region
        $region49: #{neckformer_forward.11} parent=39 // pred_check
          %p543 = pneg %p161
        $region50: #{neckformer_forward.11} parent=39 // pred_check_branch
          %545 = sbr.rel (%p543) target = $region52
        $region51: #{neckformer_forward.11} parent=39 // pred_region
          %547 = vsyncadd %s540, 0
          %s548 = scalar_lea.hbm %s5, %s23
          %s550 = sshll.u32 %s542, 4
          %s551 = int_to_ptr.vmem [resolvable:$true] %s550
          %s552 = sshll.u32 %s548, 4
          %s553 = int_to_ptr.hbm [resolvable:$true] %s552
          %555 = dma.vmem_to_hbm [thread:$0]  %s551, 16, %s553, %s540
        $region52: #{neckformer_forward.11} parent=39 // pred_fallthru
          _
      $region40: #{neckformer_forward.11} parent=5 // pred_fallthru
        _
      %p556 = scmp.le.s32.totalorder 2, %s14
      // Predicated region
      $region53: #{neckformer_forward.11} parent=5 // pred_check
        %p557 = pneg %p556
      $region54: #{neckformer_forward.11} parent=5 // pred_check_branch
        %559 = sbr.rel (%p557) target = $region56
      $region55: #{neckformer_forward.11} parent=5 // pred_region
        %s560 = ssub.s32 %s14, 2
        // Predicated region
        $region57: #{neckformer_forward.11} parent=55 // pred_check
          %p561 = pneg %p167
        $region58: #{neckformer_forward.11} parent=55 // pred_check_branch
          %563 = sbr.rel (%p561) target = $region60
        $region59: #{neckformer_forward.11} parent=55 // pred_region
          %s564 = sand.u32 %s152, 1
          %s565 = scalar_lea.sflag [#allocation4], %s564
          %s566 = sand.u32 %s152, 1
          %s567 = scalar_lea.vmem [#allocation3], %s566
          %569 = dma.done %s565, 16
        $region60: #{neckformer_forward.11} parent=55 // pred_fallthru
          _
      $region56: #{neckformer_forward.11} parent=5 // pred_fallthru
        _
    $region6: #{neckformer_forward.11} parent=1 // loop_footer
      %s18 = sadd.s32 1, %s14
    $region7: #{neckformer_forward.11} parent=1 // loop_footer_branch
      %13 = sbr.rel target = $region3
    $region8: #{neckformer_forward.11} parent=1 // loop_exit
      _
    %570 = vsyncpa [#allocation4], 1
    %s571 = scalar_lea.sflag [#allocation4], 1
    %572 = vsyncpa %s571, 1

</llo_original>
